<compile_context>
chip_gen: v6e
topology: v6e:2x2x1
jax: 0.10.0
libtpu: 0.0.40
codegen_flags: <defaults>
</compile_context>

<pallas_src>
import jax
import jax.numpy as jnp
from jax.experimental import pallas as pl
from jax.experimental.pallas import tpu as pltpu

E_CHAR = 50          # char embedding size (fixed by the module)
KERNEL_K = 5         # CNN kernel size (a5 CNN default)
CONV_PAD = 1         # a5 CNN uses padding=1


def _round_up(n, m):
    return -(-n // m) * m


def _char_cnn_embed_kernel(ids_ref, emb_ref, wconv_ref, bconv_ref,
                           whw_ref, bhw_ref, o_ref):
    # ids_ref : (BN, T)   int32 char ids, T = m_word + 2*pad; -1 = zero-pad sentinel
    # emb_ref : (V, C)    char embedding table (bf16)
    # wconv_ref:(C, K*E)  conv weight, taps concatenated along the output dim (bf16)
    # bconv_ref:(1, E)    conv bias (f32)
    # whw_ref : (E, 2E)   [w_proj | w_gate] (bf16)
    # bhw_ref : (1, 2E)   [b_proj | b_gate] (f32)
    # o_ref   : (BN, E)   word embeddings (f32)
    BN, T = ids_ref.shape
    V, C = emb_ref.shape
    E = bconv_ref.shape[-1]
    K = wconv_ref.shape[-1] // E
    L = T - K + 1
    cdt = emb_ref.dtype                      # MXU operand dtype (bf16)

    ids = ids_ref[...]                                               # (BN, T) int32
    iota_v = jax.lax.broadcasted_iota(jnp.int32, (BN, V), 1)         # hoisted out of loop

    # 1) char-embedding gather as a one-hot MXU matmul.  Rows are laid out
    #    time-major: row t*BN + n = char (word n, time t).  id == -1 matches no
    #    column -> all-zero row, reproducing Conv1d's zero padding exactly.
    onehot = jnp.concatenate(
        [(ids[:, t:t + 1] == iota_v).astype(cdt) for t in range(T)], axis=0)   # (T*BN, V)
    x = jnp.dot(onehot, emb_ref[...],
                preferred_element_type=jnp.float32).astype(cdt)                # (T*BN, C)

    # 2) conv: one matmul against the tap-concatenated weight.
    y = jnp.dot(x, wconv_ref[...], preferred_element_type=jnp.float32)         # (T*BN, K*E)

    # 3) tap-sum + bias + ReLU + running max over time, all on the VPU, with no
    #    (BN, L, E) accumulator (online max; ReLU >= 0 so 0 is the max identity).
    b = bconv_ref[...]                                                          # (1, E) f32
    m = jnp.zeros((BN, E), jnp.float32)
    for l in range(L):                        # static unroll, L = m_word - 2 (small)
        conv_l = y[l * BN:(l + 1) * BN, 0:E]
        for j in range(1, K):                 # aligned sublane/lane slices (BN%32==0, E%32==0)
            conv_l = conv_l + y[(l + j) * BN:(l + j + 1) * BN, j * E:(j + 1) * E]
        m = jnp.maximum(m, jnp.maximum(conv_l + b, 0.0))
    conv_out = m                                                                # (BN, E) f32

    # 4) highway: fused [proj | gate] matmul, split, blend (elementwise in f32).
    hw = jnp.dot(conv_out.astype(cdt), whw_ref[...],
                 preferred_element_type=jnp.float32) + bhw_ref[...]             # (BN, 2E)
    proj = jnp.maximum(hw[:, :E], 0.0)
    gate = jax.nn.sigmoid(hw[:, E:])
    # TODO(synk): dropout(p=0.3) is identity here (eval mode); training-mode
    # dropout would draw a mask with pltpu.prng_random_bits.
    o_ref[...] = (gate * proj + (1.0 - gate) * conv_out).astype(o_ref.dtype)


def model_embeddings_forward(char_ids, params, word_embed_size, *,
                             block_words=512, compute_dtype=jnp.bfloat16):
    """char_ids: int32 (src_len, batch, m_word) -> f32 (src_len, batch, word_embed_size)."""
    src_len, batch, m_word = char_ids.shape
    E = word_embed_size
    C, K, PAD = E_CHAR, KERNEL_K, CONV_PAD
    T = m_word + 2 * PAD
    L = T - K + 1
    if L < 1:
        raise ValueError(f"max_word_length={m_word} too small for kernel={K}, pad={PAD}")

    N = src_len * batch
    # Size the word block against a conservative VMEM budget (dominant live
    # intermediate is y = (T*BN, K*E) f32); 12 MiB leaves headroom even on
    # v7x's 64 MiB/TC with double-buffered inputs.
    per_word_bytes = T * (K * E * 4 + C * 6 + params["char_emb"].shape[0] * 2)
    bn_cap = max(32, ((12 << 20) // per_word_bytes) // 32 * 32)
    BN = min(block_words, bn_cap, _round_up(N, 32))
    N_pad = _round_up(N, BN)

    # --- cheap int32-only glue: flatten words, pad the time axis for the conv
    # and the word axis up to a block multiple.  -1 gathers to a zero row
    # inside the kernel (== Conv1d zero padding / nn.Embedding padding_idx).
    ids = char_ids.reshape(N, m_word).astype(jnp.int32)
    ids = jnp.pad(ids, ((0, N_pad - N), (PAD, PAD)), constant_values=-1)        # (N_pad, T)

    emb = params["char_emb"].astype(compute_dtype)                              # (V, C)
    # Conv1d weight stored tap-major (K, C, E) -> concatenate taps: (C, K*E).
    w_conv = jnp.transpose(params["w_conv"], (1, 0, 2)).reshape(C, K * E).astype(compute_dtype)
    b_conv = params["b_conv"].reshape(1, E).astype(jnp.float32)
    # Fused highway weight / bias: [proj | gate].
    w_hw = jnp.concatenate([params["w_proj"], params["w_gate"]], axis=1).astype(compute_dtype)
    b_hw = jnp.concatenate([params["b_proj"].reshape(1, E),
                            params["b_gate"].reshape(1, E)], axis=1).astype(jnp.float32)

    const2d = lambda a: pl.BlockSpec(a.shape, lambda i: (0, 0))   # VMEM-resident weights

    out = pl.pallas_call(
        _char_cnn_embed_kernel,
        out_shape=jax.ShapeDtypeStruct((N_pad, E), jnp.float32),
        grid=(N_pad // BN,),
        in_specs=[
            pl.BlockSpec((BN, T), lambda i: (i, 0)),    # char ids, blocked over words
            const2d(emb),                               # char embedding table
            const2d(w_conv),                            # conv weight (tap-concat)
            const2d(b_conv),                            # conv bias
            const2d(w_hw),                              # highway [proj|gate] weight
            const2d(b_hw),                              # highway [proj|gate] bias
        ],
        out_specs=pl.BlockSpec((BN, E), lambda i: (i, 0)),
        compiler_params=pltpu.CompilerParams(
            dimension_semantics=("parallel",)),         # shard word blocks across v7x's 2 TCs
    )(ids, emb, w_conv, b_conv, w_hw, b_hw)

    return out[:N].reshape(src_len, batch, E)


def _reference_forward(char_ids, params, word_embed_size, compute_dtype=jnp.bfloat16):
    """Pure-JAX reference (eval mode) with the same bf16 MXU-operand casts."""
    src_len, batch, m_word = char_ids.shape
    N = src_len * batch
    E = word_embed_size
    emb = params["char_emb"].astype(compute_dtype)
    x = emb[char_ids.reshape(N, m_word)]                                   # (N, W, C)
    x = jnp.pad(x, ((0, 0), (CONV_PAD, CONV_PAD), (0, 0)))                 # zero pad (time)
    L = m_word + 2 * CONV_PAD - KERNEL_K + 1
    w = params["w_conv"].astype(compute_dtype)                             # (K, C, E)
    conv = jnp.zeros((N, L, E), jnp.float32)
    for j in range(KERNEL_K):
        conv = conv + jnp.einsum("nlc,ce->nle", x[:, j:j + L], w[j],
                                 preferred_element_type=jnp.float32)
    conv = conv + params["b_conv"].reshape(1, 1, E)
    conv_out = jnp.max(jax.nn.relu(conv), axis=1)                          # (N, E) f32
    w_hw = jnp.concatenate([params["w_proj"], params["w_gate"]], axis=1).astype(compute_dtype)
    b_hw = jnp.concatenate([params["b_proj"].reshape(1, E),
                            params["b_gate"].reshape(1, E)], axis=1).astype(jnp.float32)
    hw = jnp.dot(conv_out.astype(compute_dtype), w_hw,
                 preferred_element_type=jnp.float32) + b_hw
    proj = jax.nn.relu(hw[:, :E])
    gate = jax.nn.sigmoid(hw[:, E:])
    out = gate * proj + (1.0 - gate) * conv_out
    return out.reshape(src_len, batch, E)


def init_params(key, n_chars, char_pad_id, word_embed_size):
    k1, k2, k3, k4, k5, k6, k7 = jax.random.split(key, 7)
    E = word_embed_size
    char_emb = 0.1 * jax.random.normal(k1, (n_chars, E_CHAR), jnp.float32)
    char_emb = char_emb.at[char_pad_id].set(0.0)      # nn.Embedding padding_idx row = 0
    # Conv1d weight in torch is (E, e_char, K); stored tap-major (K, e_char, E).
    w_conv = 0.1 * jax.random.normal(k2, (KERNEL_K, E_CHAR, E), jnp.float32)
    b_conv = 0.1 * jax.random.normal(k3, (1, E), jnp.float32)
    # Highway Linear weights stored transposed so y = x @ W + b.
    w_proj = 0.1 * jax.random.normal(k4, (E, E), jnp.float32)
    b_proj = 0.1 * jax.random.normal(k5, (1, E), jnp.float32)
    w_gate = 0.1 * jax.random.normal(k6, (E, E), jnp.float32)
    b_gate = 0.1 * jax.random.normal(k7, (1, E), jnp.float32)
    return dict(char_emb=char_emb, w_conv=w_conv, b_conv=b_conv,
                w_proj=w_proj, b_proj=b_proj, w_gate=w_gate, b_gate=b_gate)


if __name__ == "__main__":
    # Small shapes consistent with the module; word_embed_size is a multiple of
    # 128 so the output stores are lane-dense (the e_char=50 dim is fixed).
    word_embed_size = 128
    n_chars = 30
    char_pad_id = 0
    src_len, batch, m_word = 8, 2, 16

    key = jax.random.PRNGKey(0)
    k_in, k_par = jax.random.split(key)
    char_ids = jax.random.randint(k_in, (src_len, batch, m_word), 0, n_chars, jnp.int32)
    params = init_params(k_par, n_chars, char_pad_id, word_embed_size)

    fwd = jax.jit(lambda ids, p: model_embeddings_forward(ids, p, word_embed_size))
    out = jax.block_until_ready(fwd(char_ids, params))

    ref = _reference_forward(char_ids, params, word_embed_size)
    assert out.shape == (src_len, batch, word_embed_size)
    assert jnp.allclose(out, ref, atol=5e-3, rtol=5e-3), \
        float(jnp.max(jnp.abs(out - ref)))
    print("KERNEL_OK")
</pallas_src>

<mosaic_0001>
module attributes {stable_mosaic.version = 11 : i64} {
  func.func @_char_cnn_embed_kernel(%arg0: i32, %arg1: memref<32x18xi32, #tpu.memory_space<vmem>>, %arg2: memref<30x50xbf16, #tpu.memory_space<vmem>>, %arg3: memref<50x640xbf16, #tpu.memory_space<vmem>>, %arg4: memref<1x128xf32, #tpu.memory_space<vmem>>, %arg5: memref<128x256xbf16, #tpu.memory_space<vmem>>, %arg6: memref<1x256xf32, #tpu.memory_space<vmem>>, %arg7: memref<32x128xf32, #tpu.memory_space<vmem>>) attributes {dimension_semantics = [#tpu.dimension_semantics<parallel>], iteration_bounds = array<i64: 1>, scalar_prefetch = 0 : i64, scratch_operands = 0 : i64, tpu.core_type = #tpu.core_type<tc>, window_params = [{transform_indices = @transform_0, window_bounds = array<i64: 32, 18>}, {pipeline_mode = #tpu.pipeline_mode<synchronous>, transform_indices = @transform_1, window_bounds = array<i64: 30, 50>}, {pipeline_mode = #tpu.pipeline_mode<synchronous>, transform_indices = @transform_2, window_bounds = array<i64: 50, 640>}, {pipeline_mode = #tpu.pipeline_mode<synchronous>, transform_indices = @transform_3, window_bounds = array<i64: 1, 128>}, {pipeline_mode = #tpu.pipeline_mode<synchronous>, transform_indices = @transform_4, window_bounds = array<i64: 128, 256>}, {pipeline_mode = #tpu.pipeline_mode<synchronous>, transform_indices = @transform_5, window_bounds = array<i64: 1, 256>}, {transform_indices = @transform_6, window_bounds = array<i64: 32, 128>}]} {
    %c0 = arith.constant 0 : index
    %c0_0 = arith.constant 0 : index
    %0 = vector.load %arg1[%c0, %c0_0] : memref<32x18xi32, #tpu.memory_space<vmem>>, vector<32x18xi32>
    %1 = tpu.iota {dimensions = array<i32: 1>} : vector<32x30xi32>
    %2 = vector.extract_strided_slice %0 {offsets = [0, 0], sizes = [32, 1], strides = [1, 1]} : vector<32x18xi32> to vector<32x1xi32>
    %3 = vector.broadcast %2 : vector<32x1xi32> to vector<32x30xi32>
    %4 = arith.cmpi eq, %3, %1 : vector<32x30xi32>
    %5 = arith.extui %4 : vector<32x30xi1> to vector<32x30xi32>
    %6 = arith.sitofp %5 : vector<32x30xi32> to vector<32x30xf32>
    %7 = arith.truncf %6 : vector<32x30xf32> to vector<32x30xbf16>
    %8 = vector.extract_strided_slice %0 {offsets = [0, 1], sizes = [32, 1], strides = [1, 1]} : vector<32x18xi32> to vector<32x1xi32>
    %9 = vector.broadcast %8 : vector<32x1xi32> to vector<32x30xi32>
    %10 = arith.cmpi eq, %9, %1 : vector<32x30xi32>
    %11 = arith.extui %10 : vector<32x30xi1> to vector<32x30xi32>
    %12 = arith.sitofp %11 : vector<32x30xi32> to vector<32x30xf32>
    %13 = arith.truncf %12 : vector<32x30xf32> to vector<32x30xbf16>
    %14 = vector.extract_strided_slice %0 {offsets = [0, 2], sizes = [32, 1], strides = [1, 1]} : vector<32x18xi32> to vector<32x1xi32>
    %15 = vector.broadcast %14 : vector<32x1xi32> to vector<32x30xi32>
    %16 = arith.cmpi eq, %15, %1 : vector<32x30xi32>
    %17 = arith.extui %16 : vector<32x30xi1> to vector<32x30xi32>
    %18 = arith.sitofp %17 : vector<32x30xi32> to vector<32x30xf32>
    %19 = arith.truncf %18 : vector<32x30xf32> to vector<32x30xbf16>
    %20 = vector.extract_strided_slice %0 {offsets = [0, 3], sizes = [32, 1], strides = [1, 1]} : vector<32x18xi32> to vector<32x1xi32>
    %21 = vector.broadcast %20 : vector<32x1xi32> to vector<32x30xi32>
    %22 = arith.cmpi eq, %21, %1 : vector<32x30xi32>
    %23 = arith.extui %22 : vector<32x30xi1> to vector<32x30xi32>
    %24 = arith.sitofp %23 : vector<32x30xi32> to vector<32x30xf32>
    %25 = arith.truncf %24 : vector<32x30xf32> to vector<32x30xbf16>
    %26 = vector.extract_strided_slice %0 {offsets = [0, 4], sizes = [32, 1], strides = [1, 1]} : vector<32x18xi32> to vector<32x1xi32>
    %27 = vector.broadcast %26 : vector<32x1xi32> to vector<32x30xi32>
    %28 = arith.cmpi eq, %27, %1 : vector<32x30xi32>
    %29 = arith.extui %28 : vector<32x30xi1> to vector<32x30xi32>
    %30 = arith.sitofp %29 : vector<32x30xi32> to vector<32x30xf32>
    %31 = arith.truncf %30 : vector<32x30xf32> to vector<32x30xbf16>
    %32 = vector.extract_strided_slice %0 {offsets = [0, 5], sizes = [32, 1], strides = [1, 1]} : vector<32x18xi32> to vector<32x1xi32>
    %33 = vector.broadcast %32 : vector<32x1xi32> to vector<32x30xi32>
    %34 = arith.cmpi eq, %33, %1 : vector<32x30xi32>
    %35 = arith.extui %34 : vector<32x30xi1> to vector<32x30xi32>
    %36 = arith.sitofp %35 : vector<32x30xi32> to vector<32x30xf32>
    %37 = arith.truncf %36 : vector<32x30xf32> to vector<32x30xbf16>
    %38 = vector.extract_strided_slice %0 {offsets = [0, 6], sizes = [32, 1], strides = [1, 1]} : vector<32x18xi32> to vector<32x1xi32>
    %39 = vector.broadcast %38 : vector<32x1xi32> to vector<32x30xi32>
    %40 = arith.cmpi eq, %39, %1 : vector<32x30xi32>
    %41 = arith.extui %40 : vector<32x30xi1> to vector<32x30xi32>
    %42 = arith.sitofp %41 : vector<32x30xi32> to vector<32x30xf32>
    %43 = arith.truncf %42 : vector<32x30xf32> to vector<32x30xbf16>
    %44 = vector.extract_strided_slice %0 {offsets = [0, 7], sizes = [32, 1], strides = [1, 1]} : vector<32x18xi32> to vector<32x1xi32>
    %45 = vector.broadcast %44 : vector<32x1xi32> to vector<32x30xi32>
    %46 = arith.cmpi eq, %45, %1 : vector<32x30xi32>
    %47 = arith.extui %46 : vector<32x30xi1> to vector<32x30xi32>
    %48 = arith.sitofp %47 : vector<32x30xi32> to vector<32x30xf32>
    %49 = arith.truncf %48 : vector<32x30xf32> to vector<32x30xbf16>
    %50 = vector.extract_strided_slice %0 {offsets = [0, 8], sizes = [32, 1], strides = [1, 1]} : vector<32x18xi32> to vector<32x1xi32>
    %51 = vector.broadcast %50 : vector<32x1xi32> to vector<32x30xi32>
    %52 = arith.cmpi eq, %51, %1 : vector<32x30xi32>
    %53 = arith.extui %52 : vector<32x30xi1> to vector<32x30xi32>
    %54 = arith.sitofp %53 : vector<32x30xi32> to vector<32x30xf32>
    %55 = arith.truncf %54 : vector<32x30xf32> to vector<32x30xbf16>
    %56 = vector.extract_strided_slice %0 {offsets = [0, 9], sizes = [32, 1], strides = [1, 1]} : vector<32x18xi32> to vector<32x1xi32>
    %57 = vector.broadcast %56 : vector<32x1xi32> to vector<32x30xi32>
    %58 = arith.cmpi eq, %57, %1 : vector<32x30xi32>
    %59 = arith.extui %58 : vector<32x30xi1> to vector<32x30xi32>
    %60 = arith.sitofp %59 : vector<32x30xi32> to vector<32x30xf32>
    %61 = arith.truncf %60 : vector<32x30xf32> to vector<32x30xbf16>
    %62 = vector.extract_strided_slice %0 {offsets = [0, 10], sizes = [32, 1], strides = [1, 1]} : vector<32x18xi32> to vector<32x1xi32>
    %63 = vector.broadcast %62 : vector<32x1xi32> to vector<32x30xi32>
    %64 = arith.cmpi eq, %63, %1 : vector<32x30xi32>
    %65 = arith.extui %64 : vector<32x30xi1> to vector<32x30xi32>
    %66 = arith.sitofp %65 : vector<32x30xi32> to vector<32x30xf32>
    %67 = arith.truncf %66 : vector<32x30xf32> to vector<32x30xbf16>
    %68 = vector.extract_strided_slice %0 {offsets = [0, 11], sizes = [32, 1], strides = [1, 1]} : vector<32x18xi32> to vector<32x1xi32>
    %69 = vector.broadcast %68 : vector<32x1xi32> to vector<32x30xi32>
    %70 = arith.cmpi eq, %69, %1 : vector<32x30xi32>
    %71 = arith.extui %70 : vector<32x30xi1> to vector<32x30xi32>
    %72 = arith.sitofp %71 : vector<32x30xi32> to vector<32x30xf32>
    %73 = arith.truncf %72 : vector<32x30xf32> to vector<32x30xbf16>
    %74 = vector.extract_strided_slice %0 {offsets = [0, 12], sizes = [32, 1], strides = [1, 1]} : vector<32x18xi32> to vector<32x1xi32>
    %75 = vector.broadcast %74 : vector<32x1xi32> to vector<32x30xi32>
    %76 = arith.cmpi eq, %75, %1 : vector<32x30xi32>
    %77 = arith.extui %76 : vector<32x30xi1> to vector<32x30xi32>
    %78 = arith.sitofp %77 : vector<32x30xi32> to vector<32x30xf32>
    %79 = arith.truncf %78 : vector<32x30xf32> to vector<32x30xbf16>
    %80 = vector.extract_strided_slice %0 {offsets = [0, 13], sizes = [32, 1], strides = [1, 1]} : vector<32x18xi32> to vector<32x1xi32>
    %81 = vector.broadcast %80 : vector<32x1xi32> to vector<32x30xi32>
    %82 = arith.cmpi eq, %81, %1 : vector<32x30xi32>
    %83 = arith.extui %82 : vector<32x30xi1> to vector<32x30xi32>
    %84 = arith.sitofp %83 : vector<32x30xi32> to vector<32x30xf32>
    %85 = arith.truncf %84 : vector<32x30xf32> to vector<32x30xbf16>
    %86 = vector.extract_strided_slice %0 {offsets = [0, 14], sizes = [32, 1], strides = [1, 1]} : vector<32x18xi32> to vector<32x1xi32>
    %87 = vector.broadcast %86 : vector<32x1xi32> to vector<32x30xi32>
    %88 = arith.cmpi eq, %87, %1 : vector<32x30xi32>
    %89 = arith.extui %88 : vector<32x30xi1> to vector<32x30xi32>
    %90 = arith.sitofp %89 : vector<32x30xi32> to vector<32x30xf32>
    %91 = arith.truncf %90 : vector<32x30xf32> to vector<32x30xbf16>
    %92 = vector.extract_strided_slice %0 {offsets = [0, 15], sizes = [32, 1], strides = [1, 1]} : vector<32x18xi32> to vector<32x1xi32>
    %93 = vector.broadcast %92 : vector<32x1xi32> to vector<32x30xi32>
    %94 = arith.cmpi eq, %93, %1 : vector<32x30xi32>
    %95 = arith.extui %94 : vector<32x30xi1> to vector<32x30xi32>
    %96 = arith.sitofp %95 : vector<32x30xi32> to vector<32x30xf32>
    %97 = arith.truncf %96 : vector<32x30xf32> to vector<32x30xbf16>
    %98 = vector.extract_strided_slice %0 {offsets = [0, 16], sizes = [32, 1], strides = [1, 1]} : vector<32x18xi32> to vector<32x1xi32>
    %99 = vector.broadcast %98 : vector<32x1xi32> to vector<32x30xi32>
    %100 = arith.cmpi eq, %99, %1 : vector<32x30xi32>
    %101 = arith.extui %100 : vector<32x30xi1> to vector<32x30xi32>
    %102 = arith.sitofp %101 : vector<32x30xi32> to vector<32x30xf32>
    %103 = arith.truncf %102 : vector<32x30xf32> to vector<32x30xbf16>
    %104 = vector.extract_strided_slice %0 {offsets = [0, 17], sizes = [32, 1], strides = [1, 1]} : vector<32x18xi32> to vector<32x1xi32>
    %105 = vector.broadcast %104 : vector<32x1xi32> to vector<32x30xi32>
    %106 = arith.cmpi eq, %105, %1 : vector<32x30xi32>
    %107 = arith.extui %106 : vector<32x30xi1> to vector<32x30xi32>
    %108 = arith.sitofp %107 : vector<32x30xi32> to vector<32x30xf32>
    %109 = arith.truncf %108 : vector<32x30xf32> to vector<32x30xbf16>
    %110 = tpu.concatenate %7, %13, %19, %25, %31, %37, %43, %49, %55, %61, %67, %73, %79, %85, %91, %97 in 0 : vector<32x30xbf16>, vector<32x30xbf16>, vector<32x30xbf16>, vector<32x30xbf16>, vector<32x30xbf16>, vector<32x30xbf16>, vector<32x30xbf16>, vector<32x30xbf16>, vector<32x30xbf16>, vector<32x30xbf16>, vector<32x30xbf16>, vector<32x30xbf16>, vector<32x30xbf16>, vector<32x30xbf16>, vector<32x30xbf16>, vector<32x30xbf16> -> vector<512x30xbf16>
    %111 = tpu.concatenate %103, %109 in 0 : vector<32x30xbf16>, vector<32x30xbf16> -> vector<64x30xbf16>
    %112 = tpu.concatenate %110, %111 in 0 : vector<512x30xbf16>, vector<64x30xbf16> -> vector<576x30xbf16>
    %c0_1 = arith.constant 0 : index
    %c0_2 = arith.constant 0 : index
    %113 = vector.load %arg2[%c0_1, %c0_2] : memref<30x50xbf16, #tpu.memory_space<vmem>>, vector<30x50xbf16>
    %cst = arith.constant dense<0.000000e+00> : vector<576x50xf32>
    %114 = tpu.matmul %112, %113, %cst {dimension_numbers = #tpu.dot_dimension_numbers<[1], [0], [0], [1], [0, 0, 1, 1], [], []>} : vector<576x30xbf16>, vector<30x50xbf16>, vector<576x50xf32> -> vector<576x50xf32>
    %115 = arith.truncf %114 : vector<576x50xf32> to vector<576x50xbf16>
    %c0_3 = arith.constant 0 : index
    %c0_4 = arith.constant 0 : index
    %116 = vector.load %arg3[%c0_3, %c0_4] : memref<50x640xbf16, #tpu.memory_space<vmem>>, vector<50x640xbf16>
    %cst_5 = arith.constant dense<0.000000e+00> : vector<576x640xf32>
    %117 = tpu.matmul %115, %116, %cst_5 {dimension_numbers = #tpu.dot_dimension_numbers<[1], [0], [0], [1], [0, 0, 1, 1], [], []>} : vector<576x50xbf16>, vector<50x640xbf16>, vector<576x640xf32> -> vector<576x640xf32>
    %c0_6 = arith.constant 0 : index
    %c0_7 = arith.constant 0 : index
    %118 = vector.load %arg4[%c0_6, %c0_7] : memref<1x128xf32, #tpu.memory_space<vmem>>, vector<1x128xf32>
    %cst_8 = arith.constant 0.000000e+00 : f32
    %119 = vector.broadcast %cst_8 : f32 to vector<32x128xf32>
    %120 = vector.extract_strided_slice %117 {offsets = [0, 0], sizes = [32, 128], strides = [1, 1]} : vector<576x640xf32> to vector<32x128xf32>
    %121 = vector.extract_strided_slice %117 {offsets = [32, 128], sizes = [32, 128], strides = [1, 1]} : vector<576x640xf32> to vector<32x128xf32>
    %122 = arith.addf %120, %121 : vector<32x128xf32>
    %123 = vector.extract_strided_slice %117 {offsets = [64, 256], sizes = [32, 128], strides = [1, 1]} : vector<576x640xf32> to vector<32x128xf32>
    %124 = arith.addf %122, %123 : vector<32x128xf32>
    %125 = vector.extract_strided_slice %117 {offsets = [96, 384], sizes = [32, 128], strides = [1, 1]} : vector<576x640xf32> to vector<32x128xf32>
    %126 = arith.addf %124, %125 : vector<32x128xf32>
    %127 = vector.extract_strided_slice %117 {offsets = [128, 512], sizes = [32, 128], strides = [1, 1]} : vector<576x640xf32> to vector<32x128xf32>
    %128 = arith.addf %126, %127 : vector<32x128xf32>
    %129 = vector.broadcast %118 : vector<1x128xf32> to vector<32x128xf32>
    %130 = arith.addf %128, %129 : vector<32x128xf32>
    %cst_9 = arith.constant 0.000000e+00 : f32
    %131 = vector.broadcast %cst_9 : f32 to vector<32x128xf32>
    %132 = arith.maximumf %130, %131 : vector<32x128xf32>
    %133 = arith.maximumf %119, %132 : vector<32x128xf32>
    %134 = vector.extract_strided_slice %117 {offsets = [32, 0], sizes = [32, 128], strides = [1, 1]} : vector<576x640xf32> to vector<32x128xf32>
    %135 = vector.extract_strided_slice %117 {offsets = [64, 128], sizes = [32, 128], strides = [1, 1]} : vector<576x640xf32> to vector<32x128xf32>
    %136 = arith.addf %134, %135 : vector<32x128xf32>
    %137 = vector.extract_strided_slice %117 {offsets = [96, 256], sizes = [32, 128], strides = [1, 1]} : vector<576x640xf32> to vector<32x128xf32>
    %138 = arith.addf %136, %137 : vector<32x128xf32>
    %139 = vector.extract_strided_slice %117 {offsets = [128, 384], sizes = [32, 128], strides = [1, 1]} : vector<576x640xf32> to vector<32x128xf32>
    %140 = arith.addf %138, %139 : vector<32x128xf32>
    %141 = vector.extract_strided_slice %117 {offsets = [160, 512], sizes = [32, 128], strides = [1, 1]} : vector<576x640xf32> to vector<32x128xf32>
    %142 = arith.addf %140, %141 : vector<32x128xf32>
    %143 = vector.broadcast %118 : vector<1x128xf32> to vector<32x128xf32>
    %144 = arith.addf %142, %143 : vector<32x128xf32>
    %cst_10 = arith.constant 0.000000e+00 : f32
    %145 = vector.broadcast %cst_10 : f32 to vector<32x128xf32>
    %146 = arith.maximumf %144, %145 : vector<32x128xf32>
    %147 = arith.maximumf %133, %146 : vector<32x128xf32>
    %148 = vector.extract_strided_slice %117 {offsets = [64, 0], sizes = [32, 128], strides = [1, 1]} : vector<576x640xf32> to vector<32x128xf32>
    %149 = vector.extract_strided_slice %117 {offsets = [96, 128], sizes = [32, 128], strides = [1, 1]} : vector<576x640xf32> to vector<32x128xf32>
    %150 = arith.addf %148, %149 : vector<32x128xf32>
    %151 = vector.extract_strided_slice %117 {offsets = [128, 256], sizes = [32, 128], strides = [1, 1]} : vector<576x640xf32> to vector<32x128xf32>
    %152 = arith.addf %150, %151 : vector<32x128xf32>
    %153 = vector.extract_strided_slice %117 {offsets = [160, 384], sizes = [32, 128], strides = [1, 1]} : vector<576x640xf32> to vector<32x128xf32>
    %154 = arith.addf %152, %153 : vector<32x128xf32>
    %155 = vector.extract_strided_slice %117 {offsets = [192, 512], sizes = [32, 128], strides = [1, 1]} : vector<576x640xf32> to vector<32x128xf32>
    %156 = arith.addf %154, %155 : vector<32x128xf32>
    %157 = vector.broadcast %118 : vector<1x128xf32> to vector<32x128xf32>
    %158 = arith.addf %156, %157 : vector<32x128xf32>
    %cst_11 = arith.constant 0.000000e+00 : f32
    %159 = vector.broadcast %cst_11 : f32 to vector<32x128xf32>
    %160 = arith.maximumf %158, %159 : vector<32x128xf32>
    %161 = arith.maximumf %147, %160 : vector<32x128xf32>
    %162 = vector.extract_strided_slice %117 {offsets = [96, 0], sizes = [32, 128], strides = [1, 1]} : vector<576x640xf32> to vector<32x128xf32>
    %163 = vector.extract_strided_slice %117 {offsets = [128, 128], sizes = [32, 128], strides = [1, 1]} : vector<576x640xf32> to vector<32x128xf32>
    %164 = arith.addf %162, %163 : vector<32x128xf32>
    %165 = vector.extract_strided_slice %117 {offsets = [160, 256], sizes = [32, 128], strides = [1, 1]} : vector<576x640xf32> to vector<32x128xf32>
    %166 = arith.addf %164, %165 : vector<32x128xf32>
    %167 = vector.extract_strided_slice %117 {offsets = [192, 384], sizes = [32, 128], strides = [1, 1]} : vector<576x640xf32> to vector<32x128xf32>
    %168 = arith.addf %166, %167 : vector<32x128xf32>
    %169 = vector.extract_strided_slice %117 {offsets = [224, 512], sizes = [32, 128], strides = [1, 1]} : vector<576x640xf32> to vector<32x128xf32>
    %170 = arith.addf %168, %169 : vector<32x128xf32>
    %171 = vector.broadcast %118 : vector<1x128xf32> to vector<32x128xf32>
    %172 = arith.addf %170, %171 : vector<32x128xf32>
    %cst_12 = arith.constant 0.000000e+00 : f32
    %173 = vector.broadcast %cst_12 : f32 to vector<32x128xf32>
    %174 = arith.maximumf %172, %173 : vector<32x128xf32>
    %175 = arith.maximumf %161, %174 : vector<32x128xf32>
    %176 = vector.extract_strided_slice %117 {offsets = [128, 0], sizes = [32, 128], strides = [1, 1]} : vector<576x640xf32> to vector<32x128xf32>
    %177 = vector.extract_strided_slice %117 {offsets = [160, 128], sizes = [32, 128], strides = [1, 1]} : vector<576x640xf32> to vector<32x128xf32>
    %178 = arith.addf %176, %177 : vector<32x128xf32>
    %179 = vector.extract_strided_slice %117 {offsets = [192, 256], sizes = [32, 128], strides = [1, 1]} : vector<576x640xf32> to vector<32x128xf32>
    %180 = arith.addf %178, %179 : vector<32x128xf32>
    %181 = vector.extract_strided_slice %117 {offsets = [224, 384], sizes = [32, 128], strides = [1, 1]} : vector<576x640xf32> to vector<32x128xf32>
    %182 = arith.addf %180, %181 : vector<32x128xf32>
    %183 = vector.extract_strided_slice %117 {offsets = [256, 512], sizes = [32, 128], strides = [1, 1]} : vector<576x640xf32> to vector<32x128xf32>
    %184 = arith.addf %182, %183 : vector<32x128xf32>
    %185 = vector.broadcast %118 : vector<1x128xf32> to vector<32x128xf32>
    %186 = arith.addf %184, %185 : vector<32x128xf32>
    %cst_13 = arith.constant 0.000000e+00 : f32
    %187 = vector.broadcast %cst_13 : f32 to vector<32x128xf32>
    %188 = arith.maximumf %186, %187 : vector<32x128xf32>
    %189 = arith.maximumf %175, %188 : vector<32x128xf32>
    %190 = vector.extract_strided_slice %117 {offsets = [160, 0], sizes = [32, 128], strides = [1, 1]} : vector<576x640xf32> to vector<32x128xf32>
    %191 = vector.extract_strided_slice %117 {offsets = [192, 128], sizes = [32, 128], strides = [1, 1]} : vector<576x640xf32> to vector<32x128xf32>
    %192 = arith.addf %190, %191 : vector<32x128xf32>
    %193 = vector.extract_strided_slice %117 {offsets = [224, 256], sizes = [32, 128], strides = [1, 1]} : vector<576x640xf32> to vector<32x128xf32>
    %194 = arith.addf %192, %193 : vector<32x128xf32>
    %195 = vector.extract_strided_slice %117 {offsets = [256, 384], sizes = [32, 128], strides = [1, 1]} : vector<576x640xf32> to vector<32x128xf32>
    %196 = arith.addf %194, %195 : vector<32x128xf32>
    %197 = vector.extract_strided_slice %117 {offsets = [288, 512], sizes = [32, 128], strides = [1, 1]} : vector<576x640xf32> to vector<32x128xf32>
    %198 = arith.addf %196, %197 : vector<32x128xf32>
    %199 = vector.broadcast %118 : vector<1x128xf32> to vector<32x128xf32>
    %200 = arith.addf %198, %199 : vector<32x128xf32>
    %cst_14 = arith.constant 0.000000e+00 : f32
    %201 = vector.broadcast %cst_14 : f32 to vector<32x128xf32>
    %202 = arith.maximumf %200, %201 : vector<32x128xf32>
    %203 = arith.maximumf %189, %202 : vector<32x128xf32>
    %204 = vector.extract_strided_slice %117 {offsets = [192, 0], sizes = [32, 128], strides = [1, 1]} : vector<576x640xf32> to vector<32x128xf32>
    %205 = vector.extract_strided_slice %117 {offsets = [224, 128], sizes = [32, 128], strides = [1, 1]} : vector<576x640xf32> to vector<32x128xf32>
    %206 = arith.addf %204, %205 : vector<32x128xf32>
    %207 = vector.extract_strided_slice %117 {offsets = [256, 256], sizes = [32, 128], strides = [1, 1]} : vector<576x640xf32> to vector<32x128xf32>
    %208 = arith.addf %206, %207 : vector<32x128xf32>
    %209 = vector.extract_strided_slice %117 {offsets = [288, 384], sizes = [32, 128], strides = [1, 1]} : vector<576x640xf32> to vector<32x128xf32>
    %210 = arith.addf %208, %209 : vector<32x128xf32>
    %211 = vector.extract_strided_slice %117 {offsets = [320, 512], sizes = [32, 128], strides = [1, 1]} : vector<576x640xf32> to vector<32x128xf32>
    %212 = arith.addf %210, %211 : vector<32x128xf32>
    %213 = vector.broadcast %118 : vector<1x128xf32> to vector<32x128xf32>
    %214 = arith.addf %212, %213 : vector<32x128xf32>
    %cst_15 = arith.constant 0.000000e+00 : f32
    %215 = vector.broadcast %cst_15 : f32 to vector<32x128xf32>
    %216 = arith.maximumf %214, %215 : vector<32x128xf32>
    %217 = arith.maximumf %203, %216 : vector<32x128xf32>
    %218 = vector.extract_strided_slice %117 {offsets = [224, 0], sizes = [32, 128], strides = [1, 1]} : vector<576x640xf32> to vector<32x128xf32>
    %219 = vector.extract_strided_slice %117 {offsets = [256, 128], sizes = [32, 128], strides = [1, 1]} : vector<576x640xf32> to vector<32x128xf32>
    %220 = arith.addf %218, %219 : vector<32x128xf32>
    %221 = vector.extract_strided_slice %117 {offsets = [288, 256], sizes = [32, 128], strides = [1, 1]} : vector<576x640xf32> to vector<32x128xf32>
    %222 = arith.addf %220, %221 : vector<32x128xf32>
    %223 = vector.extract_strided_slice %117 {offsets = [320, 384], sizes = [32, 128], strides = [1, 1]} : vector<576x640xf32> to vector<32x128xf32>
    %224 = arith.addf %222, %223 : vector<32x128xf32>
    %225 = vector.extract_strided_slice %117 {offsets = [352, 512], sizes = [32, 128], strides = [1, 1]} : vector<576x640xf32> to vector<32x128xf32>
    %226 = arith.addf %224, %225 : vector<32x128xf32>
    %227 = vector.broadcast %118 : vector<1x128xf32> to vector<32x128xf32>
    %228 = arith.addf %226, %227 : vector<32x128xf32>
    %cst_16 = arith.constant 0.000000e+00 : f32
    %229 = vector.broadcast %cst_16 : f32 to vector<32x128xf32>
    %230 = arith.maximumf %228, %229 : vector<32x128xf32>
    %231 = arith.maximumf %217, %230 : vector<32x128xf32>
    %232 = vector.extract_strided_slice %117 {offsets = [256, 0], sizes = [32, 128], strides = [1, 1]} : vector<576x640xf32> to vector<32x128xf32>
    %233 = vector.extract_strided_slice %117 {offsets = [288, 128], sizes = [32, 128], strides = [1, 1]} : vector<576x640xf32> to vector<32x128xf32>
    %234 = arith.addf %232, %233 : vector<32x128xf32>
    %235 = vector.extract_strided_slice %117 {offsets = [320, 256], sizes = [32, 128], strides = [1, 1]} : vector<576x640xf32> to vector<32x128xf32>
    %236 = arith.addf %234, %235 : vector<32x128xf32>
    %237 = vector.extract_strided_slice %117 {offsets = [352, 384], sizes = [32, 128], strides = [1, 1]} : vector<576x640xf32> to vector<32x128xf32>
    %238 = arith.addf %236, %237 : vector<32x128xf32>
    %239 = vector.extract_strided_slice %117 {offsets = [384, 512], sizes = [32, 128], strides = [1, 1]} : vector<576x640xf32> to vector<32x128xf32>
    %240 = arith.addf %238, %239 : vector<32x128xf32>
    %241 = vector.broadcast %118 : vector<1x128xf32> to vector<32x128xf32>
    %242 = arith.addf %240, %241 : vector<32x128xf32>
    %cst_17 = arith.constant 0.000000e+00 : f32
    %243 = vector.broadcast %cst_17 : f32 to vector<32x128xf32>
    %244 = arith.maximumf %242, %243 : vector<32x128xf32>
    %245 = arith.maximumf %231, %244 : vector<32x128xf32>
    %246 = vector.extract_strided_slice %117 {offsets = [288, 0], sizes = [32, 128], strides = [1, 1]} : vector<576x640xf32> to vector<32x128xf32>
    %247 = vector.extract_strided_slice %117 {offsets = [320, 128], sizes = [32, 128], strides = [1, 1]} : vector<576x640xf32> to vector<32x128xf32>
    %248 = arith.addf %246, %247 : vector<32x128xf32>
    %249 = vector.extract_strided_slice %117 {offsets = [352, 256], sizes = [32, 128], strides = [1, 1]} : vector<576x640xf32> to vector<32x128xf32>
    %250 = arith.addf %248, %249 : vector<32x128xf32>
    %251 = vector.extract_strided_slice %117 {offsets = [384, 384], sizes = [32, 128], strides = [1, 1]} : vector<576x640xf32> to vector<32x128xf32>
    %252 = arith.addf %250, %251 : vector<32x128xf32>
    %253 = vector.extract_strided_slice %117 {offsets = [416, 512], sizes = [32, 128], strides = [1, 1]} : vector<576x640xf32> to vector<32x128xf32>
    %254 = arith.addf %252, %253 : vector<32x128xf32>
    %255 = vector.broadcast %118 : vector<1x128xf32> to vector<32x128xf32>
    %256 = arith.addf %254, %255 : vector<32x128xf32>
    %cst_18 = arith.constant 0.000000e+00 : f32
    %257 = vector.broadcast %cst_18 : f32 to vector<32x128xf32>
    %258 = arith.maximumf %256, %257 : vector<32x128xf32>
    %259 = arith.maximumf %245, %258 : vector<32x128xf32>
    %260 = vector.extract_strided_slice %117 {offsets = [320, 0], sizes = [32, 128], strides = [1, 1]} : vector<576x640xf32> to vector<32x128xf32>
    %261 = vector.extract_strided_slice %117 {offsets = [352, 128], sizes = [32, 128], strides = [1, 1]} : vector<576x640xf32> to vector<32x128xf32>
    %262 = arith.addf %260, %261 : vector<32x128xf32>
    %263 = vector.extract_strided_slice %117 {offsets = [384, 256], sizes = [32, 128], strides = [1, 1]} : vector<576x640xf32> to vector<32x128xf32>
    %264 = arith.addf %262, %263 : vector<32x128xf32>
    %265 = vector.extract_strided_slice %117 {offsets = [416, 384], sizes = [32, 128], strides = [1, 1]} : vector<576x640xf32> to vector<32x128xf32>
    %266 = arith.addf %264, %265 : vector<32x128xf32>
    %267 = vector.extract_strided_slice %117 {offsets = [448, 512], sizes = [32, 128], strides = [1, 1]} : vector<576x640xf32> to vector<32x128xf32>
    %268 = arith.addf %266, %267 : vector<32x128xf32>
    %269 = vector.broadcast %118 : vector<1x128xf32> to vector<32x128xf32>
    %270 = arith.addf %268, %269 : vector<32x128xf32>
    %cst_19 = arith.constant 0.000000e+00 : f32
    %271 = vector.broadcast %cst_19 : f32 to vector<32x128xf32>
    %272 = arith.maximumf %270, %271 : vector<32x128xf32>
    %273 = arith.maximumf %259, %272 : vector<32x128xf32>
    %274 = vector.extract_strided_slice %117 {offsets = [352, 0], sizes = [32, 128], strides = [1, 1]} : vector<576x640xf32> to vector<32x128xf32>
    %275 = vector.extract_strided_slice %117 {offsets = [384, 128], sizes = [32, 128], strides = [1, 1]} : vector<576x640xf32> to vector<32x128xf32>
    %276 = arith.addf %274, %275 : vector<32x128xf32>
    %277 = vector.extract_strided_slice %117 {offsets = [416, 256], sizes = [32, 128], strides = [1, 1]} : vector<576x640xf32> to vector<32x128xf32>
    %278 = arith.addf %276, %277 : vector<32x128xf32>
    %279 = vector.extract_strided_slice %117 {offsets = [448, 384], sizes = [32, 128], strides = [1, 1]} : vector<576x640xf32> to vector<32x128xf32>
    %280 = arith.addf %278, %279 : vector<32x128xf32>
    %281 = vector.extract_strided_slice %117 {offsets = [480, 512], sizes = [32, 128], strides = [1, 1]} : vector<576x640xf32> to vector<32x128xf32>
    %282 = arith.addf %280, %281 : vector<32x128xf32>
    %283 = vector.broadcast %118 : vector<1x128xf32> to vector<32x128xf32>
    %284 = arith.addf %282, %283 : vector<32x128xf32>
    %cst_20 = arith.constant 0.000000e+00 : f32
    %285 = vector.broadcast %cst_20 : f32 to vector<32x128xf32>
    %286 = arith.maximumf %284, %285 : vector<32x128xf32>
    %287 = arith.maximumf %273, %286 : vector<32x128xf32>
    %288 = vector.extract_strided_slice %117 {offsets = [384, 0], sizes = [32, 128], strides = [1, 1]} : vector<576x640xf32> to vector<32x128xf32>
    %289 = vector.extract_strided_slice %117 {offsets = [416, 128], sizes = [32, 128], strides = [1, 1]} : vector<576x640xf32> to vector<32x128xf32>
    %290 = arith.addf %288, %289 : vector<32x128xf32>
    %291 = vector.extract_strided_slice %117 {offsets = [448, 256], sizes = [32, 128], strides = [1, 1]} : vector<576x640xf32> to vector<32x128xf32>
    %292 = arith.addf %290, %291 : vector<32x128xf32>
    %293 = vector.extract_strided_slice %117 {offsets = [480, 384], sizes = [32, 128], strides = [1, 1]} : vector<576x640xf32> to vector<32x128xf32>
    %294 = arith.addf %292, %293 : vector<32x128xf32>
    %295 = vector.extract_strided_slice %117 {offsets = [512, 512], sizes = [32, 128], strides = [1, 1]} : vector<576x640xf32> to vector<32x128xf32>
    %296 = arith.addf %294, %295 : vector<32x128xf32>
    %297 = vector.broadcast %118 : vector<1x128xf32> to vector<32x128xf32>
    %298 = arith.addf %296, %297 : vector<32x128xf32>
    %cst_21 = arith.constant 0.000000e+00 : f32
    %299 = vector.broadcast %cst_21 : f32 to vector<32x128xf32>
    %300 = arith.maximumf %298, %299 : vector<32x128xf32>
    %301 = arith.maximumf %287, %300 : vector<32x128xf32>
    %302 = vector.extract_strided_slice %117 {offsets = [416, 0], sizes = [32, 128], strides = [1, 1]} : vector<576x640xf32> to vector<32x128xf32>
    %303 = vector.extract_strided_slice %117 {offsets = [448, 128], sizes = [32, 128], strides = [1, 1]} : vector<576x640xf32> to vector<32x128xf32>
    %304 = arith.addf %302, %303 : vector<32x128xf32>
    %305 = vector.extract_strided_slice %117 {offsets = [480, 256], sizes = [32, 128], strides = [1, 1]} : vector<576x640xf32> to vector<32x128xf32>
    %306 = arith.addf %304, %305 : vector<32x128xf32>
    %307 = vector.extract_strided_slice %117 {offsets = [512, 384], sizes = [32, 128], strides = [1, 1]} : vector<576x640xf32> to vector<32x128xf32>
    %308 = arith.addf %306, %307 : vector<32x128xf32>
    %309 = vector.extract_strided_slice %117 {offsets = [544, 512], sizes = [32, 128], strides = [1, 1]} : vector<576x640xf32> to vector<32x128xf32>
    %310 = arith.addf %308, %309 : vector<32x128xf32>
    %311 = vector.broadcast %118 : vector<1x128xf32> to vector<32x128xf32>
    %312 = arith.addf %310, %311 : vector<32x128xf32>
    %cst_22 = arith.constant 0.000000e+00 : f32
    %313 = vector.broadcast %cst_22 : f32 to vector<32x128xf32>
    %314 = arith.maximumf %312, %313 : vector<32x128xf32>
    %315 = arith.maximumf %301, %314 : vector<32x128xf32>
    %316 = arith.truncf %315 : vector<32x128xf32> to vector<32x128xbf16>
    %c0_23 = arith.constant 0 : index
    %c0_24 = arith.constant 0 : index
    %317 = vector.load %arg5[%c0_23, %c0_24] : memref<128x256xbf16, #tpu.memory_space<vmem>>, vector<128x256xbf16>
    %cst_25 = arith.constant dense<0.000000e+00> : vector<32x256xf32>
    %318 = tpu.matmul %316, %317, %cst_25 {dimension_numbers = #tpu.dot_dimension_numbers<[1], [0], [0], [1], [0, 0, 1, 1], [], []>} : vector<32x128xbf16>, vector<128x256xbf16>, vector<32x256xf32> -> vector<32x256xf32>
    %c0_26 = arith.constant 0 : index
    %c0_27 = arith.constant 0 : index
    %319 = vector.load %arg6[%c0_26, %c0_27] : memref<1x256xf32, #tpu.memory_space<vmem>>, vector<1x256xf32>
    %320 = vector.broadcast %319 : vector<1x256xf32> to vector<32x256xf32>
    %321 = arith.addf %318, %320 : vector<32x256xf32>
    %322 = vector.extract_strided_slice %321 {offsets = [0, 0], sizes = [32, 128], strides = [1, 1]} : vector<32x256xf32> to vector<32x128xf32>
    %cst_28 = arith.constant 0.000000e+00 : f32
    %323 = vector.broadcast %cst_28 : f32 to vector<32x128xf32>
    %324 = arith.maximumf %322, %323 : vector<32x128xf32>
    %325 = vector.extract_strided_slice %321 {offsets = [0, 128], sizes = [32, 128], strides = [1, 1]} : vector<32x256xf32> to vector<32x128xf32>
    %326 = arith.negf %325 : vector<32x128xf32>
    %327 = math.exp %326 : vector<32x128xf32>
    %cst_29 = arith.constant 1.000000e+00 : f32
    %328 = vector.broadcast %cst_29 : f32 to vector<32x128xf32>
    %329 = arith.addf %328, %327 : vector<32x128xf32>
    %330 = arith.divf %328, %329 : vector<32x128xf32>
    %331 = arith.mulf %330, %324 : vector<32x128xf32>
    %cst_30 = arith.constant 1.000000e+00 : f32
    %332 = vector.broadcast %cst_30 : f32 to vector<32x128xf32>
    %333 = arith.subf %332, %330 : vector<32x128xf32>
    %334 = arith.mulf %333, %315 : vector<32x128xf32>
    %335 = arith.addf %331, %334 : vector<32x128xf32>
    %c0_31 = arith.constant 0 : index
    %c0_32 = arith.constant 0 : index
    %336 = vector.load %arg7[%c0_31, %c0_32] : memref<32x128xf32, #tpu.memory_space<vmem>>, vector<32x128xf32>
    tpu.vector_store %arg7[%c0_31, %c0_32], %335 {strides = array<i32>} : memref<32x128xf32, #tpu.memory_space<vmem>>, vector<32x128xf32>,
    return
  }
  func.func @transform_0(%arg0: i32) -> (i32, i32) {
    %c0_i32 = arith.constant 0 : i32
    %c0_i32_0 = arith.constant 0 : i32
    return %arg0, %c0_i32 : i32, i32
  }
  func.func @transform_1(%arg0: i32) -> (i32, i32) {
    %c0_i32 = arith.constant 0 : i32
    %c0_i32_0 = arith.constant 0 : i32
    %c0_i32_1 = arith.constant 0 : i32
    return %c0_i32, %c0_i32_0 : i32, i32
  }
  func.func @transform_2(%arg0: i32) -> (i32, i32) {
    %c0_i32 = arith.constant 0 : i32
    %c0_i32_0 = arith.constant 0 : i32
    %c0_i32_1 = arith.constant 0 : i32
    return %c0_i32, %c0_i32_0 : i32, i32
  }
  func.func @transform_3(%arg0: i32) -> (i32, i32) {
    %c0_i32 = arith.constant 0 : i32
    %c0_i32_0 = arith.constant 0 : i32
    %c0_i32_1 = arith.constant 0 : i32
    return %c0_i32, %c0_i32_0 : i32, i32
  }
  func.func @transform_4(%arg0: i32) -> (i32, i32) {
    %c0_i32 = arith.constant 0 : i32
    %c0_i32_0 = arith.constant 0 : i32
    %c0_i32_1 = arith.constant 0 : i32
    return %c0_i32, %c0_i32_0 : i32, i32
  }
  func.func @transform_5(%arg0: i32) -> (i32, i32) {
    %c0_i32 = arith.constant 0 : i32
    %c0_i32_0 = arith.constant 0 : i32
    %c0_i32_1 = arith.constant 0 : i32
    return %c0_i32, %c0_i32_0 : i32, i32
  }
  func.func @transform_6(%arg0: i32) -> (i32, i32) {
    %c0_i32 = arith.constant 0 : i32
    %c0_i32_0 = arith.constant 0 : i32
    return %arg0, %c0_i32 : i32, i32
  }
}

</mosaic_0001>

<llo_original>
// kernel: _lambda_.1
$region0: #{_lambda_.1}
  #allocation0 [shape = 'u32[]', space=smem, size = 0x4, offset = 0x4, fixed_abs, tag = 'smem constant byte address 0x4 - core index']
  #allocation1 [shape = 'u32[144,128]{1,0:T(1,128)}', space=vmem, size = 0x12000, scoped, tag = 'internal scratch']
  %s0 = inlined_call_operand.vmem [shape: s32[32,18], index: 0, kind: input, shape index: {}]
  %s1 = inlined_call_operand.vmem [shape: bf16[30,50], index: 1, kind: input, shape index: {}]
  %s2 = inlined_call_operand.vmem [shape: bf16[50,640], index: 2, kind: input, shape index: {}]
  %s3 = inlined_call_operand.vmem [shape: f32[1,128], index: 3, kind: input, shape index: {}]
  %s4 = inlined_call_operand.vmem [shape: bf16[128,256], index: 4, kind: input, shape index: {}]
  %s5 = inlined_call_operand.vmem [shape: f32[1,256], index: 5, kind: input, shape index: {}]
  %s6 = inlined_call_operand.vmem [shape: f32[32,128], index: 6, kind: output, shape index: {}]
  %s7 = sld [smem:[#allocation0]]
  $region34: #{_lambda_.1} parent=0
    _
  %s9 = ssub.s32 1, %s7
  %s10 = scalar_select 0, %s9, %s7
  // Predicated region
  $region2: #{_lambda_.1} parent=0 // pred_check
    _
  $region3: #{_lambda_.1} parent=0 // pred_check_branch
    %12 = sbr.rel (0) target = $region5
  $region4: #{_lambda_.1} parent=0 // pred_region
    _
  $region5: #{_lambda_.1} parent=0 // pred_fallthru
    _
  // Predicated region
  $region6: #{_lambda_.1} parent=0 // pred_check
    _
  $region7: #{_lambda_.1} parent=0 // pred_check_branch
    %14 = sbr.rel (0) target = $region9
  $region8: #{_lambda_.1} parent=0 // pred_region
    _
  $region9: #{_lambda_.1} parent=0 // pred_fallthru
    _
  // Predicated region
  $region10: #{_lambda_.1} parent=0 // pred_check
    _
  $region11: #{_lambda_.1} parent=0 // pred_check_branch
    %16 = sbr.rel (0) target = $region13
  $region12: #{_lambda_.1} parent=0 // pred_region
    _
  $region13: #{_lambda_.1} parent=0 // pred_fallthru
    _
  // Predicated region
  $region14: #{_lambda_.1} parent=0 // pred_check
    _
  $region15: #{_lambda_.1} parent=0 // pred_check_branch
    %18 = sbr.rel (0) target = $region17
  $region16: #{_lambda_.1} parent=0 // pred_region
    _
  $region17: #{_lambda_.1} parent=0 // pred_fallthru
    _
  // Predicated region
  $region18: #{_lambda_.1} parent=0 // pred_check
    _
  $region19: #{_lambda_.1} parent=0 // pred_check_branch
    %20 = sbr.rel (0) target = $region21
  $region20: #{_lambda_.1} parent=0 // pred_region
    _
  $region21: #{_lambda_.1} parent=0 // pred_fallthru
    _
  // Predicated region
  $region22: #{_lambda_.1} parent=0 // pred_check
    _
  $region23: #{_lambda_.1} parent=0 // pred_check_branch
    %22 = sbr.rel (0) target = $region25
  $region24: #{_lambda_.1} parent=0 // pred_region
    _
  $region25: #{_lambda_.1} parent=0 // pred_fallthru
    _
  %v24 = vld [vmem:[%s0] sm:$0xff]
  %v25 = vld [vmem:[%s0 + $0x8] sm:$0xff]
  %v26 = vld [vmem:[%s0 + $0x10] sm:$0xff]
  %v27 = vld [vmem:[%s0 + $0x18] sm:$0xff]
  %v28 = vlaneseq
  %v29 = vand.u32 %v28, 127
  %30 = vset.pattern.permute.xlu0 0
  %31 = vperm.xlu0 %30, %v24
  %v32 = vpop.permute.xlu0 %31
  %33 = vset.pattern.permute.xlu0 0
  %34 = vperm.xlu0 %33, %v25
  %v35 = vpop.permute.xlu0 %34
  %36 = vset.pattern.permute.xlu0 0
  %37 = vperm.xlu0 %36, %v26
  %v38 = vpop.permute.xlu0 %37
  %39 = vset.pattern.permute.xlu0 0
  %40 = vperm.xlu0 %39, %v27
  %v41 = vpop.permute.xlu0 %40
  %vm42 = vcmp.eq.s32.totalorder %v32, %v29
  %vm43 = vcmp.eq.s32.totalorder %v35, %v29
  %vm44 = vcmp.eq.s32.totalorder %v38, %v29
  %vm45 = vcmp.eq.s32.totalorder %v41, %v29
  %v46 = vsel %vm42, 1, 0
  %v47 = vsel %vm43, 1, 0
  %v48 = vsel %vm44, 1, 0
  %v49 = vsel %vm45, 1, 0
  %v50 = vcvt.s32.f32 %v46
  %v51 = vcvt.s32.f32 %v47
  %v52 = vcvt.s32.f32 %v48
  %v53 = vcvt.s32.f32 %v49
  %v54 = vpack.c.bf16 %v51, %v50
  %v55 = vpack.c.bf16 %v53, %v52
  %56 = vset.pattern.permute.xlu0 1
  %57 = vperm.xlu0 %56, %v24
  %v58 = vpop.permute.xlu0 %57
  %59 = vset.pattern.permute.xlu0 1
  %60 = vperm.xlu0 %59, %v25
  %v61 = vpop.permute.xlu0 %60
  %62 = vset.pattern.permute.xlu0 1
  %63 = vperm.xlu0 %62, %v26
  %v64 = vpop.permute.xlu0 %63
  %65 = vset.pattern.permute.xlu0 1
  %66 = vperm.xlu0 %65, %v27
  %v67 = vpop.permute.xlu0 %66
  %vm68 = vcmp.eq.s32.totalorder %v58, %v29
  %vm69 = vcmp.eq.s32.totalorder %v61, %v29
  %vm70 = vcmp.eq.s32.totalorder %v64, %v29
  %vm71 = vcmp.eq.s32.totalorder %v67, %v29
  %v72 = vsel %vm68, 1, 0
  %v73 = vsel %vm69, 1, 0
  %v74 = vsel %vm70, 1, 0
  %v75 = vsel %vm71, 1, 0
  %v76 = vcvt.s32.f32 %v72
  %v77 = vcvt.s32.f32 %v73
  %v78 = vcvt.s32.f32 %v74
  %v79 = vcvt.s32.f32 %v75
  %v80 = vpack.c.bf16 %v77, %v76
  %v81 = vpack.c.bf16 %v79, %v78
  %82 = vset.pattern.permute.xlu0 2
  %83 = vperm.xlu0 %82, %v24
  %v84 = vpop.permute.xlu0 %83
  %85 = vset.pattern.permute.xlu0 2
  %86 = vperm.xlu0 %85, %v25
  %v87 = vpop.permute.xlu0 %86
  %88 = vset.pattern.permute.xlu0 2
  %89 = vperm.xlu0 %88, %v26
  %v90 = vpop.permute.xlu0 %89
  %91 = vset.pattern.permute.xlu0 2
  %92 = vperm.xlu0 %91, %v27
  %v93 = vpop.permute.xlu0 %92
  %vm94 = vcmp.eq.s32.totalorder %v84, %v29
  %vm95 = vcmp.eq.s32.totalorder %v87, %v29
  %vm96 = vcmp.eq.s32.totalorder %v90, %v29
  %vm97 = vcmp.eq.s32.totalorder %v93, %v29
  %v98 = vsel %vm94, 1, 0
  %v99 = vsel %vm95, 1, 0
  %v100 = vsel %vm96, 1, 0
  %v101 = vsel %vm97, 1, 0
  %v102 = vcvt.s32.f32 %v98
  %v103 = vcvt.s32.f32 %v99
  %v104 = vcvt.s32.f32 %v100
  %v105 = vcvt.s32.f32 %v101
  %v106 = vpack.c.bf16 %v103, %v102
  %v107 = vpack.c.bf16 %v105, %v104
  %108 = vset.pattern.permute.xlu0 3
  %109 = vperm.xlu0 %108, %v24
  %v110 = vpop.permute.xlu0 %109
  %111 = vset.pattern.permute.xlu0 3
  %112 = vperm.xlu0 %111, %v25
  %v113 = vpop.permute.xlu0 %112
  %114 = vset.pattern.permute.xlu0 3
  %115 = vperm.xlu0 %114, %v26
  %v116 = vpop.permute.xlu0 %115
  %117 = vset.pattern.permute.xlu0 3
  %118 = vperm.xlu0 %117, %v27
  %v119 = vpop.permute.xlu0 %118
  %vm120 = vcmp.eq.s32.totalorder %v110, %v29
  %vm121 = vcmp.eq.s32.totalorder %v113, %v29
  %vm122 = vcmp.eq.s32.totalorder %v116, %v29
  %vm123 = vcmp.eq.s32.totalorder %v119, %v29
  %v124 = vsel %vm120, 1, 0
  %v125 = vsel %vm121, 1, 0
  %v126 = vsel %vm122, 1, 0
  %v127 = vsel %vm123, 1, 0
  %v128 = vcvt.s32.f32 %v124
  %v129 = vcvt.s32.f32 %v125
  %v130 = vcvt.s32.f32 %v126
  %v131 = vcvt.s32.f32 %v127
  %v132 = vpack.c.bf16 %v129, %v128
  %v133 = vpack.c.bf16 %v131, %v130
  %134 = vset.pattern.permute.xlu0 4
  %135 = vperm.xlu0 %134, %v24
  %v136 = vpop.permute.xlu0 %135
  %137 = vset.pattern.permute.xlu0 4
  %138 = vperm.xlu0 %137, %v25
  %v139 = vpop.permute.xlu0 %138
  %140 = vset.pattern.permute.xlu0 4
  %141 = vperm.xlu0 %140, %v26
  %v142 = vpop.permute.xlu0 %141
  %143 = vset.pattern.permute.xlu0 4
  %144 = vperm.xlu0 %143, %v27
  %v145 = vpop.permute.xlu0 %144
  %vm146 = vcmp.eq.s32.totalorder %v136, %v29
  %vm147 = vcmp.eq.s32.totalorder %v139, %v29
  %vm148 = vcmp.eq.s32.totalorder %v142, %v29
  %vm149 = vcmp.eq.s32.totalorder %v145, %v29
  %v150 = vsel %vm146, 1, 0
  %v151 = vsel %vm147, 1, 0
  %v152 = vsel %vm148, 1, 0
  %v153 = vsel %vm149, 1, 0
  %v154 = vcvt.s32.f32 %v150
  %v155 = vcvt.s32.f32 %v151
  %v156 = vcvt.s32.f32 %v152
  %v157 = vcvt.s32.f32 %v153
  %v158 = vpack.c.bf16 %v155, %v154
  %v159 = vpack.c.bf16 %v157, %v156
  %160 = vset.pattern.permute.xlu0 5
  %161 = vperm.xlu0 %160, %v24
  %v162 = vpop.permute.xlu0 %161
  %163 = vset.pattern.permute.xlu0 5
  %164 = vperm.xlu0 %163, %v25
  %v165 = vpop.permute.xlu0 %164
  %166 = vset.pattern.permute.xlu0 5
  %167 = vperm.xlu0 %166, %v26
  %v168 = vpop.permute.xlu0 %167
  %169 = vset.pattern.permute.xlu0 5
  %170 = vperm.xlu0 %169, %v27
  %v171 = vpop.permute.xlu0 %170
  %vm172 = vcmp.eq.s32.totalorder %v162, %v29
  %vm173 = vcmp.eq.s32.totalorder %v165, %v29
  %vm174 = vcmp.eq.s32.totalorder %v168, %v29
  %vm175 = vcmp.eq.s32.totalorder %v171, %v29
  %v176 = vsel %vm172, 1, 0
  %v177 = vsel %vm173, 1, 0
  %v178 = vsel %vm174, 1, 0
  %v179 = vsel %vm175, 1, 0
  %v180 = vcvt.s32.f32 %v176
  %v181 = vcvt.s32.f32 %v177
  %v182 = vcvt.s32.f32 %v178
  %v183 = vcvt.s32.f32 %v179
  %v184 = vpack.c.bf16 %v181, %v180
  %v185 = vpack.c.bf16 %v183, %v182
  %186 = vset.pattern.permute.xlu0 6
  %187 = vperm.xlu0 %186, %v24
  %v188 = vpop.permute.xlu0 %187
  %189 = vset.pattern.permute.xlu0 6
  %190 = vperm.xlu0 %189, %v25
  %v191 = vpop.permute.xlu0 %190
  %192 = vset.pattern.permute.xlu0 6
  %193 = vperm.xlu0 %192, %v26
  %v194 = vpop.permute.xlu0 %193
  %195 = vset.pattern.permute.xlu0 6
  %196 = vperm.xlu0 %195, %v27
  %v197 = vpop.permute.xlu0 %196
  %vm198 = vcmp.eq.s32.totalorder %v188, %v29
  %vm199 = vcmp.eq.s32.totalorder %v191, %v29
  %vm200 = vcmp.eq.s32.totalorder %v194, %v29
  %vm201 = vcmp.eq.s32.totalorder %v197, %v29
  %v202 = vsel %vm198, 1, 0
  %v203 = vsel %vm199, 1, 0
  %v204 = vsel %vm200, 1, 0
  %v205 = vsel %vm201, 1, 0
  %v206 = vcvt.s32.f32 %v202
  %v207 = vcvt.s32.f32 %v203
  %v208 = vcvt.s32.f32 %v204
  %v209 = vcvt.s32.f32 %v205
  %v210 = vpack.c.bf16 %v207, %v206
  %v211 = vpack.c.bf16 %v209, %v208
  %212 = vset.pattern.permute.xlu0 7
  %213 = vperm.xlu0 %212, %v24
  %v214 = vpop.permute.xlu0 %213
  %215 = vset.pattern.permute.xlu0 7
  %216 = vperm.xlu0 %215, %v25
  %v217 = vpop.permute.xlu0 %216
  %218 = vset.pattern.permute.xlu0 7
  %219 = vperm.xlu0 %218, %v26
  %v220 = vpop.permute.xlu0 %219
  %221 = vset.pattern.permute.xlu0 7
  %222 = vperm.xlu0 %221, %v27
  %v223 = vpop.permute.xlu0 %222
  %vm224 = vcmp.eq.s32.totalorder %v214, %v29
  %vm225 = vcmp.eq.s32.totalorder %v217, %v29
  %vm226 = vcmp.eq.s32.totalorder %v220, %v29
  %vm227 = vcmp.eq.s32.totalorder %v223, %v29
  %v228 = vsel %vm224, 1, 0
  %v229 = vsel %vm225, 1, 0
  %v230 = vsel %vm226, 1, 0
  %v231 = vsel %vm227, 1, 0
  %v232 = vcvt.s32.f32 %v228
  %v233 = vcvt.s32.f32 %v229
  %v234 = vcvt.s32.f32 %v230
  %v235 = vcvt.s32.f32 %v231
  %v236 = vpack.c.bf16 %v233, %v232
  %v237 = vpack.c.bf16 %v235, %v234
  %238 = vset.pattern.permute.xlu0 8
  %239 = vperm.xlu0 %238, %v24
  %v240 = vpop.permute.xlu0 %239
  %241 = vset.pattern.permute.xlu0 8
  %242 = vperm.xlu0 %241, %v25
  %v243 = vpop.permute.xlu0 %242
  %244 = vset.pattern.permute.xlu0 8
  %245 = vperm.xlu0 %244, %v26
  %v246 = vpop.permute.xlu0 %245
  %247 = vset.pattern.permute.xlu0 8
  %248 = vperm.xlu0 %247, %v27
  %v249 = vpop.permute.xlu0 %248
  %vm250 = vcmp.eq.s32.totalorder %v240, %v29
  %vm251 = vcmp.eq.s32.totalorder %v243, %v29
  %vm252 = vcmp.eq.s32.totalorder %v246, %v29
  %vm253 = vcmp.eq.s32.totalorder %v249, %v29
  %v254 = vsel %vm250, 1, 0
  %v255 = vsel %vm251, 1, 0
  %v256 = vsel %vm252, 1, 0
  %v257 = vsel %vm253, 1, 0
  %v258 = vcvt.s32.f32 %v254
  %v259 = vcvt.s32.f32 %v255
  %v260 = vcvt.s32.f32 %v256
  %v261 = vcvt.s32.f32 %v257
  %v262 = vpack.c.bf16 %v259, %v258
  %v263 = vpack.c.bf16 %v261, %v260
  %264 = vset.pattern.permute.xlu0 9
  %265 = vperm.xlu0 %264, %v24
  %v266 = vpop.permute.xlu0 %265
  %267 = vset.pattern.permute.xlu0 9
  %268 = vperm.xlu0 %267, %v25
  %v269 = vpop.permute.xlu0 %268
  %270 = vset.pattern.permute.xlu0 9
  %271 = vperm.xlu0 %270, %v26
  %v272 = vpop.permute.xlu0 %271
  %273 = vset.pattern.permute.xlu0 9
  %274 = vperm.xlu0 %273, %v27
  %v275 = vpop.permute.xlu0 %274
  %vm276 = vcmp.eq.s32.totalorder %v266, %v29
  %vm277 = vcmp.eq.s32.totalorder %v269, %v29
  %vm278 = vcmp.eq.s32.totalorder %v272, %v29
  %vm279 = vcmp.eq.s32.totalorder %v275, %v29
  %v280 = vsel %vm276, 1, 0
  %v281 = vsel %vm277, 1, 0
  %v282 = vsel %vm278, 1, 0
  %v283 = vsel %vm279, 1, 0
  %v284 = vcvt.s32.f32 %v280
  %v285 = vcvt.s32.f32 %v281
  %v286 = vcvt.s32.f32 %v282
  %v287 = vcvt.s32.f32 %v283
  %v288 = vpack.c.bf16 %v285, %v284
  %v289 = vpack.c.bf16 %v287, %v286
  %290 = vset.pattern.permute.xlu0 10
  %291 = vperm.xlu0 %290, %v24
  %v292 = vpop.permute.xlu0 %291
  %293 = vset.pattern.permute.xlu0 10
  %294 = vperm.xlu0 %293, %v25
  %v295 = vpop.permute.xlu0 %294
  %296 = vset.pattern.permute.xlu0 10
  %297 = vperm.xlu0 %296, %v26
  %v298 = vpop.permute.xlu0 %297
  %299 = vset.pattern.permute.xlu0 10
  %300 = vperm.xlu0 %299, %v27
  %v301 = vpop.permute.xlu0 %300
  %vm302 = vcmp.eq.s32.totalorder %v292, %v29
  %vm303 = vcmp.eq.s32.totalorder %v295, %v29
  %vm304 = vcmp.eq.s32.totalorder %v298, %v29
  %vm305 = vcmp.eq.s32.totalorder %v301, %v29
  %v306 = vsel %vm302, 1, 0
  %v307 = vsel %vm303, 1, 0
  %v308 = vsel %vm304, 1, 0
  %v309 = vsel %vm305, 1, 0
  %v310 = vcvt.s32.f32 %v306
  %v311 = vcvt.s32.f32 %v307
  %v312 = vcvt.s32.f32 %v308
  %v313 = vcvt.s32.f32 %v309
  %v314 = vpack.c.bf16 %v311, %v310
  %v315 = vpack.c.bf16 %v313, %v312
  %316 = vset.pattern.permute.xlu0 11
  %317 = vperm.xlu0 %316, %v24
  %v318 = vpop.permute.xlu0 %317
  %319 = vset.pattern.permute.xlu0 11
  %320 = vperm.xlu0 %319, %v25
  %v321 = vpop.permute.xlu0 %320
  %322 = vset.pattern.permute.xlu0 11
  %323 = vperm.xlu0 %322, %v26
  %v324 = vpop.permute.xlu0 %323
  %325 = vset.pattern.permute.xlu0 11
  %326 = vperm.xlu0 %325, %v27
  %v327 = vpop.permute.xlu0 %326
  %vm328 = vcmp.eq.s32.totalorder %v318, %v29
  %vm329 = vcmp.eq.s32.totalorder %v321, %v29
  %vm330 = vcmp.eq.s32.totalorder %v324, %v29
  %vm331 = vcmp.eq.s32.totalorder %v327, %v29
  %v332 = vsel %vm328, 1, 0
  %v333 = vsel %vm329, 1, 0
  %v334 = vsel %vm330, 1, 0
  %v335 = vsel %vm331, 1, 0
  %v336 = vcvt.s32.f32 %v332
  %v337 = vcvt.s32.f32 %v333
  %v338 = vcvt.s32.f32 %v334
  %v339 = vcvt.s32.f32 %v335
  %v340 = vpack.c.bf16 %v337, %v336
  %v341 = vpack.c.bf16 %v339, %v338
  %342 = vset.pattern.permute.xlu0 12
  %343 = vperm.xlu0 %342, %v24
  %v344 = vpop.permute.xlu0 %343
  %345 = vset.pattern.permute.xlu0 12
  %346 = vperm.xlu0 %345, %v25
  %v347 = vpop.permute.xlu0 %346
  %348 = vset.pattern.permute.xlu0 12
  %349 = vperm.xlu0 %348, %v26
  %v350 = vpop.permute.xlu0 %349
  %351 = vset.pattern.permute.xlu0 12
  %352 = vperm.xlu0 %351, %v27
  %v353 = vpop.permute.xlu0 %352
  %vm354 = vcmp.eq.s32.totalorder %v344, %v29
  %vm355 = vcmp.eq.s32.totalorder %v347, %v29
  %vm356 = vcmp.eq.s32.totalorder %v350, %v29
  %vm357 = vcmp.eq.s32.totalorder %v353, %v29
  %v358 = vsel %vm354, 1, 0
  %v359 = vsel %vm355, 1, 0
  %v360 = vsel %vm356, 1, 0
  %v361 = vsel %vm357, 1, 0
  %v362 = vcvt.s32.f32 %v358
  %v363 = vcvt.s32.f32 %v359
  %v364 = vcvt.s32.f32 %v360
  %v365 = vcvt.s32.f32 %v361
  %v366 = vpack.c.bf16 %v363, %v362
  %v367 = vpack.c.bf16 %v365, %v364
  %368 = vset.pattern.permute.xlu0 13
  %369 = vperm.xlu0 %368, %v24
  %v370 = vpop.permute.xlu0 %369
  %371 = vset.pattern.permute.xlu0 13
  %372 = vperm.xlu0 %371, %v25
  %v373 = vpop.permute.xlu0 %372
  %374 = vset.pattern.permute.xlu0 13
  %375 = vperm.xlu0 %374, %v26
  %v376 = vpop.permute.xlu0 %375
  %377 = vset.pattern.permute.xlu0 13
  %378 = vperm.xlu0 %377, %v27
  %v379 = vpop.permute.xlu0 %378
  %vm380 = vcmp.eq.s32.totalorder %v370, %v29
  %vm381 = vcmp.eq.s32.totalorder %v373, %v29
  %vm382 = vcmp.eq.s32.totalorder %v376, %v29
  %vm383 = vcmp.eq.s32.totalorder %v379, %v29
  %v384 = vsel %vm380, 1, 0
  %v385 = vsel %vm381, 1, 0
  %v386 = vsel %vm382, 1, 0
  %v387 = vsel %vm383, 1, 0
  %v388 = vcvt.s32.f32 %v384
  %v389 = vcvt.s32.f32 %v385
  %v390 = vcvt.s32.f32 %v386
  %v391 = vcvt.s32.f32 %v387
  %v392 = vpack.c.bf16 %v389, %v388
  %v393 = vpack.c.bf16 %v391, %v390
  %394 = vset.pattern.permute.xlu0 14
  %395 = vperm.xlu0 %394, %v24
  %v396 = vpop.permute.xlu0 %395
  %397 = vset.pattern.permute.xlu0 14
  %398 = vperm.xlu0 %397, %v25
  %v399 = vpop.permute.xlu0 %398
  %400 = vset.pattern.permute.xlu0 14
  %401 = vperm.xlu0 %400, %v26
  %v402 = vpop.permute.xlu0 %401
  %403 = vset.pattern.permute.xlu0 14
  %404 = vperm.xlu0 %403, %v27
  %v405 = vpop.permute.xlu0 %404
  %vm406 = vcmp.eq.s32.totalorder %v396, %v29
  %vm407 = vcmp.eq.s32.totalorder %v399, %v29
  %vm408 = vcmp.eq.s32.totalorder %v402, %v29
  %vm409 = vcmp.eq.s32.totalorder %v405, %v29
  %v410 = vsel %vm406, 1, 0
  %v411 = vsel %vm407, 1, 0
  %v412 = vsel %vm408, 1, 0
  %v413 = vsel %vm409, 1, 0
  %v414 = vcvt.s32.f32 %v410
  %v415 = vcvt.s32.f32 %v411
  %v416 = vcvt.s32.f32 %v412
  %v417 = vcvt.s32.f32 %v413
  %v418 = vpack.c.bf16 %v415, %v414
  %v419 = vpack.c.bf16 %v417, %v416
  %420 = vset.pattern.permute.xlu0 15
  %421 = vperm.xlu0 %420, %v24
  %v422 = vpop.permute.xlu0 %421
  %423 = vset.pattern.permute.xlu0 15
  %424 = vperm.xlu0 %423, %v25
  %v425 = vpop.permute.xlu0 %424
  %426 = vset.pattern.permute.xlu0 15
  %427 = vperm.xlu0 %426, %v26
  %v428 = vpop.permute.xlu0 %427
  %429 = vset.pattern.permute.xlu0 15
  %430 = vperm.xlu0 %429, %v27
  %v431 = vpop.permute.xlu0 %430
  %vm432 = vcmp.eq.s32.totalorder %v422, %v29
  %vm433 = vcmp.eq.s32.totalorder %v425, %v29
  %vm434 = vcmp.eq.s32.totalorder %v428, %v29
  %vm435 = vcmp.eq.s32.totalorder %v431, %v29
  %v436 = vsel %vm432, 1, 0
  %v437 = vsel %vm433, 1, 0
  %v438 = vsel %vm434, 1, 0
  %v439 = vsel %vm435, 1, 0
  %v440 = vcvt.s32.f32 %v436
  %v441 = vcvt.s32.f32 %v437
  %v442 = vcvt.s32.f32 %v438
  %v443 = vcvt.s32.f32 %v439
  %v444 = vpack.c.bf16 %v441, %v440
  %v445 = vpack.c.bf16 %v443, %v442
  %446 = vset.pattern.permute.xlu0 16
  %447 = vperm.xlu0 %446, %v24
  %v448 = vpop.permute.xlu0 %447
  %449 = vset.pattern.permute.xlu0 16
  %450 = vperm.xlu0 %449, %v25
  %v451 = vpop.permute.xlu0 %450
  %452 = vset.pattern.permute.xlu0 16
  %453 = vperm.xlu0 %452, %v26
  %v454 = vpop.permute.xlu0 %453
  %455 = vset.pattern.permute.xlu0 16
  %456 = vperm.xlu0 %455, %v27
  %v457 = vpop.permute.xlu0 %456
  %vm458 = vcmp.eq.s32.totalorder %v448, %v29
  %vm459 = vcmp.eq.s32.totalorder %v451, %v29
  %vm460 = vcmp.eq.s32.totalorder %v454, %v29
  %vm461 = vcmp.eq.s32.totalorder %v457, %v29
  %v462 = vsel %vm458, 1, 0
  %v463 = vsel %vm459, 1, 0
  %v464 = vsel %vm460, 1, 0
  %v465 = vsel %vm461, 1, 0
  %v466 = vcvt.s32.f32 %v462
  %v467 = vcvt.s32.f32 %v463
  %v468 = vcvt.s32.f32 %v464
  %v469 = vcvt.s32.f32 %v465
  %v470 = vpack.c.bf16 %v467, %v466
  %v471 = vpack.c.bf16 %v469, %v468
  %472 = vset.pattern.permute.xlu0 17
  %473 = vperm.xlu0 %472, %v24
  %v474 = vpop.permute.xlu0 %473
  %475 = vset.pattern.permute.xlu0 17
  %476 = vperm.xlu0 %475, %v25
  %v477 = vpop.permute.xlu0 %476
  %478 = vset.pattern.permute.xlu0 17
  %479 = vperm.xlu0 %478, %v26
  %v480 = vpop.permute.xlu0 %479
  %481 = vset.pattern.permute.xlu0 17
  %482 = vperm.xlu0 %481, %v27
  %v483 = vpop.permute.xlu0 %482
  %vm484 = vcmp.eq.s32.totalorder %v474, %v29
  %vm485 = vcmp.eq.s32.totalorder %v477, %v29
  %vm486 = vcmp.eq.s32.totalorder %v480, %v29
  %vm487 = vcmp.eq.s32.totalorder %v483, %v29
  %v488 = vsel %vm484, 1, 0
  %v489 = vsel %vm485, 1, 0
  %v490 = vsel %vm486, 1, 0
  %v491 = vsel %vm487, 1, 0
  %v492 = vcvt.s32.f32 %v488
  %v493 = vcvt.s32.f32 %v489
  %v494 = vcvt.s32.f32 %v490
  %v495 = vcvt.s32.f32 %v491
  %v496 = vpack.c.bf16 %v493, %v492
  %v497 = vpack.c.bf16 %v495, %v494
  %v498 = vld [vmem:[%s1] sm:$0xf]
  %v499 = vld [vmem:[%s1 + $0x4] sm:$0xf]
  %v500 = vld [vmem:[%s1 + $0x8] sm:$0xf]
  %v501 = vld [vmem:[%s1 + $0xc] sm:$0x7]
  %v506 = vunpack.c.l.b16 %v498
  %v507 = vunpack.c.l.b16 %v499
  %v508 = vunpack.c.l.b16 %v500
  %v509 = vunpack.c.l.b16 %v501
  %v510 = vpack.c.b16 %v507, %v506
  %v511 = vpack.c.b16 %v509, %v508
  %vm513 = vcmask 244736
  %v515 = vsel %vm513, %v54, 0
  %v518 = vsel %vm513, %v55, 0
  %v521 = vsel %vm513, %v80, 0
  %v524 = vsel %vm513, %v81, 0
  %v527 = vsel %vm513, %v106, 0
  %v530 = vsel %vm513, %v107, 0
  %v533 = vsel %vm513, %v132, 0
  %v536 = vsel %vm513, %v133, 0
  %v539 = vsel %vm513, %v158, 0
  %v542 = vsel %vm513, %v159, 0
  %v545 = vsel %vm513, %v184, 0
  %v548 = vsel %vm513, %v185, 0
  %v551 = vsel %vm513, %v210, 0
  %v554 = vsel %vm513, %v211, 0
  %v557 = vsel %vm513, %v236, 0
  %v560 = vsel %vm513, %v237, 0
  %v563 = vsel %vm513, %v262, 0
  %v566 = vsel %vm513, %v263, 0
  %v569 = vsel %vm513, %v288, 0
  %v572 = vsel %vm513, %v289, 0
  %v575 = vsel %vm513, %v314, 0
  %v578 = vsel %vm513, %v315, 0
  %v581 = vsel %vm513, %v340, 0
  %v584 = vsel %vm513, %v341, 0
  %v587 = vsel %vm513, %v366, 0
  %v590 = vsel %vm513, %v367, 0
  %v593 = vsel %vm513, %v392, 0
  %v596 = vsel %vm513, %v393, 0
  %v599 = vsel %vm513, %v418, 0
  %v602 = vsel %vm513, %v419, 0
  %v605 = vsel %vm513, %v444, 0
  %v608 = vsel %vm513, %v445, 0
  %v611 = vsel %vm513, %v470, 0
  %v614 = vsel %vm513, %v471, 0
  %v617 = vsel %vm513, %v496, 0
  %v620 = vsel %vm513, %v497, 0
  %vm622 = vcmask 1046528
  %v624 = vsel %vm622, %v511, 0
  %626 = vmatprep.subr.bf16.mxu0 0
  %627 = vmatpush1.bf16.msra.mxu0 0
  %628 = vmatprep.subr.bf16.mxu0 0
  %629 = vmatpush1.bf16.msra.mxu0 0
  %630 = vmatprep.subr.bf16.mxu0 0
  %631 = vmatpush1.bf16.msra.mxu0 0
  %632 = vmatprep.subr.bf16.mxu0 0
  %633 = vmatpush1.bf16.msra.mxu0 0
  %634 = vmatprep.subr.bf16.mxu0 0
  %635 = vmatpush1.bf16.msra.mxu0 0
  %636 = vmatprep.subr.bf16.mxu0 0
  %637 = vmatpush1.bf16.msra.mxu0 0
  %638 = vmatprep.subr.bf16.mxu0 0
  %639 = vmatpush1.bf16.msra.mxu0 %v624
  %640 = vmatprep.subr.bf16.mxu0 0
  %641 = vmatpush1.bf16.msra.mxu0 %v510
  %642 = vmatprep.subr.bf16.mxu0 0
  %643 = vmatpush2.bf16.msra.mxu0 0
  %644 = vmatprep.subr.bf16.mxu0 0
  %645 = vmatpush2.bf16.msra.mxu0 0
  %646 = vmatprep.subr.bf16.mxu0 0
  %647 = vmatpush2.bf16.msra.mxu0 0
  %648 = vmatprep.subr.bf16.mxu0 0
  %649 = vmatpush2.bf16.msra.mxu0 0
  %650 = vmatprep.subr.bf16.mxu0 0
  %651 = vmatpush2.bf16.msra.mxu0 0
  %652 = vmatprep.subr.bf16.mxu0 0
  %653 = vmatpush2.bf16.msra.mxu0 0
  %654 = vmatprep.subr.bf16.mxu0 0
  %655 = vmatpush2.bf16.msra.mxu0 0
  %656 = vmatprep.subr.bf16.mxu0 0
  %657 = vmatpush2.bf16.msra.mxu0 0
  %658 = vmatprep.mubr.bf16.mxu0 0
  %659 = vmatmul.mubr.bf16.gmra.mxu0 %v515
  %v660 = vpop.f32.mrf.mxu0
  %v661 = vadd.f32 0.0, %v660
  %v662 = vpop.f32.mrf.mxu0
  %v663 = vpop.f32.mrf.mxu0
  %v664 = vadd.f32 0.0, %v663
  %v665 = vpop.f32.mrf.mxu0
  %666 = vmatprep.mubr.bf16.mxu0 0
  %667 = vmatmul.mubr.bf16.gmra.mxu0 %v518
  %v668 = vpop.f32.mrf.mxu0
  %v669 = vadd.f32 0.0, %v668
  %v670 = vpop.f32.mrf.mxu0
  %v671 = vpop.f32.mrf.mxu0
  %v672 = vadd.f32 0.0, %v671
  %v673 = vpop.f32.mrf.mxu0
  %674 = vmatprep.mubr.bf16.mxu0 0
  %675 = vmatmul.mubr.bf16.gmra.mxu0 %v521
  %v676 = vpop.f32.mrf.mxu0
  %v677 = vadd.f32 0.0, %v676
  %v678 = vpop.f32.mrf.mxu0
  %v679 = vpop.f32.mrf.mxu0
  %v680 = vadd.f32 0.0, %v679
  %v681 = vpop.f32.mrf.mxu0
  %682 = vmatprep.mubr.bf16.mxu0 0
  %683 = vmatmul.mubr.bf16.gmra.mxu0 %v524
  %v684 = vpop.f32.mrf.mxu0
  %v685 = vadd.f32 0.0, %v684
  %v686 = vpop.f32.mrf.mxu0
  %v687 = vpop.f32.mrf.mxu0
  %v688 = vadd.f32 0.0, %v687
  %v689 = vpop.f32.mrf.mxu0
  %690 = vmatprep.mubr.bf16.mxu0 0
  %691 = vmatmul.mubr.bf16.gmra.mxu0 %v527
  %v692 = vpop.f32.mrf.mxu0
  %v693 = vadd.f32 0.0, %v692
  %v694 = vpop.f32.mrf.mxu0
  %v695 = vpop.f32.mrf.mxu0
  %v696 = vadd.f32 0.0, %v695
  %v697 = vpop.f32.mrf.mxu0
  %698 = vmatprep.mubr.bf16.mxu0 0
  %699 = vmatmul.mubr.bf16.gmra.mxu0 %v530
  %v700 = vpop.f32.mrf.mxu0
  %v701 = vadd.f32 0.0, %v700
  %v702 = vpop.f32.mrf.mxu0
  %v703 = vpop.f32.mrf.mxu0
  %v704 = vadd.f32 0.0, %v703
  %v705 = vpop.f32.mrf.mxu0
  %706 = vmatprep.mubr.bf16.mxu0 0
  %707 = vmatmul.mubr.bf16.gmra.mxu0 %v533
  %v708 = vpop.f32.mrf.mxu0
  %v709 = vadd.f32 0.0, %v708
  %v710 = vpop.f32.mrf.mxu0
  %v711 = vpop.f32.mrf.mxu0
  %v712 = vadd.f32 0.0, %v711
  %v713 = vpop.f32.mrf.mxu0
  %714 = vmatprep.mubr.bf16.mxu0 0
  %715 = vmatmul.mubr.bf16.gmra.mxu0 %v536
  %v716 = vpop.f32.mrf.mxu0
  %v717 = vadd.f32 0.0, %v716
  %v718 = vpop.f32.mrf.mxu0
  %v719 = vpop.f32.mrf.mxu0
  %v720 = vadd.f32 0.0, %v719
  %v721 = vpop.f32.mrf.mxu0
  %722 = vmatprep.mubr.bf16.mxu0 0
  %723 = vmatmul.mubr.bf16.gmra.mxu0 %v539
  %v724 = vpop.f32.mrf.mxu0
  %v725 = vadd.f32 0.0, %v724
  %v726 = vpop.f32.mrf.mxu0
  %v727 = vpop.f32.mrf.mxu0
  %v728 = vadd.f32 0.0, %v727
  %v729 = vpop.f32.mrf.mxu0
  %730 = vmatprep.mubr.bf16.mxu0 0
  %731 = vmatmul.mubr.bf16.gmra.mxu0 %v542
  %v732 = vpop.f32.mrf.mxu0
  %v733 = vadd.f32 0.0, %v732
  %v734 = vpop.f32.mrf.mxu0
  %v735 = vpop.f32.mrf.mxu0
  %v736 = vadd.f32 0.0, %v735
  %v737 = vpop.f32.mrf.mxu0
  %738 = vmatprep.mubr.bf16.mxu0 0
  %739 = vmatmul.mubr.bf16.gmra.mxu0 %v545
  %v740 = vpop.f32.mrf.mxu0
  %v741 = vadd.f32 0.0, %v740
  %v742 = vpop.f32.mrf.mxu0
  %v743 = vpop.f32.mrf.mxu0
  %v744 = vadd.f32 0.0, %v743
  %v745 = vpop.f32.mrf.mxu0
  %746 = vmatprep.mubr.bf16.mxu0 0
  %747 = vmatmul.mubr.bf16.gmra.mxu0 %v548
  %v748 = vpop.f32.mrf.mxu0
  %v749 = vadd.f32 0.0, %v748
  %v750 = vpop.f32.mrf.mxu0
  %v751 = vpop.f32.mrf.mxu0
  %v752 = vadd.f32 0.0, %v751
  %v753 = vpop.f32.mrf.mxu0
  %754 = vmatprep.mubr.bf16.mxu0 0
  %755 = vmatmul.mubr.bf16.gmra.mxu0 %v551
  %v756 = vpop.f32.mrf.mxu0
  %v757 = vadd.f32 0.0, %v756
  %v758 = vpop.f32.mrf.mxu0
  %v759 = vpop.f32.mrf.mxu0
  %v760 = vadd.f32 0.0, %v759
  %v761 = vpop.f32.mrf.mxu0
  %762 = vmatprep.mubr.bf16.mxu0 0
  %763 = vmatmul.mubr.bf16.gmra.mxu0 %v554
  %v764 = vpop.f32.mrf.mxu0
  %v765 = vadd.f32 0.0, %v764
  %v766 = vpop.f32.mrf.mxu0
  %v767 = vpop.f32.mrf.mxu0
  %v768 = vadd.f32 0.0, %v767
  %v769 = vpop.f32.mrf.mxu0
  %770 = vmatprep.mubr.bf16.mxu0 0
  %771 = vmatmul.mubr.bf16.gmra.mxu0 %v557
  %v772 = vpop.f32.mrf.mxu0
  %v773 = vadd.f32 0.0, %v772
  %v774 = vpop.f32.mrf.mxu0
  %v775 = vpop.f32.mrf.mxu0
  %v776 = vadd.f32 0.0, %v775
  %v777 = vpop.f32.mrf.mxu0
  %778 = vmatprep.mubr.bf16.mxu0 0
  %779 = vmatmul.mubr.bf16.gmra.mxu0 %v560
  %v780 = vpop.f32.mrf.mxu0
  %v781 = vadd.f32 0.0, %v780
  %v782 = vpop.f32.mrf.mxu0
  %v783 = vpop.f32.mrf.mxu0
  %v784 = vadd.f32 0.0, %v783
  %v785 = vpop.f32.mrf.mxu0
  %786 = vmatprep.mubr.bf16.mxu0 0
  %787 = vmatmul.mubr.bf16.gmra.mxu0 %v563
  %v788 = vpop.f32.mrf.mxu0
  %v789 = vadd.f32 0.0, %v788
  %v790 = vpop.f32.mrf.mxu0
  %v791 = vpop.f32.mrf.mxu0
  %v792 = vadd.f32 0.0, %v791
  %v793 = vpop.f32.mrf.mxu0
  %794 = vmatprep.mubr.bf16.mxu0 0
  %795 = vmatmul.mubr.bf16.gmra.mxu0 %v566
  %v796 = vpop.f32.mrf.mxu0
  %v797 = vadd.f32 0.0, %v796
  %v798 = vpop.f32.mrf.mxu0
  %v799 = vpop.f32.mrf.mxu0
  %v800 = vadd.f32 0.0, %v799
  %v801 = vpop.f32.mrf.mxu0
  %802 = vmatprep.mubr.bf16.mxu0 0
  %803 = vmatmul.mubr.bf16.gmra.mxu0 %v569
  %v804 = vpop.f32.mrf.mxu0
  %v805 = vadd.f32 0.0, %v804
  %v806 = vpop.f32.mrf.mxu0
  %v807 = vpop.f32.mrf.mxu0
  %v808 = vadd.f32 0.0, %v807
  %v809 = vpop.f32.mrf.mxu0
  %810 = vmatprep.mubr.bf16.mxu0 0
  %811 = vmatmul.mubr.bf16.gmra.mxu0 %v572
  %v812 = vpop.f32.mrf.mxu0
  %v813 = vadd.f32 0.0, %v812
  %v814 = vpop.f32.mrf.mxu0
  %v815 = vpop.f32.mrf.mxu0
  %v816 = vadd.f32 0.0, %v815
  %v817 = vpop.f32.mrf.mxu0
  %818 = vmatprep.mubr.bf16.mxu0 0
  %819 = vmatmul.mubr.bf16.gmra.mxu0 %v575
  %v820 = vpop.f32.mrf.mxu0
  %v821 = vadd.f32 0.0, %v820
  %v822 = vpop.f32.mrf.mxu0
  %v823 = vpop.f32.mrf.mxu0
  %v824 = vadd.f32 0.0, %v823
  %v825 = vpop.f32.mrf.mxu0
  %826 = vmatprep.mubr.bf16.mxu0 0
  %827 = vmatmul.mubr.bf16.gmra.mxu0 %v578
  %v828 = vpop.f32.mrf.mxu0
  %v829 = vadd.f32 0.0, %v828
  %v830 = vpop.f32.mrf.mxu0
  %v831 = vpop.f32.mrf.mxu0
  %v832 = vadd.f32 0.0, %v831
  %v833 = vpop.f32.mrf.mxu0
  %834 = vmatprep.mubr.bf16.mxu0 0
  %835 = vmatmul.mubr.bf16.gmra.mxu0 %v581
  %v836 = vpop.f32.mrf.mxu0
  %v837 = vadd.f32 0.0, %v836
  %v838 = vpop.f32.mrf.mxu0
  %v839 = vpop.f32.mrf.mxu0
  %v840 = vadd.f32 0.0, %v839
  %v841 = vpop.f32.mrf.mxu0
  %842 = vmatprep.mubr.bf16.mxu0 0
  %843 = vmatmul.mubr.bf16.gmra.mxu0 %v584
  %v844 = vpop.f32.mrf.mxu0
  %v845 = vadd.f32 0.0, %v844
  %v846 = vpop.f32.mrf.mxu0
  %v847 = vpop.f32.mrf.mxu0
  %v848 = vadd.f32 0.0, %v847
  %v849 = vpop.f32.mrf.mxu0
  %850 = vmatprep.mubr.bf16.mxu0 0
  %851 = vmatmul.mubr.bf16.gmra.mxu0 %v587
  %v852 = vpop.f32.mrf.mxu0
  %v853 = vadd.f32 0.0, %v852
  %v854 = vpop.f32.mrf.mxu0
  %v855 = vpop.f32.mrf.mxu0
  %v856 = vadd.f32 0.0, %v855
  %v857 = vpop.f32.mrf.mxu0
  %858 = vmatprep.mubr.bf16.mxu0 0
  %859 = vmatmul.mubr.bf16.gmra.mxu0 %v590
  %v860 = vpop.f32.mrf.mxu0
  %v861 = vadd.f32 0.0, %v860
  %v862 = vpop.f32.mrf.mxu0
  %v863 = vpop.f32.mrf.mxu0
  %v864 = vadd.f32 0.0, %v863
  %v865 = vpop.f32.mrf.mxu0
  %866 = vmatprep.mubr.bf16.mxu0 0
  %867 = vmatmul.mubr.bf16.gmra.mxu0 %v593
  %v868 = vpop.f32.mrf.mxu0
  %v869 = vadd.f32 0.0, %v868
  %v870 = vpop.f32.mrf.mxu0
  %v871 = vpop.f32.mrf.mxu0
  %v872 = vadd.f32 0.0, %v871
  %v873 = vpop.f32.mrf.mxu0
  %874 = vmatprep.mubr.bf16.mxu0 0
  %875 = vmatmul.mubr.bf16.gmra.mxu0 %v596
  %v876 = vpop.f32.mrf.mxu0
  %v877 = vadd.f32 0.0, %v876
  %v878 = vpop.f32.mrf.mxu0
  %v879 = vpop.f32.mrf.mxu0
  %v880 = vadd.f32 0.0, %v879
  %v881 = vpop.f32.mrf.mxu0
  %882 = vmatprep.mubr.bf16.mxu0 0
  %883 = vmatmul.mubr.bf16.gmra.mxu0 %v599
  %v884 = vpop.f32.mrf.mxu0
  %v885 = vadd.f32 0.0, %v884
  %v886 = vpop.f32.mrf.mxu0
  %v887 = vpop.f32.mrf.mxu0
  %v888 = vadd.f32 0.0, %v887
  %v889 = vpop.f32.mrf.mxu0
  %890 = vmatprep.mubr.bf16.mxu0 0
  %891 = vmatmul.mubr.bf16.gmra.mxu0 %v602
  %v892 = vpop.f32.mrf.mxu0
  %v893 = vadd.f32 0.0, %v892
  %v894 = vpop.f32.mrf.mxu0
  %v895 = vpop.f32.mrf.mxu0
  %v896 = vadd.f32 0.0, %v895
  %v897 = vpop.f32.mrf.mxu0
  %898 = vmatprep.mubr.bf16.mxu0 0
  %899 = vmatmul.mubr.bf16.gmra.mxu0 %v605
  %v900 = vpop.f32.mrf.mxu0
  %v901 = vadd.f32 0.0, %v900
  %v902 = vpop.f32.mrf.mxu0
  %v903 = vpop.f32.mrf.mxu0
  %v904 = vadd.f32 0.0, %v903
  %v905 = vpop.f32.mrf.mxu0
  %906 = vmatprep.mubr.bf16.mxu0 0
  %907 = vmatmul.mubr.bf16.gmra.mxu0 %v608
  %v908 = vpop.f32.mrf.mxu0
  %v909 = vadd.f32 0.0, %v908
  %v910 = vpop.f32.mrf.mxu0
  %v911 = vpop.f32.mrf.mxu0
  %v912 = vadd.f32 0.0, %v911
  %v913 = vpop.f32.mrf.mxu0
  %914 = vmatprep.mubr.bf16.mxu0 0
  %915 = vmatmul.mubr.bf16.gmra.mxu0 %v611
  %v916 = vpop.f32.mrf.mxu0
  %v917 = vadd.f32 0.0, %v916
  %v918 = vpop.f32.mrf.mxu0
  %v919 = vpop.f32.mrf.mxu0
  %v920 = vadd.f32 0.0, %v919
  %v921 = vpop.f32.mrf.mxu0
  %922 = vmatprep.mubr.bf16.mxu0 0
  %923 = vmatmul.mubr.bf16.gmra.mxu0 %v614
  %v924 = vpop.f32.mrf.mxu0
  %v925 = vadd.f32 0.0, %v924
  %v926 = vpop.f32.mrf.mxu0
  %v927 = vpop.f32.mrf.mxu0
  %v928 = vadd.f32 0.0, %v927
  %v929 = vpop.f32.mrf.mxu0
  %930 = vmatprep.mubr.bf16.mxu0 0
  %931 = vmatmul.mubr.bf16.gmra.mxu0 %v617
  %v932 = vpop.f32.mrf.mxu0
  %v933 = vadd.f32 0.0, %v932
  %v934 = vpop.f32.mrf.mxu0
  %v935 = vpop.f32.mrf.mxu0
  %v936 = vadd.f32 0.0, %v935
  %v937 = vpop.f32.mrf.mxu0
  %938 = vmatprep.mubr.bf16.mxu0 0
  %939 = vmatmul.mubr.bf16.gmra.mxu0 %v620
  %v940 = vpop.f32.mrf.mxu0
  %v941 = vadd.f32 0.0, %v940
  %v942 = vpop.f32.mrf.mxu0
  %v943 = vpop.f32.mrf.mxu0
  %v944 = vadd.f32 0.0, %v943
  %v945 = vpop.f32.mrf.mxu0
  %946 = vdwg.mxu0
  %v947 = vpack.c.bf16 %v664, %v661
  %v948 = vpack.c.bf16 %v672, %v669
  %v949 = vpack.c.bf16 %v680, %v677
  %v950 = vpack.c.bf16 %v688, %v685
  %v951 = vpack.c.bf16 %v696, %v693
  %v952 = vpack.c.bf16 %v704, %v701
  %v953 = vpack.c.bf16 %v712, %v709
  %v954 = vpack.c.bf16 %v720, %v717
  %v955 = vpack.c.bf16 %v728, %v725
  %v956 = vpack.c.bf16 %v736, %v733
  %v957 = vpack.c.bf16 %v744, %v741
  %v958 = vpack.c.bf16 %v752, %v749
  %v959 = vpack.c.bf16 %v760, %v757
  %v960 = vpack.c.bf16 %v768, %v765
  %v961 = vpack.c.bf16 %v776, %v773
  %v962 = vpack.c.bf16 %v784, %v781
  %v963 = vpack.c.bf16 %v792, %v789
  %v964 = vpack.c.bf16 %v800, %v797
  %v965 = vpack.c.bf16 %v808, %v805
  %v966 = vpack.c.bf16 %v816, %v813
  %v967 = vpack.c.bf16 %v824, %v821
  %v968 = vpack.c.bf16 %v832, %v829
  %v969 = vpack.c.bf16 %v840, %v837
  %v970 = vpack.c.bf16 %v848, %v845
  %v971 = vpack.c.bf16 %v856, %v853
  %v972 = vpack.c.bf16 %v864, %v861
  %v973 = vpack.c.bf16 %v872, %v869
  %v974 = vpack.c.bf16 %v880, %v877
  %v975 = vpack.c.bf16 %v888, %v885
  %v976 = vpack.c.bf16 %v896, %v893
  %v977 = vpack.c.bf16 %v904, %v901
  %v978 = vpack.c.bf16 %v912, %v909
  %v979 = vpack.c.bf16 %v920, %v917
  %v980 = vpack.c.bf16 %v928, %v925
  %v981 = vpack.c.bf16 %v936, %v933
  %v982 = vpack.c.bf16 %v944, %v941
  %v983 = vld [vmem:[%s2] sm:$0xff]
  %v984 = vld [vmem:[%s2 + $0x8] sm:$0xff]
  %v985 = vld [vmem:[%s2 + $0x10] sm:$0xf]
  %v986 = vld [vmem:[%s2 + $0x14] sm:$0xff]
  %v987 = vld [vmem:[%s2 + $0x1c] sm:$0xff]
  %v988 = vld [vmem:[%s2 + $0x24] sm:$0xf]
  %v989 = vld [vmem:[%s2 + $0x28] sm:$0xff]
  %v990 = vld [vmem:[%s2 + $0x30] sm:$0xff]
  %v991 = vld [vmem:[%s2 + $0x38] sm:$0xf]
  %v992 = vld [vmem:[%s2 + $0x3c] sm:$0xff]
  %v993 = vld [vmem:[%s2 + $0x44] sm:$0xff]
  %v994 = vld [vmem:[%s2 + $0x4c] sm:$0xf]
  %v995 = vld [vmem:[%s2 + $0x50] sm:$0xff]
  %v996 = vld [vmem:[%s2 + $0x58] sm:$0xff]
  %v997 = vld [vmem:[%s2 + $0x60] sm:$0xf]
  %v998 = vld [vmem:[%s2 + $0x64] sm:$0xff]
  %v999 = vld [vmem:[%s2 + $0x6c] sm:$0xff]
  %v1000 = vld [vmem:[%s2 + $0x74] sm:$0xf]
  %v1001 = vld [vmem:[%s2 + $0x78] sm:$0x11]
  %v1002 = vld [vmem:[%s2 + $0x80] sm:$0x11]
  %v1003 = vld [vmem:[%s2 + $0x88] sm:$0x1]
  %v1025 = vunpack.c.l.b16 %v983
  %v1026 = vunpack.c.h.b16 %v983
  %v1027 = vunpack.c.l.b16 %v984
  %v1028 = vunpack.c.h.b16 %v984
  %v1029 = vunpack.c.l.b16 %v985
  %v1030 = vunpack.c.l.b16 %v986
  %v1031 = vunpack.c.h.b16 %v986
  %v1032 = vunpack.c.l.b16 %v987
  %v1033 = vunpack.c.h.b16 %v987
  %v1034 = vunpack.c.l.b16 %v988
  %v1035 = vunpack.c.l.b16 %v989
  %v1036 = vunpack.c.h.b16 %v989
  %v1037 = vunpack.c.l.b16 %v990
  %v1038 = vunpack.c.h.b16 %v990
  %v1039 = vunpack.c.l.b16 %v991
  %v1040 = vunpack.c.l.b16 %v992
  %v1041 = vunpack.c.h.b16 %v992
  %v1042 = vunpack.c.l.b16 %v993
  %v1043 = vunpack.c.h.b16 %v993
  %v1044 = vunpack.c.l.b16 %v994
  %v1045 = vunpack.c.l.b16 %v995
  %v1046 = vunpack.c.h.b16 %v995
  %v1047 = vunpack.c.l.b16 %v996
  %v1048 = vunpack.c.h.b16 %v996
  %v1049 = vunpack.c.l.b16 %v997
  %v1050 = vunpack.c.l.b16 %v998
  %v1051 = vunpack.c.h.b16 %v998
  %v1052 = vunpack.c.l.b16 %v999
  %v1053 = vunpack.c.h.b16 %v999
  %v1054 = vunpack.c.l.b16 %v1000
  %v1055 = vunpack.c.l.b16 %v1001
  %v1056 = vunpack.c.h.b16 %v1001
  %v1057 = vunpack.c.l.b16 %v1002
  %v1058 = vunpack.c.h.b16 %v1002
  %v1059 = vunpack.c.l.b16 %v1003
  %v1060 = vpack.c.b16 %v1030, %v1025
  %v1061 = vpack.c.b16 %v1031, %v1026
  %v1062 = vpack.c.b16 %v1032, %v1027
  %v1063 = vpack.c.b16 %v1033, %v1028
  %v1064 = vpack.c.b16 %v1034, %v1029
  %v1065 = vpack.c.b16 %v1040, %v1035
  %v1066 = vpack.c.b16 %v1041, %v1036
  %v1067 = vpack.c.b16 %v1042, %v1037
  %v1068 = vpack.c.b16 %v1043, %v1038
  %v1069 = vpack.c.b16 %v1044, %v1039
  %v1070 = vpack.c.b16 %v1050, %v1045
  %v1071 = vpack.c.b16 %v1051, %v1046
  %v1072 = vpack.c.b16 %v1052, %v1047
  %v1073 = vpack.c.b16 %v1053, %v1048
  %v1074 = vpack.c.b16 %v1054, %v1049
  %v1075 = vpack.c.b16 %v1055, %v1055
  %v1076 = vpack.c.b16 %v1056, %v1056
  %v1077 = vpack.c.b16 %v1057, %v1057
  %v1078 = vpack.c.b16 %v1058, %v1058
  %v1079 = vpack.c.b16 %v1059, %v1059
  %vm1095 = vcmask 408576
  %v1097 = vsel %vm1095, %v947, 0
  %v1100 = vsel %vm1095, %v948, 0
  %v1103 = vsel %vm1095, %v949, 0
  %v1106 = vsel %vm1095, %v950, 0
  %v1109 = vsel %vm1095, %v951, 0
  %v1112 = vsel %vm1095, %v952, 0
  %v1115 = vsel %vm1095, %v953, 0
  %v1118 = vsel %vm1095, %v954, 0
  %v1121 = vsel %vm1095, %v955, 0
  %v1124 = vsel %vm1095, %v956, 0
  %v1127 = vsel %vm1095, %v957, 0
  %v1130 = vsel %vm1095, %v958, 0
  %v1133 = vsel %vm1095, %v959, 0
  %v1136 = vsel %vm1095, %v960, 0
  %v1139 = vsel %vm1095, %v961, 0
  %v1142 = vsel %vm1095, %v962, 0
  %v1145 = vsel %vm1095, %v963, 0
  %v1148 = vsel %vm1095, %v964, 0
  %v1151 = vsel %vm1095, %v965, 0
  %v1154 = vsel %vm1095, %v966, 0
  %v1157 = vsel %vm1095, %v967, 0
  %v1160 = vsel %vm1095, %v968, 0
  %v1163 = vsel %vm1095, %v969, 0
  %v1166 = vsel %vm1095, %v970, 0
  %v1169 = vsel %vm1095, %v971, 0
  %v1172 = vsel %vm1095, %v972, 0
  %v1175 = vsel %vm1095, %v973, 0
  %v1178 = vsel %vm1095, %v974, 0
  %v1181 = vsel %vm1095, %v975, 0
  %v1184 = vsel %vm1095, %v976, 0
  %v1187 = vsel %vm1095, %v977, 0
  %v1190 = vsel %vm1095, %v978, 0
  %v1193 = vsel %vm1095, %v979, 0
  %v1196 = vsel %vm1095, %v980, 0
  %v1199 = vsel %vm1095, %v981, 0
  %v1202 = vsel %vm1095, %v982, 0
  %vm1204 = vcmask 1040384
  %v1206 = vsel %vm1204, %v1075, 0
  %v1209 = vsel %vm1204, %v1076, 0
  %v1212 = vsel %vm1204, %v1077, 0
  %v1215 = vsel %vm1204, %v1078, 0
  %v1218 = vsel %vm1204, %v1079, 0
  %1220 = vmatprep.subr.bf16.mxu0 0
  %1221 = vmatpush1.bf16.msra.mxu0 0
  %1222 = vmatprep.subr.bf16.mxu0 0
  %1223 = vmatpush1.bf16.msra.mxu0 0
  %1224 = vmatprep.subr.bf16.mxu0 0
  %1225 = vmatpush1.bf16.msra.mxu0 0
  %1226 = vmatprep.subr.bf16.mxu0 0
  %1227 = vmatpush1.bf16.msra.mxu0 0
  %1228 = vmatprep.subr.bf16.mxu0 %v1209
  %1229 = vmatpush1.bf16.msra.mxu0 %v1206
  %1230 = vmatprep.subr.bf16.mxu0 %v1071
  %1231 = vmatpush1.bf16.msra.mxu0 %v1070
  %1232 = vmatprep.subr.bf16.mxu0 %v1066
  %1233 = vmatpush1.bf16.msra.mxu0 %v1065
  %1234 = vmatprep.subr.bf16.mxu0 %v1061
  %1235 = vmatpush1.bf16.msra.mxu0 %v1060
  %1236 = vmatprep.subr.bf16.mxu0 0
  %1237 = vmatpush2.bf16.msra.mxu0 0
  %1238 = vmatprep.subr.bf16.mxu0 0
  %1239 = vmatpush2.bf16.msra.mxu0 0
  %1240 = vmatprep.subr.bf16.mxu0 0
  %1241 = vmatpush2.bf16.msra.mxu0 0
  %1242 = vmatprep.subr.bf16.mxu0 0
  %1243 = vmatpush2.bf16.msra.mxu0 0
  %1244 = vmatprep.subr.bf16.mxu0 0
  %1245 = vmatpush2.bf16.msra.mxu0 0
  %1246 = vmatprep.subr.bf16.mxu0 0
  %1247 = vmatpush2.bf16.msra.mxu0 0
  %1248 = vmatprep.subr.bf16.mxu0 0
  %1249 = vmatpush2.bf16.msra.mxu0 0
  %1250 = vmatprep.subr.bf16.mxu0 0
  %1251 = vmatpush2.bf16.msra.mxu0 0
  %1252 = vmatprep.mubr.bf16.mxu0 0
  %1253 = vmatmul.mubr.bf16.gmra.mxu0 %v1097
  %v1254 = vpop.f32.mrf.mxu0
  %v1255 = vadd.f32 0.0, %v1254
  %v1256 = vpop.f32.mrf.mxu0
  %v1257 = vpop.f32.mrf.mxu0
  %v1258 = vadd.f32 0.0, %v1257
  %v1259 = vpop.f32.mrf.mxu0
  %1260 = vmatprep.mubr.bf16.mxu0 0
  %1261 = vmatmul.mubr.bf16.gmra.mxu0 %v1100
  %v1262 = vpop.f32.mrf.mxu0
  %v1263 = vadd.f32 0.0, %v1262
  %v1264 = vpop.f32.mrf.mxu0
  %v1265 = vpop.f32.mrf.mxu0
  %v1266 = vadd.f32 0.0, %v1265
  %v1267 = vpop.f32.mrf.mxu0
  %1268 = vmatprep.mubr.bf16.mxu0 0
  %1269 = vmatmul.mubr.bf16.gmra.mxu0 %v1103
  %v1270 = vpop.f32.mrf.mxu0
  %v1271 = vadd.f32 0.0, %v1270
  %v1272 = vpop.f32.mrf.mxu0
  %v1273 = vadd.f32 0.0, %v1272
  %v1274 = vpop.f32.mrf.mxu0
  %v1275 = vadd.f32 0.0, %v1274
  %v1276 = vpop.f32.mrf.mxu0
  %v1277 = vadd.f32 0.0, %v1276
  %1278 = vmatprep.mubr.bf16.mxu0 0
  %1279 = vmatmul.mubr.bf16.gmra.mxu0 %v1106
  %v1280 = vpop.f32.mrf.mxu0
  %v1281 = vadd.f32 0.0, %v1280
  %v1282 = vpop.f32.mrf.mxu0
  %v1283 = vadd.f32 0.0, %v1282
  %v1284 = vpop.f32.mrf.mxu0
  %v1285 = vadd.f32 0.0, %v1284
  %v1286 = vpop.f32.mrf.mxu0
  %v1287 = vadd.f32 0.0, %v1286
  %1288 = vmatprep.mubr.bf16.mxu0 0
  %1289 = vmatmul.mubr.bf16.gmra.mxu0 %v1109
  %v1290 = vpop.f32.mrf.mxu0
  %v1291 = vadd.f32 0.0, %v1290
  %v1292 = vpop.f32.mrf.mxu0
  %v1293 = vadd.f32 0.0, %v1292
  %v1294 = vpop.f32.mrf.mxu0
  %v1295 = vadd.f32 0.0, %v1294
  %v1296 = vpop.f32.mrf.mxu0
  %v1297 = vadd.f32 0.0, %v1296
  %1298 = vmatprep.mubr.bf16.mxu0 0
  %1299 = vmatmul.mubr.bf16.gmra.mxu0 %v1112
  %v1300 = vpop.f32.mrf.mxu0
  %v1301 = vadd.f32 0.0, %v1300
  %v1302 = vpop.f32.mrf.mxu0
  %v1303 = vadd.f32 0.0, %v1302
  %v1304 = vpop.f32.mrf.mxu0
  %v1305 = vadd.f32 0.0, %v1304
  %v1306 = vpop.f32.mrf.mxu0
  %v1307 = vadd.f32 0.0, %v1306
  %1308 = vmatprep.mubr.bf16.mxu0 0
  %1309 = vmatmul.mubr.bf16.gmra.mxu0 %v1115
  %v1310 = vpop.f32.mrf.mxu0
  %v1311 = vadd.f32 0.0, %v1310
  %v1312 = vpop.f32.mrf.mxu0
  %v1313 = vadd.f32 0.0, %v1312
  %v1314 = vpop.f32.mrf.mxu0
  %v1315 = vadd.f32 0.0, %v1314
  %v1316 = vpop.f32.mrf.mxu0
  %v1317 = vadd.f32 0.0, %v1316
  %1318 = vmatprep.mubr.bf16.mxu0 0
  %1319 = vmatmul.mubr.bf16.gmra.mxu0 %v1118
  %v1320 = vpop.f32.mrf.mxu0
  %v1321 = vadd.f32 0.0, %v1320
  %v1322 = vpop.f32.mrf.mxu0
  %v1323 = vadd.f32 0.0, %v1322
  %v1324 = vpop.f32.mrf.mxu0
  %v1325 = vadd.f32 0.0, %v1324
  %v1326 = vpop.f32.mrf.mxu0
  %v1327 = vadd.f32 0.0, %v1326
  %1328 = vmatprep.mubr.bf16.mxu0 0
  %1329 = vmatmul.mubr.bf16.gmra.mxu0 %v1121
  %v1330 = vpop.f32.mrf.mxu0
  %v1331 = vadd.f32 0.0, %v1330
  %v1332 = vpop.f32.mrf.mxu0
  %v1333 = vadd.f32 0.0, %v1332
  %v1334 = vpop.f32.mrf.mxu0
  %v1335 = vadd.f32 0.0, %v1334
  %v1336 = vpop.f32.mrf.mxu0
  %v1337 = vadd.f32 0.0, %v1336
  %1338 = vmatprep.mubr.bf16.mxu0 0
  %1339 = vmatmul.mubr.bf16.gmra.mxu0 %v1124
  %v1340 = vpop.f32.mrf.mxu0
  %v1341 = vadd.f32 0.0, %v1340
  %v1342 = vpop.f32.mrf.mxu0
  %v1343 = vadd.f32 0.0, %v1342
  %v1344 = vpop.f32.mrf.mxu0
  %v1345 = vadd.f32 0.0, %v1344
  %v1346 = vpop.f32.mrf.mxu0
  %v1347 = vadd.f32 0.0, %v1346
  %1348 = vmatprep.mubr.bf16.mxu0 0
  %1349 = vmatmul.mubr.bf16.gmra.mxu0 %v1127
  %v1350 = vpop.f32.mrf.mxu0
  %v1351 = vadd.f32 0.0, %v1350
  %v1352 = vpop.f32.mrf.mxu0
  %v1353 = vadd.f32 0.0, %v1352
  %v1354 = vpop.f32.mrf.mxu0
  %v1355 = vadd.f32 0.0, %v1354
  %v1356 = vpop.f32.mrf.mxu0
  %v1357 = vadd.f32 0.0, %v1356
  %1358 = vmatprep.mubr.bf16.mxu0 0
  %1359 = vmatmul.mubr.bf16.gmra.mxu0 %v1130
  %v1360 = vpop.f32.mrf.mxu0
  %v1361 = vadd.f32 0.0, %v1360
  %v1362 = vpop.f32.mrf.mxu0
  %v1363 = vadd.f32 0.0, %v1362
  %v1364 = vpop.f32.mrf.mxu0
  %v1365 = vadd.f32 0.0, %v1364
  %v1366 = vpop.f32.mrf.mxu0
  %v1367 = vadd.f32 0.0, %v1366
  %1368 = vmatprep.mubr.bf16.mxu0 0
  %1369 = vmatmul.mubr.bf16.gmra.mxu0 %v1133
  %v1370 = vpop.f32.mrf.mxu0
  %v1371 = vadd.f32 0.0, %v1370
  %v1372 = vpop.f32.mrf.mxu0
  %v1373 = vadd.f32 0.0, %v1372
  %v1374 = vpop.f32.mrf.mxu0
  %v1375 = vadd.f32 0.0, %v1374
  %v1376 = vpop.f32.mrf.mxu0
  %v1377 = vadd.f32 0.0, %v1376
  %1378 = vmatprep.mubr.bf16.mxu0 0
  %1379 = vmatmul.mubr.bf16.gmra.mxu0 %v1136
  %v1380 = vpop.f32.mrf.mxu0
  %v1381 = vadd.f32 0.0, %v1380
  %v1382 = vpop.f32.mrf.mxu0
  %v1383 = vadd.f32 0.0, %v1382
  %v1384 = vpop.f32.mrf.mxu0
  %v1385 = vadd.f32 0.0, %v1384
  %v1386 = vpop.f32.mrf.mxu0
  %v1387 = vadd.f32 0.0, %v1386
  %1388 = vmatprep.mubr.bf16.mxu0 0
  %1389 = vmatmul.mubr.bf16.gmra.mxu0 %v1139
  %v1390 = vpop.f32.mrf.mxu0
  %v1391 = vadd.f32 0.0, %v1390
  %v1392 = vpop.f32.mrf.mxu0
  %v1393 = vadd.f32 0.0, %v1392
  %v1394 = vpop.f32.mrf.mxu0
  %v1395 = vadd.f32 0.0, %v1394
  %v1396 = vpop.f32.mrf.mxu0
  %v1397 = vadd.f32 0.0, %v1396
  %1398 = vmatprep.mubr.bf16.mxu0 0
  %1399 = vmatmul.mubr.bf16.gmra.mxu0 %v1142
  %v1400 = vpop.f32.mrf.mxu0
  %v1401 = vadd.f32 0.0, %v1400
  %v1402 = vpop.f32.mrf.mxu0
  %v1403 = vadd.f32 0.0, %v1402
  %v1404 = vpop.f32.mrf.mxu0
  %v1405 = vadd.f32 0.0, %v1404
  %v1406 = vpop.f32.mrf.mxu0
  %v1407 = vadd.f32 0.0, %v1406
  %1408 = vmatprep.mubr.bf16.mxu0 0
  %1409 = vmatmul.mubr.bf16.gmra.mxu0 %v1145
  %v1410 = vpop.f32.mrf.mxu0
  %v1411 = vadd.f32 0.0, %v1410
  %v1412 = vpop.f32.mrf.mxu0
  %v1413 = vadd.f32 0.0, %v1412
  %v1414 = vpop.f32.mrf.mxu0
  %v1415 = vadd.f32 0.0, %v1414
  %v1416 = vpop.f32.mrf.mxu0
  %v1417 = vadd.f32 0.0, %v1416
  %1418 = vmatprep.mubr.bf16.mxu0 0
  %1419 = vmatmul.mubr.bf16.gmra.mxu0 %v1148
  %v1420 = vpop.f32.mrf.mxu0
  %v1421 = vadd.f32 0.0, %v1420
  %v1422 = vpop.f32.mrf.mxu0
  %v1423 = vadd.f32 0.0, %v1422
  %v1424 = vpop.f32.mrf.mxu0
  %v1425 = vadd.f32 0.0, %v1424
  %v1426 = vpop.f32.mrf.mxu0
  %v1427 = vadd.f32 0.0, %v1426
  %1428 = vmatprep.mubr.bf16.mxu0 0
  %1429 = vmatmul.mubr.bf16.gmra.mxu0 %v1151
  %v1430 = vpop.f32.mrf.mxu0
  %v1431 = vadd.f32 0.0, %v1430
  %v1432 = vpop.f32.mrf.mxu0
  %v1433 = vadd.f32 0.0, %v1432
  %v1434 = vpop.f32.mrf.mxu0
  %v1435 = vadd.f32 0.0, %v1434
  %v1436 = vpop.f32.mrf.mxu0
  %v1437 = vadd.f32 0.0, %v1436
  %1438 = vmatprep.mubr.bf16.mxu0 0
  %1439 = vmatmul.mubr.bf16.gmra.mxu0 %v1154
  %v1440 = vpop.f32.mrf.mxu0
  %v1441 = vadd.f32 0.0, %v1440
  %v1442 = vpop.f32.mrf.mxu0
  %v1443 = vadd.f32 0.0, %v1442
  %v1444 = vpop.f32.mrf.mxu0
  %v1445 = vadd.f32 0.0, %v1444
  %v1446 = vpop.f32.mrf.mxu0
  %v1447 = vadd.f32 0.0, %v1446
  %1448 = vmatprep.mubr.bf16.mxu0 0
  %1449 = vmatmul.mubr.bf16.gmra.mxu0 %v1157
  %v1450 = vpop.f32.mrf.mxu0
  %v1451 = vadd.f32 0.0, %v1450
  %v1452 = vpop.f32.mrf.mxu0
  %v1453 = vadd.f32 0.0, %v1452
  %v1454 = vpop.f32.mrf.mxu0
  %v1455 = vadd.f32 0.0, %v1454
  %v1456 = vpop.f32.mrf.mxu0
  %v1457 = vadd.f32 0.0, %v1456
  %1458 = vmatprep.mubr.bf16.mxu0 0
  %1459 = vmatmul.mubr.bf16.gmra.mxu0 %v1160
  %v1460 = vpop.f32.mrf.mxu0
  %v1461 = vadd.f32 0.0, %v1460
  %v1462 = vpop.f32.mrf.mxu0
  %v1463 = vadd.f32 0.0, %v1462
  %v1464 = vpop.f32.mrf.mxu0
  %v1465 = vadd.f32 0.0, %v1464
  %v1466 = vpop.f32.mrf.mxu0
  %v1467 = vadd.f32 0.0, %v1466
  %1468 = vmatprep.mubr.bf16.mxu0 0
  %1469 = vmatmul.mubr.bf16.gmra.mxu0 %v1163
  %v1470 = vpop.f32.mrf.mxu0
  %v1471 = vadd.f32 0.0, %v1470
  %v1472 = vpop.f32.mrf.mxu0
  %v1473 = vadd.f32 0.0, %v1472
  %v1474 = vpop.f32.mrf.mxu0
  %v1475 = vadd.f32 0.0, %v1474
  %v1476 = vpop.f32.mrf.mxu0
  %v1477 = vadd.f32 0.0, %v1476
  %1478 = vmatprep.mubr.bf16.mxu0 0
  %1479 = vmatmul.mubr.bf16.gmra.mxu0 %v1166
  %v1480 = vpop.f32.mrf.mxu0
  %v1481 = vadd.f32 0.0, %v1480
  %v1482 = vpop.f32.mrf.mxu0
  %v1483 = vadd.f32 0.0, %v1482
  %v1484 = vpop.f32.mrf.mxu0
  %v1485 = vadd.f32 0.0, %v1484
  %v1486 = vpop.f32.mrf.mxu0
  %v1487 = vadd.f32 0.0, %v1486
  %1488 = vmatprep.mubr.bf16.mxu0 0
  %1489 = vmatmul.mubr.bf16.gmra.mxu0 %v1169
  %v1490 = vpop.f32.mrf.mxu0
  %v1491 = vadd.f32 0.0, %v1490
  %v1492 = vpop.f32.mrf.mxu0
  %v1493 = vadd.f32 0.0, %v1492
  %v1494 = vpop.f32.mrf.mxu0
  %v1495 = vadd.f32 0.0, %v1494
  %v1496 = vpop.f32.mrf.mxu0
  %v1497 = vadd.f32 0.0, %v1496
  %1498 = vmatprep.mubr.bf16.mxu0 0
  %1499 = vmatmul.mubr.bf16.gmra.mxu0 %v1172
  %v1500 = vpop.f32.mrf.mxu0
  %v1501 = vadd.f32 0.0, %v1500
  %v1502 = vpop.f32.mrf.mxu0
  %v1503 = vadd.f32 0.0, %v1502
  %v1504 = vpop.f32.mrf.mxu0
  %v1505 = vadd.f32 0.0, %v1504
  %v1506 = vpop.f32.mrf.mxu0
  %v1507 = vadd.f32 0.0, %v1506
  %1508 = vmatprep.mubr.bf16.mxu0 0
  %1509 = vmatmul.mubr.bf16.gmra.mxu0 %v1175
  %v1510 = vpop.f32.mrf.mxu0
  %v1511 = vadd.f32 0.0, %v1510
  %v1512 = vpop.f32.mrf.mxu0
  %v1513 = vadd.f32 0.0, %v1512
  %v1514 = vpop.f32.mrf.mxu0
  %v1515 = vadd.f32 0.0, %v1514
  %v1516 = vpop.f32.mrf.mxu0
  %v1517 = vadd.f32 0.0, %v1516
  %1518 = vmatprep.mubr.bf16.mxu0 0
  %1519 = vmatmul.mubr.bf16.gmra.mxu0 %v1178
  %v1520 = vpop.f32.mrf.mxu0
  %v1521 = vadd.f32 0.0, %v1520
  %v1522 = vpop.f32.mrf.mxu0
  %v1523 = vadd.f32 0.0, %v1522
  %v1524 = vpop.f32.mrf.mxu0
  %v1525 = vadd.f32 0.0, %v1524
  %v1526 = vpop.f32.mrf.mxu0
  %v1527 = vadd.f32 0.0, %v1526
  %1528 = vmatprep.mubr.bf16.mxu0 0
  %1529 = vmatmul.mubr.bf16.gmra.mxu0 %v1181
  %v1530 = vpop.f32.mrf.mxu0
  %v1531 = vpop.f32.mrf.mxu0
  %v1532 = vadd.f32 0.0, %v1531
  %v1533 = vpop.f32.mrf.mxu0
  %v1534 = vpop.f32.mrf.mxu0
  %v1535 = vadd.f32 0.0, %v1534
  %1536 = vmatprep.mubr.bf16.mxu0 0
  %1537 = vmatmul.mubr.bf16.gmra.mxu0 %v1184
  %v1538 = vpop.f32.mrf.mxu0
  %v1539 = vpop.f32.mrf.mxu0
  %v1540 = vadd.f32 0.0, %v1539
  %v1541 = vpop.f32.mrf.mxu0
  %v1542 = vpop.f32.mrf.mxu0
  %v1543 = vadd.f32 0.0, %v1542
  %1544 = vmatprep.mubr.bf16.mxu0 0
  %1545 = vmatmul.mubr.bf16.gmra.mxu0 %v1187
  %v1546 = vpop.f32.mrf.mxu0
  %v1547 = vpop.f32.mrf.mxu0
  %v1548 = vpop.f32.mrf.mxu0
  %v1549 = vpop.f32.mrf.mxu0
  %1550 = vmatprep.mubr.bf16.mxu0 0
  %1551 = vmatmul.mubr.bf16.gmra.mxu0 %v1190
  %v1552 = vpop.f32.mrf.mxu0
  %v1553 = vpop.f32.mrf.mxu0
  %v1554 = vpop.f32.mrf.mxu0
  %v1555 = vpop.f32.mrf.mxu0
  %1556 = vmatprep.mubr.bf16.mxu0 0
  %1557 = vmatmul.mubr.bf16.gmra.mxu0 %v1193
  %v1558 = vpop.f32.mrf.mxu0
  %v1559 = vpop.f32.mrf.mxu0
  %v1560 = vpop.f32.mrf.mxu0
  %v1561 = vpop.f32.mrf.mxu0
  %1562 = vmatprep.mubr.bf16.mxu0 0
  %1563 = vmatmul.mubr.bf16.gmra.mxu0 %v1196
  %v1564 = vpop.f32.mrf.mxu0
  %v1565 = vpop.f32.mrf.mxu0
  %v1566 = vpop.f32.mrf.mxu0
  %v1567 = vpop.f32.mrf.mxu0
  %1568 = vmatprep.mubr.bf16.mxu0 0
  %1569 = vmatmul.mubr.bf16.gmra.mxu0 %v1199
  %v1570 = vpop.f32.mrf.mxu0
  %v1571 = vpop.f32.mrf.mxu0
  %v1572 = vpop.f32.mrf.mxu0
  %v1573 = vpop.f32.mrf.mxu0
  %1574 = vmatprep.mubr.bf16.mxu0 0
  %1575 = vmatmul.mubr.bf16.gmra.mxu0 %v1202
  %v1576 = vpop.f32.mrf.mxu0
  %v1577 = vpop.f32.mrf.mxu0
  %v1578 = vpop.f32.mrf.mxu0
  %v1579 = vpop.f32.mrf.mxu0
  %1580 = vdwg.mxu0
  %1581 = vmatprep.subr.bf16.mxu0 0
  %1582 = vmatpush1.bf16.msra.mxu0 0
  %1583 = vmatprep.subr.bf16.mxu0 0
  %1584 = vmatpush1.bf16.msra.mxu0 0
  %1585 = vmatprep.subr.bf16.mxu0 0
  %1586 = vmatpush1.bf16.msra.mxu0 0
  %1587 = vmatprep.subr.bf16.mxu0 0
  %1588 = vmatpush1.bf16.msra.mxu0 0
  %1589 = vmatprep.subr.bf16.mxu0 %v1215
  %1590 = vmatpush1.bf16.msra.mxu0 %v1212
  %1591 = vmatprep.subr.bf16.mxu0 %v1073
  %1592 = vmatpush1.bf16.msra.mxu0 %v1072
  %1593 = vmatprep.subr.bf16.mxu0 %v1068
  %1594 = vmatpush1.bf16.msra.mxu0 %v1067
  %1595 = vmatprep.subr.bf16.mxu0 %v1063
  %1596 = vmatpush1.bf16.msra.mxu0 %v1062
  %1597 = vmatprep.subr.bf16.mxu0 0
  %1598 = vmatpush2.bf16.msra.mxu0 0
  %1599 = vmatprep.subr.bf16.mxu0 0
  %1600 = vmatpush2.bf16.msra.mxu0 0
  %1601 = vmatprep.subr.bf16.mxu0 0
  %1602 = vmatpush2.bf16.msra.mxu0 0
  %1603 = vmatprep.subr.bf16.mxu0 0
  %1604 = vmatpush2.bf16.msra.mxu0 0
  %1605 = vmatprep.subr.bf16.mxu0 0
  %1606 = vmatpush2.bf16.msra.mxu0 0
  %1607 = vmatprep.subr.bf16.mxu0 0
  %1608 = vmatpush2.bf16.msra.mxu0 0
  %1609 = vmatprep.subr.bf16.mxu0 0
  %1610 = vmatpush2.bf16.msra.mxu0 0
  %1611 = vmatprep.subr.bf16.mxu0 0
  %1612 = vmatpush2.bf16.msra.mxu0 0
  %1613 = vmatprep.mubr.bf16.mxu0 0
  %1614 = vmatmul.mubr.bf16.gmra.mxu0 %v1097
  %v1615 = vpop.f32.mrf.mxu0
  %v1616 = vpop.f32.mrf.mxu0
  %v1617 = vpop.f32.mrf.mxu0
  %v1618 = vpop.f32.mrf.mxu0
  %1619 = vmatprep.mubr.bf16.mxu0 0
  %1620 = vmatmul.mubr.bf16.gmra.mxu0 %v1100
  %v1621 = vpop.f32.mrf.mxu0
  %v1622 = vpop.f32.mrf.mxu0
  %v1623 = vpop.f32.mrf.mxu0
  %v1624 = vpop.f32.mrf.mxu0
  %1625 = vmatprep.mubr.bf16.mxu0 0
  %1626 = vmatmul.mubr.bf16.gmra.mxu0 %v1103
  %v1627 = vpop.f32.mrf.mxu0
  %v1628 = vpop.f32.mrf.mxu0
  %v1629 = vpop.f32.mrf.mxu0
  %v1630 = vpop.f32.mrf.mxu0
  %1631 = vmatprep.mubr.bf16.mxu0 0
  %1632 = vmatmul.mubr.bf16.gmra.mxu0 %v1106
  %v1633 = vpop.f32.mrf.mxu0
  %v1634 = vpop.f32.mrf.mxu0
  %v1635 = vpop.f32.mrf.mxu0
  %v1636 = vpop.f32.mrf.mxu0
  %1637 = vmatprep.mubr.bf16.mxu0 0
  %1638 = vmatmul.mubr.bf16.gmra.mxu0 %v1109
  %v1639 = vpop.f32.mrf.mxu0
  %v1640 = vadd.f32 0.0, %v1639
  %v1641 = vpop.f32.mrf.mxu0
  %v1642 = vpop.f32.mrf.mxu0
  %v1643 = vadd.f32 0.0, %v1642
  %v1644 = vpop.f32.mrf.mxu0
  %1645 = vmatprep.mubr.bf16.mxu0 0
  %1646 = vmatmul.mubr.bf16.gmra.mxu0 %v1112
  %v1647 = vpop.f32.mrf.mxu0
  %v1648 = vadd.f32 0.0, %v1647
  %v1649 = vpop.f32.mrf.mxu0
  %v1650 = vpop.f32.mrf.mxu0
  %v1651 = vadd.f32 0.0, %v1650
  %v1652 = vpop.f32.mrf.mxu0
  %1653 = vmatprep.mubr.bf16.mxu0 0
  %1654 = vmatmul.mubr.bf16.gmra.mxu0 %v1115
  %v1655 = vpop.f32.mrf.mxu0
  %v1656 = vadd.f32 0.0, %v1655
  %v1657 = vpop.f32.mrf.mxu0
  %v1658 = vadd.f32 0.0, %v1657
  %v1659 = vpop.f32.mrf.mxu0
  %v1660 = vadd.f32 0.0, %v1659
  %v1661 = vpop.f32.mrf.mxu0
  %v1662 = vadd.f32 0.0, %v1661
  %1663 = vmatprep.mubr.bf16.mxu0 0
  %1664 = vmatmul.mubr.bf16.gmra.mxu0 %v1118
  %v1665 = vpop.f32.mrf.mxu0
  %v1666 = vadd.f32 0.0, %v1665
  %v1667 = vpop.f32.mrf.mxu0
  %v1668 = vadd.f32 0.0, %v1667
  %v1669 = vpop.f32.mrf.mxu0
  %v1670 = vadd.f32 0.0, %v1669
  %v1671 = vpop.f32.mrf.mxu0
  %v1672 = vadd.f32 0.0, %v1671
  %1673 = vmatprep.mubr.bf16.mxu0 0
  %1674 = vmatmul.mubr.bf16.gmra.mxu0 %v1121
  %v1675 = vpop.f32.mrf.mxu0
  %v1676 = vadd.f32 0.0, %v1675
  %v1677 = vpop.f32.mrf.mxu0
  %v1678 = vadd.f32 0.0, %v1677
  %v1679 = vpop.f32.mrf.mxu0
  %v1680 = vadd.f32 0.0, %v1679
  %v1681 = vpop.f32.mrf.mxu0
  %v1682 = vadd.f32 0.0, %v1681
  %1683 = vmatprep.mubr.bf16.mxu0 0
  %1684 = vmatmul.mubr.bf16.gmra.mxu0 %v1124
  %v1685 = vpop.f32.mrf.mxu0
  %v1686 = vadd.f32 0.0, %v1685
  %v1687 = vpop.f32.mrf.mxu0
  %v1688 = vadd.f32 0.0, %v1687
  %v1689 = vpop.f32.mrf.mxu0
  %v1690 = vadd.f32 0.0, %v1689
  %v1691 = vpop.f32.mrf.mxu0
  %v1692 = vadd.f32 0.0, %v1691
  %1693 = vmatprep.mubr.bf16.mxu0 0
  %1694 = vmatmul.mubr.bf16.gmra.mxu0 %v1127
  %v1695 = vpop.f32.mrf.mxu0
  %v1696 = vadd.f32 0.0, %v1695
  %v1697 = vpop.f32.mrf.mxu0
  %v1698 = vadd.f32 0.0, %v1697
  %v1699 = vpop.f32.mrf.mxu0
  %v1700 = vadd.f32 0.0, %v1699
  %v1701 = vpop.f32.mrf.mxu0
  %v1702 = vadd.f32 0.0, %v1701
  %1703 = vmatprep.mubr.bf16.mxu0 0
  %1704 = vmatmul.mubr.bf16.gmra.mxu0 %v1130
  %v1705 = vpop.f32.mrf.mxu0
  %v1706 = vadd.f32 0.0, %v1705
  %v1707 = vpop.f32.mrf.mxu0
  %v1708 = vadd.f32 0.0, %v1707
  %v1709 = vpop.f32.mrf.mxu0
  %v1710 = vadd.f32 0.0, %v1709
  %v1711 = vpop.f32.mrf.mxu0
  %v1712 = vadd.f32 0.0, %v1711
  %1713 = vmatprep.mubr.bf16.mxu0 0
  %1714 = vmatmul.mubr.bf16.gmra.mxu0 %v1133
  %v1715 = vpop.f32.mrf.mxu0
  %v1716 = vadd.f32 0.0, %v1715
  %v1717 = vpop.f32.mrf.mxu0
  %v1718 = vadd.f32 0.0, %v1717
  %v1719 = vpop.f32.mrf.mxu0
  %v1720 = vadd.f32 0.0, %v1719
  %v1721 = vpop.f32.mrf.mxu0
  %v1722 = vadd.f32 0.0, %v1721
  %1723 = vmatprep.mubr.bf16.mxu0 0
  %1724 = vmatmul.mubr.bf16.gmra.mxu0 %v1136
  %v1725 = vpop.f32.mrf.mxu0
  %v1726 = vadd.f32 0.0, %v1725
  %v1727 = vpop.f32.mrf.mxu0
  %v1728 = vadd.f32 0.0, %v1727
  %v1729 = vpop.f32.mrf.mxu0
  %v1730 = vadd.f32 0.0, %v1729
  %v1731 = vpop.f32.mrf.mxu0
  %v1732 = vadd.f32 0.0, %v1731
  %1733 = vmatprep.mubr.bf16.mxu0 0
  %1734 = vmatmul.mubr.bf16.gmra.mxu0 %v1139
  %v1735 = vpop.f32.mrf.mxu0
  %v1736 = vadd.f32 0.0, %v1735
  %v1737 = vpop.f32.mrf.mxu0
  %v1738 = vadd.f32 0.0, %v1737
  %v1739 = vpop.f32.mrf.mxu0
  %v1740 = vadd.f32 0.0, %v1739
  %v1741 = vpop.f32.mrf.mxu0
  %v1742 = vadd.f32 0.0, %v1741
  %1743 = vmatprep.mubr.bf16.mxu0 0
  %1744 = vmatmul.mubr.bf16.gmra.mxu0 %v1142
  %v1745 = vpop.f32.mrf.mxu0
  %v1746 = vadd.f32 0.0, %v1745
  %v1747 = vpop.f32.mrf.mxu0
  %v1748 = vadd.f32 0.0, %v1747
  %v1749 = vpop.f32.mrf.mxu0
  %v1750 = vadd.f32 0.0, %v1749
  %v1751 = vpop.f32.mrf.mxu0
  %v1752 = vadd.f32 0.0, %v1751
  %1753 = vmatprep.mubr.bf16.mxu0 0
  %1754 = vmatmul.mubr.bf16.gmra.mxu0 %v1145
  %v1755 = vpop.f32.mrf.mxu0
  %v1756 = vadd.f32 0.0, %v1755
  %v1757 = vpop.f32.mrf.mxu0
  %v1758 = vadd.f32 0.0, %v1757
  %v1759 = vpop.f32.mrf.mxu0
  %v1760 = vadd.f32 0.0, %v1759
  %v1761 = vpop.f32.mrf.mxu0
  %v1762 = vadd.f32 0.0, %v1761
  %1763 = vmatprep.mubr.bf16.mxu0 0
  %1764 = vmatmul.mubr.bf16.gmra.mxu0 %v1148
  %v1765 = vpop.f32.mrf.mxu0
  %v1766 = vadd.f32 0.0, %v1765
  %v1767 = vpop.f32.mrf.mxu0
  %v1768 = vadd.f32 0.0, %v1767
  %v1769 = vpop.f32.mrf.mxu0
  %v1770 = vadd.f32 0.0, %v1769
  %v1771 = vpop.f32.mrf.mxu0
  %v1772 = vadd.f32 0.0, %v1771
  %1773 = vmatprep.mubr.bf16.mxu0 0
  %1774 = vmatmul.mubr.bf16.gmra.mxu0 %v1151
  %v1775 = vpop.f32.mrf.mxu0
  %v1776 = vadd.f32 0.0, %v1775
  %v1777 = vpop.f32.mrf.mxu0
  %v1778 = vadd.f32 0.0, %v1777
  %v1779 = vpop.f32.mrf.mxu0
  %v1780 = vadd.f32 0.0, %v1779
  %v1781 = vpop.f32.mrf.mxu0
  %v1782 = vadd.f32 0.0, %v1781
  %1783 = vmatprep.mubr.bf16.mxu0 0
  %1784 = vmatmul.mubr.bf16.gmra.mxu0 %v1154
  %v1785 = vpop.f32.mrf.mxu0
  %v1786 = vadd.f32 0.0, %v1785
  %v1787 = vpop.f32.mrf.mxu0
  %v1788 = vadd.f32 0.0, %v1787
  %v1789 = vpop.f32.mrf.mxu0
  %v1790 = vadd.f32 0.0, %v1789
  %v1791 = vpop.f32.mrf.mxu0
  %v1792 = vadd.f32 0.0, %v1791
  %1793 = vmatprep.mubr.bf16.mxu0 0
  %1794 = vmatmul.mubr.bf16.gmra.mxu0 %v1157
  %v1795 = vpop.f32.mrf.mxu0
  %v1796 = vadd.f32 0.0, %v1795
  %v1797 = vpop.f32.mrf.mxu0
  %v1798 = vadd.f32 0.0, %v1797
  %v1799 = vpop.f32.mrf.mxu0
  %v1800 = vadd.f32 0.0, %v1799
  %v1801 = vpop.f32.mrf.mxu0
  %v1802 = vadd.f32 0.0, %v1801
  %1803 = vmatprep.mubr.bf16.mxu0 0
  %1804 = vmatmul.mubr.bf16.gmra.mxu0 %v1160
  %v1805 = vpop.f32.mrf.mxu0
  %v1806 = vadd.f32 0.0, %v1805
  %v1807 = vpop.f32.mrf.mxu0
  %v1808 = vadd.f32 0.0, %v1807
  %v1809 = vpop.f32.mrf.mxu0
  %v1810 = vadd.f32 0.0, %v1809
  %v1811 = vpop.f32.mrf.mxu0
  %v1812 = vadd.f32 0.0, %v1811
  %1813 = vmatprep.mubr.bf16.mxu0 0
  %1814 = vmatmul.mubr.bf16.gmra.mxu0 %v1163
  %v1815 = vpop.f32.mrf.mxu0
  %v1816 = vadd.f32 0.0, %v1815
  %v1817 = vpop.f32.mrf.mxu0
  %v1818 = vadd.f32 0.0, %v1817
  %v1819 = vpop.f32.mrf.mxu0
  %v1820 = vadd.f32 0.0, %v1819
  %v1821 = vpop.f32.mrf.mxu0
  %v1822 = vadd.f32 0.0, %v1821
  %1823 = vmatprep.mubr.bf16.mxu0 0
  %1824 = vmatmul.mubr.bf16.gmra.mxu0 %v1166
  %v1825 = vpop.f32.mrf.mxu0
  %v1826 = vadd.f32 0.0, %v1825
  %v1827 = vpop.f32.mrf.mxu0
  %v1828 = vadd.f32 0.0, %v1827
  %v1829 = vpop.f32.mrf.mxu0
  %v1830 = vadd.f32 0.0, %v1829
  %v1831 = vpop.f32.mrf.mxu0
  %v1832 = vadd.f32 0.0, %v1831
  %1833 = vmatprep.mubr.bf16.mxu0 0
  %1834 = vmatmul.mubr.bf16.gmra.mxu0 %v1169
  %v1835 = vpop.f32.mrf.mxu0
  %v1836 = vadd.f32 0.0, %v1835
  %v1837 = vpop.f32.mrf.mxu0
  %v1838 = vadd.f32 0.0, %v1837
  %v1839 = vpop.f32.mrf.mxu0
  %v1840 = vadd.f32 0.0, %v1839
  %v1841 = vpop.f32.mrf.mxu0
  %v1842 = vadd.f32 0.0, %v1841
  %1843 = vmatprep.mubr.bf16.mxu0 0
  %1844 = vmatmul.mubr.bf16.gmra.mxu0 %v1172
  %v1845 = vpop.f32.mrf.mxu0
  %v1846 = vadd.f32 0.0, %v1845
  %v1847 = vpop.f32.mrf.mxu0
  %v1848 = vadd.f32 0.0, %v1847
  %v1849 = vpop.f32.mrf.mxu0
  %v1850 = vadd.f32 0.0, %v1849
  %v1851 = vpop.f32.mrf.mxu0
  %v1852 = vadd.f32 0.0, %v1851
  %1853 = vmatprep.mubr.bf16.mxu0 0
  %1854 = vmatmul.mubr.bf16.gmra.mxu0 %v1175
  %v1855 = vpop.f32.mrf.mxu0
  %v1856 = vadd.f32 0.0, %v1855
  %v1857 = vpop.f32.mrf.mxu0
  %v1858 = vadd.f32 0.0, %v1857
  %v1859 = vpop.f32.mrf.mxu0
  %v1860 = vadd.f32 0.0, %v1859
  %v1861 = vpop.f32.mrf.mxu0
  %v1862 = vadd.f32 0.0, %v1861
  %1863 = vmatprep.mubr.bf16.mxu0 0
  %1864 = vmatmul.mubr.bf16.gmra.mxu0 %v1178
  %v1865 = vpop.f32.mrf.mxu0
  %v1866 = vadd.f32 0.0, %v1865
  %v1867 = vpop.f32.mrf.mxu0
  %v1868 = vadd.f32 0.0, %v1867
  %v1869 = vpop.f32.mrf.mxu0
  %v1870 = vadd.f32 0.0, %v1869
  %v1871 = vpop.f32.mrf.mxu0
  %v1872 = vadd.f32 0.0, %v1871
  %1873 = vmatprep.mubr.bf16.mxu0 0
  %1874 = vmatmul.mubr.bf16.gmra.mxu0 %v1181
  %v1875 = vpop.f32.mrf.mxu0
  %v1876 = vadd.f32 0.0, %v1875
  %v1877 = vpop.f32.mrf.mxu0
  %v1878 = vadd.f32 0.0, %v1877
  %v1879 = vpop.f32.mrf.mxu0
  %v1880 = vadd.f32 0.0, %v1879
  %v1881 = vpop.f32.mrf.mxu0
  %v1882 = vadd.f32 0.0, %v1881
  %1883 = vmatprep.mubr.bf16.mxu0 0
  %1884 = vmatmul.mubr.bf16.gmra.mxu0 %v1184
  %v1885 = vpop.f32.mrf.mxu0
  %v1886 = vadd.f32 0.0, %v1885
  %v1887 = vpop.f32.mrf.mxu0
  %v1888 = vadd.f32 0.0, %v1887
  %v1889 = vpop.f32.mrf.mxu0
  %v1890 = vadd.f32 0.0, %v1889
  %v1891 = vpop.f32.mrf.mxu0
  %v1892 = vadd.f32 0.0, %v1891
  %1893 = vmatprep.mubr.bf16.mxu0 0
  %1894 = vmatmul.mubr.bf16.gmra.mxu0 %v1187
  %v1895 = vpop.f32.mrf.mxu0
  %v1896 = vadd.f32 0.0, %v1895
  %v1897 = vpop.f32.mrf.mxu0
  %v1898 = vadd.f32 0.0, %v1897
  %v1899 = vpop.f32.mrf.mxu0
  %v1900 = vadd.f32 0.0, %v1899
  %v1901 = vpop.f32.mrf.mxu0
  %v1902 = vadd.f32 0.0, %v1901
  %1903 = vmatprep.mubr.bf16.mxu0 0
  %1904 = vmatmul.mubr.bf16.gmra.mxu0 %v1190
  %v1905 = vpop.f32.mrf.mxu0
  %v1906 = vadd.f32 0.0, %v1905
  %v1907 = vpop.f32.mrf.mxu0
  %v1908 = vadd.f32 0.0, %v1907
  %v1909 = vpop.f32.mrf.mxu0
  %v1910 = vadd.f32 0.0, %v1909
  %v1911 = vpop.f32.mrf.mxu0
  %v1912 = vadd.f32 0.0, %v1911
  %1913 = vmatprep.mubr.bf16.mxu0 0
  %1914 = vmatmul.mubr.bf16.gmra.mxu0 %v1193
  %v1915 = vpop.f32.mrf.mxu0
  %v1916 = vpop.f32.mrf.mxu0
  %v1917 = vadd.f32 0.0, %v1916
  %v1918 = vpop.f32.mrf.mxu0
  %v1919 = vpop.f32.mrf.mxu0
  %v1920 = vadd.f32 0.0, %v1919
  %1921 = vmatprep.mubr.bf16.mxu0 0
  %1922 = vmatmul.mubr.bf16.gmra.mxu0 %v1196
  %v1923 = vpop.f32.mrf.mxu0
  %v1924 = vpop.f32.mrf.mxu0
  %v1925 = vadd.f32 0.0, %v1924
  %v1926 = vpop.f32.mrf.mxu0
  %v1927 = vpop.f32.mrf.mxu0
  %v1928 = vadd.f32 0.0, %v1927
  %1929 = vmatprep.mubr.bf16.mxu0 0
  %1930 = vmatmul.mubr.bf16.gmra.mxu0 %v1199
  %v1931 = vpop.f32.mrf.mxu0
  %v1932 = vpop.f32.mrf.mxu0
  %v1933 = vpop.f32.mrf.mxu0
  %v1934 = vpop.f32.mrf.mxu0
  %1935 = vmatprep.mubr.bf16.mxu0 0
  %1936 = vmatmul.mubr.bf16.gmra.mxu0 %v1202
  %v1937 = vpop.f32.mrf.mxu0
  %v1938 = vpop.f32.mrf.mxu0
  %v1939 = vpop.f32.mrf.mxu0
  %v1940 = vpop.f32.mrf.mxu0
  %1941 = vdwg.mxu0
  %1942 = vmatprep.subr.bf16.mxu0 0
  %1943 = vmatpush1.bf16.msra.mxu0 0
  %1944 = vmatprep.subr.bf16.mxu0 0
  %1945 = vmatpush1.bf16.msra.mxu0 0
  %1946 = vmatprep.subr.bf16.mxu0 0
  %1947 = vmatpush1.bf16.msra.mxu0 0
  %1948 = vmatprep.subr.bf16.mxu0 0
  %1949 = vmatpush1.bf16.msra.mxu0 0
  %1950 = vmatprep.subr.bf16.mxu0 0
  %1951 = vmatpush1.bf16.msra.mxu0 %v1218
  %1952 = vmatprep.subr.bf16.mxu0 0
  %1953 = vmatpush1.bf16.msra.mxu0 %v1074
  %1954 = vmatprep.subr.bf16.mxu0 0
  %1955 = vmatpush1.bf16.msra.mxu0 %v1069
  %1956 = vmatprep.subr.bf16.mxu0 0
  %1957 = vmatpush1.bf16.msra.mxu0 %v1064
  %1958 = vmatprep.subr.bf16.mxu0 0
  %1959 = vmatpush2.bf16.msra.mxu0 0
  %1960 = vmatprep.subr.bf16.mxu0 0
  %1961 = vmatpush2.bf16.msra.mxu0 0
  %1962 = vmatprep.subr.bf16.mxu0 0
  %1963 = vmatpush2.bf16.msra.mxu0 0
  %1964 = vmatprep.subr.bf16.mxu0 0
  %1965 = vmatpush2.bf16.msra.mxu0 0
  %1966 = vmatprep.subr.bf16.mxu0 0
  %1967 = vmatpush2.bf16.msra.mxu0 0
  %1968 = vmatprep.subr.bf16.mxu0 0
  %1969 = vmatpush2.bf16.msra.mxu0 0
  %1970 = vmatprep.subr.bf16.mxu0 0
  %1971 = vmatpush2.bf16.msra.mxu0 0
  %1972 = vmatprep.subr.bf16.mxu0 0
  %1973 = vmatpush2.bf16.msra.mxu0 0
  %1974 = vmatprep.mubr.bf16.mxu0 0
  %1975 = vmatmul.mubr.bf16.gmra.mxu0 %v1097
  %v1976 = vpop.f32.mrf.mxu0
  %v1977 = vpop.f32.mrf.mxu0
  %v1978 = vpop.f32.mrf.mxu0
  %v1979 = vpop.f32.mrf.mxu0
  %1980 = vmatprep.mubr.bf16.mxu0 0
  %1981 = vmatmul.mubr.bf16.gmra.mxu0 %v1100
  %v1982 = vpop.f32.mrf.mxu0
  %v1983 = vpop.f32.mrf.mxu0
  %v1984 = vpop.f32.mrf.mxu0
  %v1985 = vpop.f32.mrf.mxu0
  %1986 = vmatprep.mubr.bf16.mxu0 0
  %1987 = vmatmul.mubr.bf16.gmra.mxu0 %v1103
  %v1988 = vpop.f32.mrf.mxu0
  %v1989 = vpop.f32.mrf.mxu0
  %v1990 = vpop.f32.mrf.mxu0
  %v1991 = vpop.f32.mrf.mxu0
  %1992 = vmatprep.mubr.bf16.mxu0 0
  %1993 = vmatmul.mubr.bf16.gmra.mxu0 %v1106
  %v1994 = vpop.f32.mrf.mxu0
  %v1995 = vpop.f32.mrf.mxu0
  %v1996 = vpop.f32.mrf.mxu0
  %v1997 = vpop.f32.mrf.mxu0
  %1998 = vmatprep.mubr.bf16.mxu0 0
  %1999 = vmatmul.mubr.bf16.gmra.mxu0 %v1109
  %v2000 = vpop.f32.mrf.mxu0
  %v2001 = vpop.f32.mrf.mxu0
  %v2002 = vpop.f32.mrf.mxu0
  %v2003 = vpop.f32.mrf.mxu0
  %2004 = vmatprep.mubr.bf16.mxu0 0
  %2005 = vmatmul.mubr.bf16.gmra.mxu0 %v1112
  %v2006 = vpop.f32.mrf.mxu0
  %v2007 = vpop.f32.mrf.mxu0
  %v2008 = vpop.f32.mrf.mxu0
  %v2009 = vpop.f32.mrf.mxu0
  %2010 = vmatprep.mubr.bf16.mxu0 0
  %2011 = vmatmul.mubr.bf16.gmra.mxu0 %v1115
  %v2012 = vpop.f32.mrf.mxu0
  %v2013 = vpop.f32.mrf.mxu0
  %v2014 = vpop.f32.mrf.mxu0
  %v2015 = vpop.f32.mrf.mxu0
  %2016 = vmatprep.mubr.bf16.mxu0 0
  %2017 = vmatmul.mubr.bf16.gmra.mxu0 %v1118
  %v2018 = vpop.f32.mrf.mxu0
  %v2019 = vpop.f32.mrf.mxu0
  %v2020 = vpop.f32.mrf.mxu0
  %v2021 = vpop.f32.mrf.mxu0
  %2022 = vmatprep.mubr.bf16.mxu0 0
  %2023 = vmatmul.mubr.bf16.gmra.mxu0 %v1121
  %v2024 = vpop.f32.mrf.mxu0
  %v2025 = vadd.f32 0.0, %v2024
  %v2026 = vpop.f32.mrf.mxu0
  %v2027 = vpop.f32.mrf.mxu0
  %v2028 = vadd.f32 0.0, %v2027
  %v2029 = vpop.f32.mrf.mxu0
  %2030 = vmatprep.mubr.bf16.mxu0 0
  %2031 = vmatmul.mubr.bf16.gmra.mxu0 %v1124
  %v2032 = vpop.f32.mrf.mxu0
  %v2033 = vadd.f32 0.0, %v2032
  %v2034 = vpop.f32.mrf.mxu0
  %v2035 = vpop.f32.mrf.mxu0
  %v2036 = vadd.f32 0.0, %v2035
  %v2037 = vpop.f32.mrf.mxu0
  %2038 = vmatprep.mubr.bf16.mxu0 0
  %2039 = vmatmul.mubr.bf16.gmra.mxu0 %v1127
  %v2040 = vpop.f32.mrf.mxu0
  %v2041 = vadd.f32 0.0, %v2040
  %v2042 = vpop.f32.mrf.mxu0
  %v2043 = vpop.f32.mrf.mxu0
  %v2044 = vadd.f32 0.0, %v2043
  %v2045 = vpop.f32.mrf.mxu0
  %2046 = vmatprep.mubr.bf16.mxu0 0
  %2047 = vmatmul.mubr.bf16.gmra.mxu0 %v1130
  %v2048 = vpop.f32.mrf.mxu0
  %v2049 = vadd.f32 0.0, %v2048
  %v2050 = vpop.f32.mrf.mxu0
  %v2051 = vpop.f32.mrf.mxu0
  %v2052 = vadd.f32 0.0, %v2051
  %v2053 = vpop.f32.mrf.mxu0
  %2054 = vmatprep.mubr.bf16.mxu0 0
  %2055 = vmatmul.mubr.bf16.gmra.mxu0 %v1133
  %v2056 = vpop.f32.mrf.mxu0
  %v2057 = vadd.f32 0.0, %v2056
  %v2058 = vpop.f32.mrf.mxu0
  %v2059 = vpop.f32.mrf.mxu0
  %v2060 = vadd.f32 0.0, %v2059
  %v2061 = vpop.f32.mrf.mxu0
  %2062 = vmatprep.mubr.bf16.mxu0 0
  %2063 = vmatmul.mubr.bf16.gmra.mxu0 %v1136
  %v2064 = vpop.f32.mrf.mxu0
  %v2065 = vadd.f32 0.0, %v2064
  %v2066 = vpop.f32.mrf.mxu0
  %v2067 = vpop.f32.mrf.mxu0
  %v2068 = vadd.f32 0.0, %v2067
  %v2069 = vpop.f32.mrf.mxu0
  %2070 = vmatprep.mubr.bf16.mxu0 0
  %2071 = vmatmul.mubr.bf16.gmra.mxu0 %v1139
  %v2072 = vpop.f32.mrf.mxu0
  %v2073 = vadd.f32 0.0, %v2072
  %v2074 = vpop.f32.mrf.mxu0
  %v2075 = vpop.f32.mrf.mxu0
  %v2076 = vadd.f32 0.0, %v2075
  %v2077 = vpop.f32.mrf.mxu0
  %2078 = vmatprep.mubr.bf16.mxu0 0
  %2079 = vmatmul.mubr.bf16.gmra.mxu0 %v1142
  %v2080 = vpop.f32.mrf.mxu0
  %v2081 = vadd.f32 0.0, %v2080
  %v2082 = vpop.f32.mrf.mxu0
  %v2083 = vpop.f32.mrf.mxu0
  %v2084 = vadd.f32 0.0, %v2083
  %v2085 = vpop.f32.mrf.mxu0
  %2086 = vmatprep.mubr.bf16.mxu0 0
  %2087 = vmatmul.mubr.bf16.gmra.mxu0 %v1145
  %v2088 = vpop.f32.mrf.mxu0
  %v2089 = vadd.f32 0.0, %v2088
  %v2090 = vpop.f32.mrf.mxu0
  %v2091 = vpop.f32.mrf.mxu0
  %v2092 = vadd.f32 0.0, %v2091
  %v2093 = vpop.f32.mrf.mxu0
  %2094 = vmatprep.mubr.bf16.mxu0 0
  %2095 = vmatmul.mubr.bf16.gmra.mxu0 %v1148
  %v2096 = vpop.f32.mrf.mxu0
  %v2097 = vadd.f32 0.0, %v2096
  %v2098 = vpop.f32.mrf.mxu0
  %v2099 = vpop.f32.mrf.mxu0
  %v2100 = vadd.f32 0.0, %v2099
  %v2101 = vpop.f32.mrf.mxu0
  %2102 = vmatprep.mubr.bf16.mxu0 0
  %2103 = vmatmul.mubr.bf16.gmra.mxu0 %v1151
  %v2104 = vpop.f32.mrf.mxu0
  %v2105 = vadd.f32 0.0, %v2104
  %v2106 = vpop.f32.mrf.mxu0
  %v2107 = vpop.f32.mrf.mxu0
  %v2108 = vadd.f32 0.0, %v2107
  %v2109 = vpop.f32.mrf.mxu0
  %2110 = vmatprep.mubr.bf16.mxu0 0
  %2111 = vmatmul.mubr.bf16.gmra.mxu0 %v1154
  %v2112 = vpop.f32.mrf.mxu0
  %v2113 = vadd.f32 0.0, %v2112
  %v2114 = vpop.f32.mrf.mxu0
  %v2115 = vpop.f32.mrf.mxu0
  %v2116 = vadd.f32 0.0, %v2115
  %v2117 = vpop.f32.mrf.mxu0
  %2118 = vmatprep.mubr.bf16.mxu0 0
  %2119 = vmatmul.mubr.bf16.gmra.mxu0 %v1157
  %v2120 = vpop.f32.mrf.mxu0
  %v2121 = vadd.f32 0.0, %v2120
  %v2122 = vpop.f32.mrf.mxu0
  %v2123 = vpop.f32.mrf.mxu0
  %v2124 = vadd.f32 0.0, %v2123
  %v2125 = vpop.f32.mrf.mxu0
  %2126 = vmatprep.mubr.bf16.mxu0 0
  %2127 = vmatmul.mubr.bf16.gmra.mxu0 %v1160
  %v2128 = vpop.f32.mrf.mxu0
  %v2129 = vadd.f32 0.0, %v2128
  %v2130 = vpop.f32.mrf.mxu0
  %v2131 = vpop.f32.mrf.mxu0
  %v2132 = vadd.f32 0.0, %v2131
  %v2133 = vpop.f32.mrf.mxu0
  %2134 = vmatprep.mubr.bf16.mxu0 0
  %2135 = vmatmul.mubr.bf16.gmra.mxu0 %v1163
  %v2136 = vpop.f32.mrf.mxu0
  %v2137 = vadd.f32 0.0, %v2136
  %v2138 = vpop.f32.mrf.mxu0
  %v2139 = vpop.f32.mrf.mxu0
  %v2140 = vadd.f32 0.0, %v2139
  %v2141 = vpop.f32.mrf.mxu0
  %2142 = vmatprep.mubr.bf16.mxu0 0
  %2143 = vmatmul.mubr.bf16.gmra.mxu0 %v1166
  %v2144 = vpop.f32.mrf.mxu0
  %v2145 = vadd.f32 0.0, %v2144
  %v2146 = vpop.f32.mrf.mxu0
  %v2147 = vpop.f32.mrf.mxu0
  %v2148 = vadd.f32 0.0, %v2147
  %v2149 = vpop.f32.mrf.mxu0
  %2150 = vmatprep.mubr.bf16.mxu0 0
  %2151 = vmatmul.mubr.bf16.gmra.mxu0 %v1169
  %v2152 = vpop.f32.mrf.mxu0
  %v2153 = vadd.f32 0.0, %v2152
  %v2154 = vpop.f32.mrf.mxu0
  %v2155 = vpop.f32.mrf.mxu0
  %v2156 = vadd.f32 0.0, %v2155
  %v2157 = vpop.f32.mrf.mxu0
  %2158 = vmatprep.mubr.bf16.mxu0 0
  %2159 = vmatmul.mubr.bf16.gmra.mxu0 %v1172
  %v2160 = vpop.f32.mrf.mxu0
  %v2161 = vadd.f32 0.0, %v2160
  %v2162 = vpop.f32.mrf.mxu0
  %v2163 = vpop.f32.mrf.mxu0
  %v2164 = vadd.f32 0.0, %v2163
  %v2165 = vpop.f32.mrf.mxu0
  %2166 = vmatprep.mubr.bf16.mxu0 0
  %2167 = vmatmul.mubr.bf16.gmra.mxu0 %v1175
  %v2168 = vpop.f32.mrf.mxu0
  %v2169 = vadd.f32 0.0, %v2168
  %v2170 = vpop.f32.mrf.mxu0
  %v2171 = vpop.f32.mrf.mxu0
  %v2172 = vadd.f32 0.0, %v2171
  %v2173 = vpop.f32.mrf.mxu0
  %2174 = vmatprep.mubr.bf16.mxu0 0
  %2175 = vmatmul.mubr.bf16.gmra.mxu0 %v1178
  %v2176 = vpop.f32.mrf.mxu0
  %v2177 = vadd.f32 0.0, %v2176
  %v2178 = vpop.f32.mrf.mxu0
  %v2179 = vpop.f32.mrf.mxu0
  %v2180 = vadd.f32 0.0, %v2179
  %v2181 = vpop.f32.mrf.mxu0
  %2182 = vmatprep.mubr.bf16.mxu0 0
  %2183 = vmatmul.mubr.bf16.gmra.mxu0 %v1181
  %v2184 = vpop.f32.mrf.mxu0
  %v2185 = vadd.f32 0.0, %v2184
  %v2186 = vpop.f32.mrf.mxu0
  %v2187 = vpop.f32.mrf.mxu0
  %v2188 = vadd.f32 0.0, %v2187
  %v2189 = vpop.f32.mrf.mxu0
  %2190 = vmatprep.mubr.bf16.mxu0 0
  %2191 = vmatmul.mubr.bf16.gmra.mxu0 %v1184
  %v2192 = vpop.f32.mrf.mxu0
  %v2193 = vadd.f32 0.0, %v2192
  %v2194 = vpop.f32.mrf.mxu0
  %v2195 = vpop.f32.mrf.mxu0
  %v2196 = vadd.f32 0.0, %v2195
  %v2197 = vpop.f32.mrf.mxu0
  %2198 = vmatprep.mubr.bf16.mxu0 0
  %2199 = vmatmul.mubr.bf16.gmra.mxu0 %v1187
  %v2200 = vpop.f32.mrf.mxu0
  %v2201 = vadd.f32 0.0, %v2200
  %v2202 = vpop.f32.mrf.mxu0
  %v2203 = vpop.f32.mrf.mxu0
  %v2204 = vadd.f32 0.0, %v2203
  %v2205 = vpop.f32.mrf.mxu0
  %2206 = vmatprep.mubr.bf16.mxu0 0
  %2207 = vmatmul.mubr.bf16.gmra.mxu0 %v1190
  %v2208 = vpop.f32.mrf.mxu0
  %v2209 = vadd.f32 0.0, %v2208
  %v2210 = vpop.f32.mrf.mxu0
  %v2211 = vpop.f32.mrf.mxu0
  %v2212 = vadd.f32 0.0, %v2211
  %v2213 = vpop.f32.mrf.mxu0
  %2214 = vmatprep.mubr.bf16.mxu0 0
  %2215 = vmatmul.mubr.bf16.gmra.mxu0 %v1193
  %v2216 = vpop.f32.mrf.mxu0
  %v2217 = vadd.f32 0.0, %v2216
  %v2218 = vpop.f32.mrf.mxu0
  %v2219 = vpop.f32.mrf.mxu0
  %v2220 = vadd.f32 0.0, %v2219
  %v2221 = vpop.f32.mrf.mxu0
  %2222 = vmatprep.mubr.bf16.mxu0 0
  %2223 = vmatmul.mubr.bf16.gmra.mxu0 %v1196
  %v2224 = vpop.f32.mrf.mxu0
  %v2225 = vadd.f32 0.0, %v2224
  %v2226 = vpop.f32.mrf.mxu0
  %v2227 = vpop.f32.mrf.mxu0
  %v2228 = vadd.f32 0.0, %v2227
  %v2229 = vpop.f32.mrf.mxu0
  %2230 = vmatprep.mubr.bf16.mxu0 0
  %2231 = vmatmul.mubr.bf16.gmra.mxu0 %v1199
  %v2232 = vpop.f32.mrf.mxu0
  %v2233 = vadd.f32 0.0, %v2232
  %v2234 = vpop.f32.mrf.mxu0
  %v2235 = vpop.f32.mrf.mxu0
  %v2236 = vadd.f32 0.0, %v2235
  %v2237 = vpop.f32.mrf.mxu0
  %2238 = vmatprep.mubr.bf16.mxu0 0
  %2239 = vmatmul.mubr.bf16.gmra.mxu0 %v1202
  %v2240 = vpop.f32.mrf.mxu0
  %v2241 = vadd.f32 0.0, %v2240
  %v2242 = vpop.f32.mrf.mxu0
  %v2243 = vpop.f32.mrf.mxu0
  %v2244 = vadd.f32 0.0, %v2243
  %v2245 = vpop.f32.mrf.mxu0
  %2246 = vdwg.mxu0
  %v2247 = vld [vmem:[%s3] sm:$0x1]
  %v2248 = vadd.f32 %v1255, %v1273
  %v2249 = vadd.f32 %v1258, %v1277
  %v2250 = vadd.f32 %v1263, %v1283
  %v2251 = vadd.f32 %v1266, %v1287
  %v2252 = vadd.f32 %v2248, %v1640
  %v2253 = vadd.f32 %v2249, %v1643
  %v2254 = vadd.f32 %v2250, %v1648
  %v2255 = vadd.f32 %v2251, %v1651
  %v2256 = vadd.f32 %v2252, %v1658
  %v2257 = vadd.f32 %v2253, %v1662
  %v2258 = vadd.f32 %v2254, %v1668
  %v2259 = vadd.f32 %v2255, %v1672
  %v2260 = vadd.f32 %v2256, %v2025
  %v2261 = vadd.f32 %v2257, %v2028
  %v2262 = vadd.f32 %v2258, %v2033
  %v2263 = vadd.f32 %v2259, %v2036
  %v2265 = vlaneseq
  %v2266 = vshrl.u32 %v2265, 7
  %v2267 = vsub.s32 0, %v2266
  %v2268 = vrot.slane %v2247, %v2267
  %v2270 = vadd.f32 %v2260, %v2268
  %v2271 = vadd.f32 %v2261, %v2268
  %v2272 = vadd.f32 %v2262, %v2268
  %v2273 = vadd.f32 %v2263, %v2268
  %v2274 = vmax.f32 %v2270, 0.0
  %v2275 = vmax.f32 %v2271, 0.0
  %v2276 = vmax.f32 %v2272, 0.0
  %v2277 = vmax.f32 %v2273, 0.0
  %v2278 = vmax.f32 %v2274, 0.0
  %v2279 = vmax.f32 %v2275, 0.0
  %v2280 = vmax.f32 %v2276, 0.0
  %v2281 = vmax.f32 %v2277, 0.0
  %v2282 = vadd.f32 %v1271, %v1293
  %v2283 = vadd.f32 %v1275, %v1297
  %v2284 = vadd.f32 %v1281, %v1303
  %v2285 = vadd.f32 %v1285, %v1307
  %v2286 = vadd.f32 %v2282, %v1656
  %v2287 = vadd.f32 %v2283, %v1660
  %v2288 = vadd.f32 %v2284, %v1666
  %v2289 = vadd.f32 %v2285, %v1670
  %v2290 = vadd.f32 %v2286, %v1678
  %v2291 = vadd.f32 %v2287, %v1682
  %v2292 = vadd.f32 %v2288, %v1688
  %v2293 = vadd.f32 %v2289, %v1692
  %v2294 = vadd.f32 %v2290, %v2041
  %v2295 = vadd.f32 %v2291, %v2044
  %v2296 = vadd.f32 %v2292, %v2049
  %v2297 = vadd.f32 %v2293, %v2052
  %v2298 = vadd.f32 %v2294, %v2268
  %v2299 = vadd.f32 %v2295, %v2268
  %v2300 = vadd.f32 %v2296, %v2268
  %v2301 = vadd.f32 %v2297, %v2268
  %v2302 = vmax.f32 %v2298, 0.0
  %v2303 = vmax.f32 %v2299, 0.0
  %v2304 = vmax.f32 %v2300, 0.0
  %v2305 = vmax.f32 %v2301, 0.0
  %v2306 = vmax.f32 %v2278, %v2302
  %v2307 = vmax.f32 %v2279, %v2303
  %v2308 = vmax.f32 %v2280, %v2304
  %v2309 = vmax.f32 %v2281, %v2305
  %v2310 = vadd.f32 %v1291, %v1313
  %v2311 = vadd.f32 %v1295, %v1317
  %v2312 = vadd.f32 %v1301, %v1323
  %v2313 = vadd.f32 %v1305, %v1327
  %v2314 = vadd.f32 %v2310, %v1676
  %v2315 = vadd.f32 %v2311, %v1680
  %v2316 = vadd.f32 %v2312, %v1686
  %v2317 = vadd.f32 %v2313, %v1690
  %v2318 = vadd.f32 %v2314, %v1698
  %v2319 = vadd.f32 %v2315, %v1702
  %v2320 = vadd.f32 %v2316, %v1708
  %v2321 = vadd.f32 %v2317, %v1712
  %v2322 = vadd.f32 %v2318, %v2057
  %v2323 = vadd.f32 %v2319, %v2060
  %v2324 = vadd.f32 %v2320, %v2065
  %v2325 = vadd.f32 %v2321, %v2068
  %v2326 = vadd.f32 %v2322, %v2268
  %v2327 = vadd.f32 %v2323, %v2268
  %v2328 = vadd.f32 %v2324, %v2268
  %v2329 = vadd.f32 %v2325, %v2268
  %v2330 = vmax.f32 %v2326, 0.0
  %v2331 = vmax.f32 %v2327, 0.0
  %v2332 = vmax.f32 %v2328, 0.0
  %v2333 = vmax.f32 %v2329, 0.0
  %v2334 = vmax.f32 %v2306, %v2330
  %v2335 = vmax.f32 %v2307, %v2331
  %v2336 = vmax.f32 %v2308, %v2332
  %v2337 = vmax.f32 %v2309, %v2333
  %v2338 = vadd.f32 %v1311, %v1333
  %v2339 = vadd.f32 %v1315, %v1337
  %v2340 = vadd.f32 %v1321, %v1343
  %v2341 = vadd.f32 %v1325, %v1347
  %v2342 = vadd.f32 %v2338, %v1696
  %v2343 = vadd.f32 %v2339, %v1700
  %v2344 = vadd.f32 %v2340, %v1706
  %v2345 = vadd.f32 %v2341, %v1710
  %v2346 = vadd.f32 %v2342, %v1718
  %v2347 = vadd.f32 %v2343, %v1722
  %v2348 = vadd.f32 %v2344, %v1728
  %v2349 = vadd.f32 %v2345, %v1732
  %v2350 = vadd.f32 %v2346, %v2073
  %v2351 = vadd.f32 %v2347, %v2076
  %v2352 = vadd.f32 %v2348, %v2081
  %v2353 = vadd.f32 %v2349, %v2084
  %v2354 = vadd.f32 %v2350, %v2268
  %v2355 = vadd.f32 %v2351, %v2268
  %v2356 = vadd.f32 %v2352, %v2268
  %v2357 = vadd.f32 %v2353, %v2268
  %v2358 = vmax.f32 %v2354, 0.0
  %v2359 = vmax.f32 %v2355, 0.0
  %v2360 = vmax.f32 %v2356, 0.0
  %v2361 = vmax.f32 %v2357, 0.0
  %v2362 = vmax.f32 %v2334, %v2358
  %v2363 = vmax.f32 %v2335, %v2359
  %v2364 = vmax.f32 %v2336, %v2360
  %v2365 = vmax.f32 %v2337, %v2361
  %v2366 = vadd.f32 %v1331, %v1353
  %v2367 = vadd.f32 %v1335, %v1357
  %v2368 = vadd.f32 %v1341, %v1363
  %v2369 = vadd.f32 %v1345, %v1367
  %v2370 = vadd.f32 %v2366, %v1716
  %v2371 = vadd.f32 %v2367, %v1720
  %v2372 = vadd.f32 %v2368, %v1726
  %v2373 = vadd.f32 %v2369, %v1730
  %v2374 = vadd.f32 %v2370, %v1738
  %v2375 = vadd.f32 %v2371, %v1742
  %v2376 = vadd.f32 %v2372, %v1748
  %v2377 = vadd.f32 %v2373, %v1752
  %v2378 = vadd.f32 %v2374, %v2089
  %v2379 = vadd.f32 %v2375, %v2092
  %v2380 = vadd.f32 %v2376, %v2097
  %v2381 = vadd.f32 %v2377, %v2100
  %v2382 = vadd.f32 %v2378, %v2268
  %v2383 = vadd.f32 %v2379, %v2268
  %v2384 = vadd.f32 %v2380, %v2268
  %v2385 = vadd.f32 %v2381, %v2268
  %v2386 = vmax.f32 %v2382, 0.0
  %v2387 = vmax.f32 %v2383, 0.0
  %v2388 = vmax.f32 %v2384, 0.0
  %v2389 = vmax.f32 %v2385, 0.0
  %v2390 = vmax.f32 %v2362, %v2386
  %v2391 = vmax.f32 %v2363, %v2387
  %v2392 = vmax.f32 %v2364, %v2388
  %v2393 = vmax.f32 %v2365, %v2389
  %v2394 = vadd.f32 %v1351, %v1373
  %v2395 = vadd.f32 %v1355, %v1377
  %v2396 = vadd.f32 %v1361, %v1383
  %v2397 = vadd.f32 %v1365, %v1387
  %v2398 = vadd.f32 %v2394, %v1736
  %v2399 = vadd.f32 %v2395, %v1740
  %v2400 = vadd.f32 %v2396, %v1746
  %v2401 = vadd.f32 %v2397, %v1750
  %v2402 = vadd.f32 %v2398, %v1758
  %v2403 = vadd.f32 %v2399, %v1762
  %v2404 = vadd.f32 %v2400, %v1768
  %v2405 = vadd.f32 %v2401, %v1772
  %v2406 = vadd.f32 %v2402, %v2105
  %v2407 = vadd.f32 %v2403, %v2108
  %v2408 = vadd.f32 %v2404, %v2113
  %v2409 = vadd.f32 %v2405, %v2116
  %v2410 = vadd.f32 %v2406, %v2268
  %v2411 = vadd.f32 %v2407, %v2268
  %v2412 = vadd.f32 %v2408, %v2268
  %v2413 = vadd.f32 %v2409, %v2268
  %v2414 = vmax.f32 %v2410, 0.0
  %v2415 = vmax.f32 %v2411, 0.0
  %v2416 = vmax.f32 %v2412, 0.0
  %v2417 = vmax.f32 %v2413, 0.0
  %v2418 = vmax.f32 %v2390, %v2414
  %v2419 = vmax.f32 %v2391, %v2415
  %v2420 = vmax.f32 %v2392, %v2416
  %v2421 = vmax.f32 %v2393, %v2417
  %v2422 = vadd.f32 %v1371, %v1393
  %v2423 = vadd.f32 %v1375, %v1397
  %v2424 = vadd.f32 %v1381, %v1403
  %v2425 = vadd.f32 %v1385, %v1407
  %v2426 = vadd.f32 %v2422, %v1756
  %v2427 = vadd.f32 %v2423, %v1760
  %v2428 = vadd.f32 %v2424, %v1766
  %v2429 = vadd.f32 %v2425, %v1770
  %v2430 = vadd.f32 %v2426, %v1778
  %v2431 = vadd.f32 %v2427, %v1782
  %v2432 = vadd.f32 %v2428, %v1788
  %v2433 = vadd.f32 %v2429, %v1792
  %v2434 = vadd.f32 %v2430, %v2121
  %v2435 = vadd.f32 %v2431, %v2124
  %v2436 = vadd.f32 %v2432, %v2129
  %v2437 = vadd.f32 %v2433, %v2132
  %v2438 = vadd.f32 %v2434, %v2268
  %v2439 = vadd.f32 %v2435, %v2268
  %v2440 = vadd.f32 %v2436, %v2268
  %v2441 = vadd.f32 %v2437, %v2268
  %v2442 = vmax.f32 %v2438, 0.0
  %v2443 = vmax.f32 %v2439, 0.0
  %v2444 = vmax.f32 %v2440, 0.0
  %v2445 = vmax.f32 %v2441, 0.0
  %v2446 = vmax.f32 %v2418, %v2442
  %v2447 = vmax.f32 %v2419, %v2443
  %v2448 = vmax.f32 %v2420, %v2444
  %v2449 = vmax.f32 %v2421, %v2445
  %v2450 = vadd.f32 %v1391, %v1413
  %v2451 = vadd.f32 %v1395, %v1417
  %v2452 = vadd.f32 %v1401, %v1423
  %v2453 = vadd.f32 %v1405, %v1427
  %v2454 = vadd.f32 %v2450, %v1776
  %v2455 = vadd.f32 %v2451, %v1780
  %v2456 = vadd.f32 %v2452, %v1786
  %v2457 = vadd.f32 %v2453, %v1790
  %v2458 = vadd.f32 %v2454, %v1798
  %v2459 = vadd.f32 %v2455, %v1802
  %v2460 = vadd.f32 %v2456, %v1808
  %v2461 = vadd.f32 %v2457, %v1812
  %v2462 = vadd.f32 %v2458, %v2137
  %v2463 = vadd.f32 %v2459, %v2140
  %v2464 = vadd.f32 %v2460, %v2145
  %v2465 = vadd.f32 %v2461, %v2148
  %v2466 = vadd.f32 %v2462, %v2268
  %v2467 = vadd.f32 %v2463, %v2268
  %v2468 = vadd.f32 %v2464, %v2268
  %v2469 = vadd.f32 %v2465, %v2268
  %v2470 = vmax.f32 %v2466, 0.0
  %v2471 = vmax.f32 %v2467, 0.0
  %v2472 = vmax.f32 %v2468, 0.0
  %v2473 = vmax.f32 %v2469, 0.0
  %v2474 = vmax.f32 %v2446, %v2470
  %v2475 = vmax.f32 %v2447, %v2471
  %v2476 = vmax.f32 %v2448, %v2472
  %v2477 = vmax.f32 %v2449, %v2473
  %v2478 = vadd.f32 %v1411, %v1433
  %v2479 = vadd.f32 %v1415, %v1437
  %v2480 = vadd.f32 %v1421, %v1443
  %v2481 = vadd.f32 %v1425, %v1447
  %v2482 = vadd.f32 %v2478, %v1796
  %v2483 = vadd.f32 %v2479, %v1800
  %v2484 = vadd.f32 %v2480, %v1806
  %v2485 = vadd.f32 %v2481, %v1810
  %v2486 = vadd.f32 %v2482, %v1818
  %v2487 = vadd.f32 %v2483, %v1822
  %v2488 = vadd.f32 %v2484, %v1828
  %v2489 = vadd.f32 %v2485, %v1832
  %v2490 = vadd.f32 %v2486, %v2153
  %v2491 = vadd.f32 %v2487, %v2156
  %v2492 = vadd.f32 %v2488, %v2161
  %v2493 = vadd.f32 %v2489, %v2164
  %v2494 = vadd.f32 %v2490, %v2268
  %v2495 = vadd.f32 %v2491, %v2268
  %v2496 = vadd.f32 %v2492, %v2268
  %v2497 = vadd.f32 %v2493, %v2268
  %v2498 = vmax.f32 %v2494, 0.0
  %v2499 = vmax.f32 %v2495, 0.0
  %v2500 = vmax.f32 %v2496, 0.0
  %v2501 = vmax.f32 %v2497, 0.0
  %v2502 = vmax.f32 %v2474, %v2498
  %v2503 = vmax.f32 %v2475, %v2499
  %v2504 = vmax.f32 %v2476, %v2500
  %v2505 = vmax.f32 %v2477, %v2501
  %v2506 = vadd.f32 %v1431, %v1453
  %v2507 = vadd.f32 %v1435, %v1457
  %v2508 = vadd.f32 %v1441, %v1463
  %v2509 = vadd.f32 %v1445, %v1467
  %v2510 = vadd.f32 %v2506, %v1816
  %v2511 = vadd.f32 %v2507, %v1820
  %v2512 = vadd.f32 %v2508, %v1826
  %v2513 = vadd.f32 %v2509, %v1830
  %v2514 = vadd.f32 %v2510, %v1838
  %v2515 = vadd.f32 %v2511, %v1842
  %v2516 = vadd.f32 %v2512, %v1848
  %v2517 = vadd.f32 %v2513, %v1852
  %v2518 = vadd.f32 %v2514, %v2169
  %v2519 = vadd.f32 %v2515, %v2172
  %v2520 = vadd.f32 %v2516, %v2177
  %v2521 = vadd.f32 %v2517, %v2180
  %v2522 = vadd.f32 %v2518, %v2268
  %v2523 = vadd.f32 %v2519, %v2268
  %v2524 = vadd.f32 %v2520, %v2268
  %v2525 = vadd.f32 %v2521, %v2268
  %v2526 = vmax.f32 %v2522, 0.0
  %v2527 = vmax.f32 %v2523, 0.0
  %v2528 = vmax.f32 %v2524, 0.0
  %v2529 = vmax.f32 %v2525, 0.0
  %v2530 = vmax.f32 %v2502, %v2526
  %v2531 = vmax.f32 %v2503, %v2527
  %v2532 = vmax.f32 %v2504, %v2528
  %v2533 = vmax.f32 %v2505, %v2529
  %v2534 = vadd.f32 %v1451, %v1473
  %v2535 = vadd.f32 %v1455, %v1477
  %v2536 = vadd.f32 %v1461, %v1483
  %v2537 = vadd.f32 %v1465, %v1487
  %v2538 = vadd.f32 %v2534, %v1836
  %v2539 = vadd.f32 %v2535, %v1840
  %v2540 = vadd.f32 %v2536, %v1846
  %v2541 = vadd.f32 %v2537, %v1850
  %v2542 = vadd.f32 %v2538, %v1858
  %v2543 = vadd.f32 %v2539, %v1862
  %v2544 = vadd.f32 %v2540, %v1868
  %v2545 = vadd.f32 %v2541, %v1872
  %v2546 = vadd.f32 %v2542, %v2185
  %v2547 = vadd.f32 %v2543, %v2188
  %v2548 = vadd.f32 %v2544, %v2193
  %v2549 = vadd.f32 %v2545, %v2196
  %v2550 = vadd.f32 %v2546, %v2268
  %v2551 = vadd.f32 %v2547, %v2268
  %v2552 = vadd.f32 %v2548, %v2268
  %v2553 = vadd.f32 %v2549, %v2268
  %v2554 = vmax.f32 %v2550, 0.0
  %v2555 = vmax.f32 %v2551, 0.0
  %v2556 = vmax.f32 %v2552, 0.0
  %v2557 = vmax.f32 %v2553, 0.0
  %v2558 = vmax.f32 %v2530, %v2554
  %v2559 = vmax.f32 %v2531, %v2555
  %v2560 = vmax.f32 %v2532, %v2556
  %v2561 = vmax.f32 %v2533, %v2557
  %v2562 = vadd.f32 %v1471, %v1493
  %v2563 = vadd.f32 %v1475, %v1497
  %v2564 = vadd.f32 %v1481, %v1503
  %v2565 = vadd.f32 %v1485, %v1507
  %v2566 = vadd.f32 %v2562, %v1856
  %v2567 = vadd.f32 %v2563, %v1860
  %v2568 = vadd.f32 %v2564, %v1866
  %v2569 = vadd.f32 %v2565, %v1870
  %v2570 = vadd.f32 %v2566, %v1878
  %v2571 = vadd.f32 %v2567, %v1882
  %v2572 = vadd.f32 %v2568, %v1888
  %v2573 = vadd.f32 %v2569, %v1892
  %v2574 = vadd.f32 %v2570, %v2201
  %v2575 = vadd.f32 %v2571, %v2204
  %v2576 = vadd.f32 %v2572, %v2209
  %v2577 = vadd.f32 %v2573, %v2212
  %v2578 = vadd.f32 %v2574, %v2268
  %v2579 = vadd.f32 %v2575, %v2268
  %v2580 = vadd.f32 %v2576, %v2268
  %v2581 = vadd.f32 %v2577, %v2268
  %v2582 = vmax.f32 %v2578, 0.0
  %v2583 = vmax.f32 %v2579, 0.0
  %v2584 = vmax.f32 %v2580, 0.0
  %v2585 = vmax.f32 %v2581, 0.0
  %v2586 = vmax.f32 %v2558, %v2582
  %v2587 = vmax.f32 %v2559, %v2583
  %v2588 = vmax.f32 %v2560, %v2584
  %v2589 = vmax.f32 %v2561, %v2585
  %v2590 = vadd.f32 %v1491, %v1513
  %v2591 = vadd.f32 %v1495, %v1517
  %v2592 = vadd.f32 %v1501, %v1523
  %v2593 = vadd.f32 %v1505, %v1527
  %v2594 = vadd.f32 %v2590, %v1876
  %v2595 = vadd.f32 %v2591, %v1880
  %v2596 = vadd.f32 %v2592, %v1886
  %v2597 = vadd.f32 %v2593, %v1890
  %v2598 = vadd.f32 %v2594, %v1898
  %v2599 = vadd.f32 %v2595, %v1902
  %v2600 = vadd.f32 %v2596, %v1908
  %v2601 = vadd.f32 %v2597, %v1912
  %v2602 = vadd.f32 %v2598, %v2217
  %v2603 = vadd.f32 %v2599, %v2220
  %v2604 = vadd.f32 %v2600, %v2225
  %v2605 = vadd.f32 %v2601, %v2228
  %v2606 = vadd.f32 %v2602, %v2268
  %v2607 = vadd.f32 %v2603, %v2268
  %v2608 = vadd.f32 %v2604, %v2268
  %v2609 = vadd.f32 %v2605, %v2268
  %v2610 = vmax.f32 %v2606, 0.0
  %v2611 = vmax.f32 %v2607, 0.0
  %v2612 = vmax.f32 %v2608, 0.0
  %v2613 = vmax.f32 %v2609, 0.0
  %v2614 = vmax.f32 %v2586, %v2610
  %v2615 = vmax.f32 %v2587, %v2611
  %v2616 = vmax.f32 %v2588, %v2612
  %v2617 = vmax.f32 %v2589, %v2613
  %v2618 = vadd.f32 %v1511, %v1532
  %v2619 = vadd.f32 %v1515, %v1535
  %v2620 = vadd.f32 %v1521, %v1540
  %v2621 = vadd.f32 %v1525, %v1543
  %v2622 = vadd.f32 %v2618, %v1896
  %v2623 = vadd.f32 %v2619, %v1900
  %v2624 = vadd.f32 %v2620, %v1906
  %v2625 = vadd.f32 %v2621, %v1910
  %v2626 = vadd.f32 %v2622, %v1917
  %v2627 = vadd.f32 %v2623, %v1920
  %v2628 = vadd.f32 %v2624, %v1925
  %v2629 = vadd.f32 %v2625, %v1928
  %v2630 = vadd.f32 %v2626, %v2233
  %v2631 = vadd.f32 %v2627, %v2236
  %v2632 = vadd.f32 %v2628, %v2241
  %v2633 = vadd.f32 %v2629, %v2244
  %v2634 = vadd.f32 %v2630, %v2268
  %v2635 = vadd.f32 %v2631, %v2268
  %v2636 = vadd.f32 %v2632, %v2268
  %v2637 = vadd.f32 %v2633, %v2268
  %v2638 = vmax.f32 %v2634, 0.0
  %v2639 = vmax.f32 %v2635, 0.0
  %v2640 = vmax.f32 %v2636, 0.0
  %v2641 = vmax.f32 %v2637, 0.0
  %v2642 = vmax.f32 %v2614, %v2638
  %v2643 = vmax.f32 %v2615, %v2639
  %v2644 = vmax.f32 %v2616, %v2640
  %v2645 = vmax.f32 %v2617, %v2641
  %v2646 = vpack.c.bf16 %v2643, %v2642
  %v2647 = vpack.c.bf16 %v2645, %v2644
  %v2648 = vld [vmem:[%s4] sm:$0xff]
  %v2649 = vld [vmem:[%s4 + $0x8] sm:$0xff]
  %v2650 = vld [vmem:[%s4 + $0x10] sm:$0xff]
  %v2651 = vld [vmem:[%s4 + $0x18] sm:$0xff]
  %v2652 = vld [vmem:[%s4 + $0x20] sm:$0xff]
  %v2653 = vld [vmem:[%s4 + $0x28] sm:$0xff]
  %v2654 = vld [vmem:[%s4 + $0x30] sm:$0xff]
  %v2655 = vld [vmem:[%s4 + $0x38] sm:$0xff]
  %v2656 = vld [vmem:[%s4 + $0x40] sm:$0xff]
  %v2657 = vld [vmem:[%s4 + $0x48] sm:$0xff]
  %v2658 = vld [vmem:[%s4 + $0x50] sm:$0xff]
  %v2659 = vld [vmem:[%s4 + $0x58] sm:$0xff]
  %v2660 = vld [vmem:[%s4 + $0x60] sm:$0xff]
  %v2661 = vld [vmem:[%s4 + $0x68] sm:$0xff]
  %v2662 = vld [vmem:[%s4 + $0x70] sm:$0xff]
  %v2663 = vld [vmem:[%s4 + $0x78] sm:$0xff]
  %v2664 = vld [vmem:[%s5] sm:$0x3]
  %v2666 = vlaneseq
  %v2667 = vshrl.u32 %v2666, 7
  %v2668 = vsub.s32 0, %v2667
  %v2669 = vrot.slane %v2664, %v2668
  %v2670 = vlaneseq
  %v2671 = vshrl.u32 %v2670, 7
  %v2672 = vsub.s32 1, %v2671
  %v2673 = vrot.slane %v2664, %v2672
  %v2692 = vunpack.c.l.b16 %v2648
  %v2693 = vunpack.c.h.b16 %v2648
  %v2694 = vunpack.c.l.b16 %v2649
  %v2695 = vunpack.c.h.b16 %v2649
  %v2696 = vunpack.c.l.b16 %v2650
  %v2697 = vunpack.c.h.b16 %v2650
  %v2698 = vunpack.c.l.b16 %v2651
  %v2699 = vunpack.c.h.b16 %v2651
  %v2700 = vunpack.c.l.b16 %v2652
  %v2701 = vunpack.c.h.b16 %v2652
  %v2702 = vunpack.c.l.b16 %v2653
  %v2703 = vunpack.c.h.b16 %v2653
  %v2704 = vunpack.c.l.b16 %v2654
  %v2705 = vunpack.c.h.b16 %v2654
  %v2706 = vunpack.c.l.b16 %v2655
  %v2707 = vunpack.c.h.b16 %v2655
  %v2708 = vunpack.c.l.b16 %v2656
  %v2709 = vunpack.c.h.b16 %v2656
  %v2710 = vunpack.c.l.b16 %v2657
  %v2711 = vunpack.c.h.b16 %v2657
  %v2712 = vunpack.c.l.b16 %v2658
  %v2713 = vunpack.c.h.b16 %v2658
  %v2714 = vunpack.c.l.b16 %v2659
  %v2715 = vunpack.c.h.b16 %v2659
  %v2716 = vunpack.c.l.b16 %v2660
  %v2717 = vunpack.c.h.b16 %v2660
  %v2718 = vunpack.c.l.b16 %v2661
  %v2719 = vunpack.c.h.b16 %v2661
  %v2720 = vunpack.c.l.b16 %v2662
  %v2721 = vunpack.c.h.b16 %v2662
  %v2722 = vunpack.c.l.b16 %v2663
  %v2723 = vunpack.c.h.b16 %v2663
  %v2724 = vpack.c.b16 %v2694, %v2692
  %v2725 = vpack.c.b16 %v2695, %v2693
  %v2726 = vpack.c.b16 %v2698, %v2696
  %v2727 = vpack.c.b16 %v2699, %v2697
  %v2728 = vpack.c.b16 %v2702, %v2700
  %v2729 = vpack.c.b16 %v2703, %v2701
  %v2730 = vpack.c.b16 %v2706, %v2704
  %v2731 = vpack.c.b16 %v2707, %v2705
  %v2732 = vpack.c.b16 %v2710, %v2708
  %v2733 = vpack.c.b16 %v2711, %v2709
  %v2734 = vpack.c.b16 %v2714, %v2712
  %v2735 = vpack.c.b16 %v2715, %v2713
  %v2736 = vpack.c.b16 %v2718, %v2716
  %v2737 = vpack.c.b16 %v2719, %v2717
  %v2738 = vpack.c.b16 %v2722, %v2720
  %v2739 = vpack.c.b16 %v2723, %v2721
  %2756 = vmatprep.subr.bf16.mxu0 %v2739
  %2757 = vmatpush1.bf16.msra.mxu0 %v2738
  %2758 = vmatprep.subr.bf16.mxu0 %v2737
  %2759 = vmatpush1.bf16.msra.mxu0 %v2736
  %2760 = vmatprep.subr.bf16.mxu0 %v2735
  %2761 = vmatpush1.bf16.msra.mxu0 %v2734
  %2762 = vmatprep.subr.bf16.mxu0 %v2733
  %2763 = vmatpush1.bf16.msra.mxu0 %v2732
  %2764 = vmatprep.subr.bf16.mxu0 %v2731
  %2765 = vmatpush1.bf16.msra.mxu0 %v2730
  %2766 = vmatprep.subr.bf16.mxu0 %v2729
  %2767 = vmatpush1.bf16.msra.mxu0 %v2728
  %2768 = vmatprep.subr.bf16.mxu0 %v2727
  %2769 = vmatpush1.bf16.msra.mxu0 %v2726
  %2770 = vmatprep.subr.bf16.mxu0 %v2725
  %2771 = vmatpush1.bf16.msra.mxu0 %v2724
  %2772 = vmatprep.subr.bf16.mxu0 0
  %2773 = vmatpush2.bf16.msra.mxu0 0
  %2774 = vmatprep.subr.bf16.mxu0 0
  %2775 = vmatpush2.bf16.msra.mxu0 0
  %2776 = vmatprep.subr.bf16.mxu0 0
  %2777 = vmatpush2.bf16.msra.mxu0 0
  %2778 = vmatprep.subr.bf16.mxu0 0
  %2779 = vmatpush2.bf16.msra.mxu0 0
  %2780 = vmatprep.subr.bf16.mxu0 0
  %2781 = vmatpush2.bf16.msra.mxu0 0
  %2782 = vmatprep.subr.bf16.mxu0 0
  %2783 = vmatpush2.bf16.msra.mxu0 0
  %2784 = vmatprep.subr.bf16.mxu0 0
  %2785 = vmatpush2.bf16.msra.mxu0 0
  %2786 = vmatprep.subr.bf16.mxu0 0
  %2787 = vmatpush2.bf16.msra.mxu0 0
  %2788 = vmatprep.mubr.bf16.mxu0 0
  %2789 = vmatmul.mubr.bf16.gmra.mxu0 %v2646
  %v2790 = vpop.f32.mrf.mxu0
  %v2791 = vadd.f32 %v2669, %v2790
  %v2792 = vpop.f32.mrf.mxu0
  %v2793 = vadd.f32 %v2673, %v2792
  %v2794 = vpop.f32.mrf.mxu0
  %v2795 = vadd.f32 %v2669, %v2794
  %v2796 = vpop.f32.mrf.mxu0
  %v2797 = vadd.f32 %v2673, %v2796
  %2798 = vmatprep.mubr.bf16.mxu0 0
  %2799 = vmatmul.mubr.bf16.gmra.mxu0 %v2647
  %v2800 = vpop.f32.mrf.mxu0
  %v2801 = vadd.f32 %v2669, %v2800
  %v2802 = vpop.f32.mrf.mxu0
  %v2803 = vadd.f32 %v2673, %v2802
  %v2804 = vpop.f32.mrf.mxu0
  %v2805 = vadd.f32 %v2669, %v2804
  %v2806 = vpop.f32.mrf.mxu0
  %v2807 = vadd.f32 %v2673, %v2806
  %2808 = vdwg.mxu0
  %v2809 = vmax.f32 %v2791, 0.0
  %v2810 = vmax.f32 %v2795, 0.0
  %v2811 = vmax.f32 %v2801, 0.0
  %v2812 = vmax.f32 %v2805, 0.0
  %v2813 = vxor.u32 %v2793, 2147483648
  %v2814 = vxor.u32 %v2797, 2147483648
  %v2815 = vxor.u32 %v2803, 2147483648
  %v2816 = vxor.u32 %v2807, 2147483648
  %v2817 = vmul.f32 %v2813, 1.442695
  %v2818 = vpow.pop %v2817
  %v2819 = vmul.f32 %v2814, 1.442695
  %v2820 = vpow.pop %v2819
  %v2821 = vmul.f32 %v2815, 1.442695
  %v2822 = vpow.pop %v2821
  %v2823 = vmul.f32 %v2816, 1.442695
  %v2824 = vpow.pop %v2823
  %v2825 = vadd.f32 %v2818, 1.0
  %v2826 = vadd.f32 %v2820, 1.0
  %v2827 = vadd.f32 %v2822, 1.0
  %v2828 = vadd.f32 %v2824, 1.0
  %v2829 = vrcp.pop %v2825
  %v2830 = vmul.f32 1.0, %v2829
  %v2831 = vrcp.pop %v2826
  %v2832 = vmul.f32 1.0, %v2831
  %v2833 = vrcp.pop %v2827
  %v2834 = vmul.f32 1.0, %v2833
  %v2835 = vrcp.pop %v2828
  %v2836 = vmul.f32 1.0, %v2835
  %v2837 = vmul.f32 %v2830, %v2809
  %v2838 = vmul.f32 %v2832, %v2810
  %v2839 = vmul.f32 %v2834, %v2811
  %v2840 = vmul.f32 %v2836, %v2812
  %v2841 = vsub.f32 1.0, %v2830
  %v2842 = vsub.f32 1.0, %v2832
  %v2843 = vsub.f32 1.0, %v2834
  %v2844 = vsub.f32 1.0, %v2836
  %v2845 = vmul.f32 %v2841, %v2642
  %v2846 = vmul.f32 %v2842, %v2643
  %v2847 = vmul.f32 %v2843, %v2644
  %v2848 = vmul.f32 %v2844, %v2645
  %v2849 = vadd.f32 %v2837, %v2845
  %v2850 = vadd.f32 %v2838, %v2846
  %v2851 = vadd.f32 %v2839, %v2847
  %v2852 = vadd.f32 %v2840, %v2848
  %2853 = vst [vmem:[%s6] sm:$0xff] %v2849
  %2854 = vst [vmem:[%s6 + $0x8] sm:$0xff] %v2850
  %2855 = vst [vmem:[%s6 + $0x10] sm:$0xff] %v2851
  %2856 = vst [vmem:[%s6 + $0x18] sm:$0xff] %v2852
  // Predicated region
  $region26: #{_lambda_.1} parent=0 // pred_check
    _
  $region27: #{_lambda_.1} parent=0 // pred_check_branch
    %2858 = sbr.rel (0) target = $region29
  $region28: #{_lambda_.1} parent=0 // pred_region
    _
  $region29: #{_lambda_.1} parent=0 // pred_fallthru
    _
  // Predicated region
  $region30: #{_lambda_.1} parent=0 // pred_check
    _
  $region31: #{_lambda_.1} parent=0 // pred_check_branch
    %2860 = sbr.rel (0) target = $region33
  $region32: #{_lambda_.1} parent=0 // pred_region
    _
  $region33: #{_lambda_.1} parent=0 // pred_fallthru
    _

</llo_original>
